<compile_context>
chip_gen: v7x
topology: tpu7x:2x2x1
jax: 0.10.0
libtpu: 0.0.40
codegen_flags: <defaults>
</compile_context>

<pallas_src>
import functools
import numpy as np
import jax
import jax.numpy as jnp
from jax.experimental import pallas as pl
from jax.experimental.pallas import tpu as pltpu

LEAKY_SLOPE = 0.01
BN_EPS = 1e-5
BN_SCALE = float(1.0 / np.sqrt(1.0 + BN_EPS))   # eval-mode BatchNorm1d (mean=0, var=1)
SAMPLE_PROP = 1.0 / 7.0
FLOW_WEIGHTS = (1.0, 1.0, 1.0, 1.0)

PAD = 128      # lane-padded width for all sub_dim / feat_dim / joint_dim tensors
HIDDEN = 1000  # true sub-decoder hidden width
HPAD = 1024    # lane-padded hidden width


# ----------------------------- Pallas kernels -------------------------------

def _vae_subdec_kernel(x_ref, eps_ref,
                       enc_w_ref, enc_b_ref, mu_w_ref, mu_b_ref,
                       var_w_ref, var_b_ref, din_w_ref, din_b_ref,
                       dec_w_ref, dec_b_ref,
                       sd_w1_ref, sd_b1_ref, sd_w2_ref, sd_b2_ref,
                       mu_out, lv_out, rec_out, logit_out,
                       *, num_layers):
    """Fused MutualVAE (all 4 flows stacked) + sub-decoder for one generator."""

    def leaky(v):
        return jnp.where(v >= 0.0, v, LEAKY_SLOPE * v)

    h = x_ref[0, :, :]                                       # (Bt, PAD)
    # encoder: [Linear + LeakyReLU] x num_layers
    for i in range(num_layers):
        h = jnp.dot(h, enc_w_ref[0, i, :, :], preferred_element_type=jnp.float32)
        h = leaky(h + enc_b_ref[0, i, :, :])
    # mu / logvar heads
    mu = jnp.dot(h, mu_w_ref[0, :, :], preferred_element_type=jnp.float32) + mu_b_ref[0, :, :]
    lv = jnp.dot(h, var_w_ref[0, :, :], preferred_element_type=jnp.float32) + var_b_ref[0, :, :]
    # reparameterize with UNIFORM noise (torch.rand_like)
    z = eps_ref[0, :, :] * jnp.exp(0.5 * lv) + mu
    # decoder_input (no activation) + [Linear + LeakyReLU] x (num_layers - 1)
    h = jnp.dot(z, din_w_ref[0, :, :], preferred_element_type=jnp.float32) + din_b_ref[0, :, :]
    for i in range(num_layers - 1):
        h = jnp.dot(h, dec_w_ref[0, i, :, :], preferred_element_type=jnp.float32)
        h = leaky(h + dec_b_ref[0, i, :, :])
    rec = h
    # sub-decoder: Linear -> Tanh -> Dropout(eval) -> BatchNorm1d(eval) -> Linear
    hd = jnp.dot(rec, sd_w1_ref[0, :, :], preferred_element_type=jnp.float32) + sd_b1_ref[0, :, :]
    hd = jnp.tanh(hd) * BN_SCALE
    logits = jnp.dot(hd, sd_w2_ref[0, :, :], preferred_element_type=jnp.float32) + sd_b2_ref[0, :, :]

    mu_out[0, :, :] = mu
    lv_out[0, :, :] = lv
    rec_out[0, :, :] = rec
    logit_out[0, :, :] = logits


def vae_subdec_forward(x, eps, p, num_layers):
    """x, eps: (G, Bt, PAD). Returns mu, logvar, recon, subdec-logits, each (G, Bt, PAD)."""
    G, Bt, _ = x.shape
    n_dec = p["dec_w"].shape[1]
    kernel = functools.partial(_vae_subdec_kernel, num_layers=num_layers)

    def gmap3(g):
        return (g, 0, 0)

    def gmap4(g):
        return (g, 0, 0, 0)

    in_specs = [
        pl.BlockSpec((1, Bt, PAD), gmap3),                # x (stacked flows)
        pl.BlockSpec((1, Bt, PAD), gmap3),                # eps
        pl.BlockSpec((1, num_layers, PAD, PAD), gmap4),   # enc_w
        pl.BlockSpec((1, num_layers, 1, PAD), gmap4),     # enc_b
        pl.BlockSpec((1, PAD, PAD), gmap3),               # mu_w
        pl.BlockSpec((1, 1, PAD), gmap3),                 # mu_b
        pl.BlockSpec((1, PAD, PAD), gmap3),               # var_w
        pl.BlockSpec((1, 1, PAD), gmap3),                 # var_b
        pl.BlockSpec((1, PAD, PAD), gmap3),               # decoder_input w
        pl.BlockSpec((1, 1, PAD), gmap3),                 # decoder_input b
        pl.BlockSpec((1, n_dec, PAD, PAD), gmap4),        # dec_w
        pl.BlockSpec((1, n_dec, 1, PAD), gmap4),          # dec_b
        pl.BlockSpec((1, PAD, HPAD), gmap3),              # subdecoder w1
        pl.BlockSpec((1, 1, HPAD), gmap3),                # subdecoder b1
        pl.BlockSpec((1, HPAD, PAD), gmap3),              # subdecoder w2
        pl.BlockSpec((1, 1, PAD), gmap3),                 # subdecoder b2
    ]
    out_specs = tuple(pl.BlockSpec((1, Bt, PAD), gmap3) for _ in range(4))
    out_shape = tuple(jax.ShapeDtypeStruct((G, Bt, PAD), jnp.float32) for _ in range(4))

    return pl.pallas_call(
        kernel,
        grid=(G,),
        in_specs=in_specs,
        out_specs=out_specs,
        out_shape=out_shape,
        compiler_params=pltpu.CompilerParams(dimension_semantics=("parallel",)),
    )(x, eps,
      p["enc_w"], p["enc_b"], p["mu_w"], p["mu_b"],
      p["var_w"], p["var_b"], p["din_w"], p["din_b"],
      p["dec_w"], p["dec_b"],
      p["sd_w1"], p["sd_b1"], p["sd_w2"], p["sd_b2"])


def _fusion_kernel(x_ref, w_ref, b_ref, o_ref):
    y = jnp.dot(x_ref[...], w_ref[...], preferred_element_type=jnp.float32) + b_ref[...]
    o_ref[...] = jnp.tanh(y)


def fusion_forward(x, w, b):
    """Single-block fused re-fusion (all 4 flows stacked): tanh(x @ W + b)."""
    return pl.pallas_call(
        _fusion_kernel,
        out_shape=jax.ShapeDtypeStruct((x.shape[0], PAD), jnp.float32),
    )(x, w, b)


# --------------------------- parameter construction -------------------------

def init_linear_params(key, fan_in, fan_out):
    kw, kb = jax.random.split(key)
    bound = 1.0 / float(np.sqrt(fan_in))
    w = jax.random.uniform(kw, (fan_in, fan_out), jnp.float32, -bound, bound)
    b = jax.random.uniform(kb, (fan_out,), jnp.float32, -bound, bound)
    return w, b


def init_mutual_vae(key, sub_dim, num_layers):
    n_keys = num_layers + 3 + max(num_layers - 1, 0)
    keys = jax.random.split(key, n_keys)
    enc = [init_linear_params(keys[i], sub_dim, sub_dim) for i in range(num_layers)]
    fc_mu = init_linear_params(keys[num_layers], sub_dim, sub_dim)
    fc_var = init_linear_params(keys[num_layers + 1], sub_dim, sub_dim)
    dec_in = init_linear_params(keys[num_layers + 2], sub_dim, sub_dim)
    dec = [init_linear_params(keys[num_layers + 3 + i], sub_dim, sub_dim)
           for i in range(num_layers - 1)]
    return dict(enc=enc, mu=fc_mu, var=fc_var, dec_in=dec_in, dec=dec)


def init_subdecoder(key, sub_dim, feat_dim, hidden=HIDDEN):
    k1, k2 = jax.random.split(key)
    w1, b1 = init_linear_params(k1, sub_dim, hidden)
    w2, b2 = init_linear_params(k2, hidden, feat_dim)
    return dict(w1=w1, b1=b1, w2=w2, b2=b2)


def init_fusion(key, sub_dims, joint_dim):
    w, b = init_linear_params(key, int(sum(sub_dims)), joint_dim)
    return dict(w=w, b=b)


def _pad2(w, rows, cols):
    return jnp.zeros((rows, cols), jnp.float32).at[:w.shape[0], :w.shape[1]].set(w)


def _pad_bias(b, cols):
    return jnp.zeros((1, cols), jnp.float32).at[0, :b.shape[0]].set(b)


def stack_and_pad_params(gens, decs, num_layers):
    """Zero-pad weights/biases to lane-dense widths and stack across generators."""
    enc_w = jnp.stack([jnp.stack([_pad2(w, PAD, PAD) for (w, _) in g["enc"]])
                       for g in gens])                               # (G, L, PAD, PAD)
    enc_b = jnp.stack([jnp.stack([_pad_bias(b, PAD) for (_, b) in g["enc"]])
                       for g in gens])                               # (G, L, 1, PAD)
    mu_w = jnp.stack([_pad2(g["mu"][0], PAD, PAD) for g in gens])
    mu_b = jnp.stack([_pad_bias(g["mu"][1], PAD) for g in gens])
    var_w = jnp.stack([_pad2(g["var"][0], PAD, PAD) for g in gens])
    var_b = jnp.stack([_pad_bias(g["var"][1], PAD) for g in gens])
    din_w = jnp.stack([_pad2(g["dec_in"][0], PAD, PAD) for g in gens])
    din_b = jnp.stack([_pad_bias(g["dec_in"][1], PAD) for g in gens])
    if num_layers - 1 > 0:
        dec_w = jnp.stack([jnp.stack([_pad2(w, PAD, PAD) for (w, _) in g["dec"]])
                           for g in gens])
        dec_b = jnp.stack([jnp.stack([_pad_bias(b, PAD) for (_, b) in g["dec"]])
                           for g in gens])
    else:   # dummy (never read) so the kernel signature stays static
        G = len(gens)
        dec_w = jnp.zeros((G, 1, PAD, PAD), jnp.float32)
        dec_b = jnp.zeros((G, 1, 1, PAD), jnp.float32)
    sd_w1 = jnp.stack([_pad2(d["w1"], PAD, HPAD) for d in decs])
    sd_b1 = jnp.stack([_pad_bias(d["b1"], HPAD) for d in decs])
    sd_w2 = jnp.stack([_pad2(d["w2"], HPAD, PAD) for d in decs])
    sd_b2 = jnp.stack([_pad_bias(d["b2"], PAD) for d in decs])
    return dict(enc_w=enc_w, enc_b=enc_b, mu_w=mu_w, mu_b=mu_b,
                var_w=var_w, var_b=var_b, din_w=din_w, din_b=din_b,
                dec_w=dec_w, dec_b=dec_b,
                sd_w1=sd_w1, sd_b1=sd_b1, sd_w2=sd_w2, sd_b2=sd_b2)


def pad_fusion(fusion_true, sub_dims, joint_dim):
    """Fusion weight laid out for the lane-padded concat (G*PAD input lanes)."""
    G = len(sub_dims)
    w = jnp.zeros((G * PAD, PAD), jnp.float32)
    off = 0
    for g, d in enumerate(sub_dims):
        w = w.at[g * PAD:g * PAD + d, :joint_dim].set(
            fusion_true["w"][off:off + d, :])
        off += d
    b = _pad_bias(fusion_true["b"], PAD)
    return dict(w=w, b=b)


# ------------------------------ GEEA forward --------------------------------

def _bce_with_logits_mean(x, y):
    # numerically stable BCEWithLogits: max(x,0) - x*y + log1p(exp(-|x|))
    return jnp.mean(jnp.maximum(x, 0.0) - x * y + jnp.log1p(jnp.exp(-jnp.abs(x))))


def make_geea_forward(sub_dims, feat_dims, joint_dim, num_layers):
    sub_dims = tuple(int(d) for d in sub_dims)
    feat_dims = tuple(int(f) for f in feat_dims)
    G = len(sub_dims)

    @jax.jit
    def forward(stacked, fusion, sub_embs, concrete_features, joint_emb,
                train_links, left_ents, right_ents, eps_key):
        L = train_links.shape[0]
        S = left_ents.shape[0]
        Bt = 2 * L + 2 * S

        # stacked flow batch: rows = [x | y | sampled_x | sampled_y]
        idx = jnp.concatenate([train_links[:, 0], train_links[:, 1],
                               left_ents, right_ents])
        x_stk = jnp.stack([
            jnp.zeros((Bt, PAD), jnp.float32).at[:, :d].set(E[idx])
            for E, d in zip(sub_embs, sub_dims)])                       # (G, Bt, PAD)
        eps = jax.random.uniform(eps_key, (G, Bt, PAD), jnp.float32)    # torch.rand_like

        mu, lv, rec, logits = vae_subdec_forward(x_stk, eps, stacked, num_layers)

        # flow -> (row slice of the stacked batch, target entity ids)
        flows = {
            "xx": (slice(2 * L, 2 * L + S), left_ents),
            "yy": (slice(2 * L + S, Bt), right_ents),
            "xy": (slice(0, L), train_links[:, 1]),
            "yx": (slice(L, 2 * L), train_links[:, 0]),
        }

        # distribution match loss (KLD on xx / yy flows)
        dist_loss = 0.0
        for g, d in enumerate(sub_dims):
            for name in ("xx", "yy"):
                rs, _ = flows[name]
                m = mu[g, rs, :d]
                v = lv[g, rs, :d]
                dist_loss = dist_loss + SAMPLE_PROP * jnp.mean(
                    -0.5 * jnp.sum(1.0 + v - m * m - jnp.exp(v), axis=1))

        # prior reconstruction loss (sub-decoder logits vs concrete features)
        prior_loss = 0.0
        for g, f in enumerate(feat_dims):
            cf = concrete_features[g]
            losses = []
            for name in ("xx", "yy", "xy", "yx"):
                rs, ids = flows[name]
                losses.append(_bce_with_logits_mean(logits[g, rs, :f], cf[ids]))
            prior_loss = prior_loss + sum(l * w for l, w in zip(losses, FLOW_WEIGHTS))

        # post reconstruction loss (re-fusion vs joint embedding)
        fcat = jnp.swapaxes(rec, 0, 1).reshape(Bt, G * PAD)  # lane-padded concat
        fused = fusion_forward(fcat, fusion["w"], fusion["b"])[:, :joint_dim]
        post_loss = 0.0
        for name in ("xx", "yy", "xy", "yx"):
            rs, ids = flows[name]
            post_loss = post_loss + jnp.mean((fused[rs] - joint_emb[ids]) ** 2)

        # plain reconstruction loss (MSE input vs VAE output for every flow)
        recon_loss = 0.0
        for g, d in enumerate(sub_dims):
            for name in ("xx", "yy", "xy", "yx"):
                rs, _ = flows[name]
                recon_loss = recon_loss + jnp.mean(
                    (x_stk[g, rs, :d] - rec[g, rs, :d]) ** 2)

        return dist_loss * 0.5 + prior_loss + recon_loss + post_loss

    return forward


# ---------------------------------- main -------------------------------------

if __name__ == "__main__":
    N_ENTS = 112           # 56 "left" + 56 "right" entities
    SUB_DIMS = [32, 16]    # two concrete sub-embedding views
    FEAT_DIMS = [48, 40]   # concrete feature widths
    JOINT_DIM = 32
    NUM_LAYERS = 2         # args.num_layers
    N_LINKS = 8
    N_SAMPLES = int(56 * SAMPLE_PROP)  # = 8

    root = jax.random.PRNGKey(0)
    k_param, k_data, k_eps = jax.random.split(root, 3)

    # parameters (deterministic) at true dims, then zero-padded / stacked
    pk = jax.random.split(k_param, 2 * len(SUB_DIMS) + 1)
    gens = [init_mutual_vae(pk[i], SUB_DIMS[i], NUM_LAYERS)
            for i in range(len(SUB_DIMS))]
    decs = [init_subdecoder(pk[len(SUB_DIMS) + i], SUB_DIMS[i], FEAT_DIMS[i])
            for i in range(len(SUB_DIMS))]
    fusion_true = init_fusion(pk[-1], SUB_DIMS, JOINT_DIM)

    stacked = stack_and_pad_params(gens, decs, NUM_LAYERS)
    fusion = pad_fusion(fusion_true, SUB_DIMS, JOINT_DIM)

    # data (deterministic)
    dk = jax.random.split(k_data, 2 * len(SUB_DIMS) + 1 + 4)
    sub_embs = [jax.random.normal(dk[i], (N_ENTS, d), jnp.float32)
                for i, d in enumerate(SUB_DIMS)]
    concrete_features = [
        jax.random.uniform(dk[len(SUB_DIMS) + i], (N_ENTS, f), jnp.float32)
        for i, f in enumerate(FEAT_DIMS)]
    joint_emb = jax.random.normal(dk[2 * len(SUB_DIMS)], (N_ENTS, JOINT_DIM),
                                  jnp.float32)

    left_pool = jnp.arange(0, 56, dtype=jnp.int32)
    right_pool = jnp.arange(56, 112, dtype=jnp.int32)
    tl_l = jax.random.choice(dk[-4], left_pool, (N_LINKS,), replace=False)
    tl_r = jax.random.choice(dk[-3], right_pool, (N_LINKS,), replace=False)
    train_links = jnp.stack([tl_l, tl_r], axis=1)
    left_ents = jax.random.choice(dk[-2], left_pool, (N_SAMPLES,), replace=False)
    right_ents = jax.random.choice(dk[-1], right_pool, (N_SAMPLES,), replace=False)

    forward = make_geea_forward(SUB_DIMS, FEAT_DIMS, JOINT_DIM, NUM_LAYERS)
    loss = forward(stacked, fusion, sub_embs, concrete_features, joint_emb,
                   train_links, left_ents, right_ents, k_eps)
    loss = jax.block_until_ready(loss)
    assert jnp.isfinite(loss), f"non-finite loss: {loss}"
    print("KERNEL_OK")
</pallas_src>

<mosaic_0001>
module attributes {stable_mosaic.version = 11 : i64} {
  func.func @_vae_subdec_kernel(%arg0: i32, %arg1: memref<1x32x128xf32, #tpu.memory_space<vmem>>, %arg2: memref<1x32x128xf32, #tpu.memory_space<vmem>>, %arg3: memref<1x2x128x128xf32, #tpu.memory_space<vmem>>, %arg4: memref<1x2x1x128xf32, #tpu.memory_space<vmem>>, %arg5: memref<1x128x128xf32, #tpu.memory_space<vmem>>, %arg6: memref<1x1x128xf32, #tpu.memory_space<vmem>>, %arg7: memref<1x128x128xf32, #tpu.memory_space<vmem>>, %arg8: memref<1x1x128xf32, #tpu.memory_space<vmem>>, %arg9: memref<1x128x128xf32, #tpu.memory_space<vmem>>, %arg10: memref<1x1x128xf32, #tpu.memory_space<vmem>>, %arg11: memref<1x1x128x128xf32, #tpu.memory_space<vmem>>, %arg12: memref<1x1x1x128xf32, #tpu.memory_space<vmem>>, %arg13: memref<1x128x1024xf32, #tpu.memory_space<vmem>>, %arg14: memref<1x1x1024xf32, #tpu.memory_space<vmem>>, %arg15: memref<1x1024x128xf32, #tpu.memory_space<vmem>>, %arg16: memref<1x1x128xf32, #tpu.memory_space<vmem>>, %arg17: memref<1x32x128xf32, #tpu.memory_space<vmem>>, %arg18: memref<1x32x128xf32, #tpu.memory_space<vmem>>, %arg19: memref<1x32x128xf32, #tpu.memory_space<vmem>>, %arg20: memref<1x32x128xf32, #tpu.memory_space<vmem>>) attributes {dimension_semantics = [#tpu.dimension_semantics<parallel>], iteration_bounds = array<i64: 2>, scalar_prefetch = 0 : i64, scratch_operands = 0 : i64, tpu.core_type = #tpu.core_type<tc>, window_params = [{transform_indices = @transform_0, window_bounds = array<i64: 1, 32, 128>}, {transform_indices = @transform_1, window_bounds = array<i64: 1, 32, 128>}, {transform_indices = @transform_2, window_bounds = array<i64: 1, 2, 128, 128>}, {transform_indices = @transform_3, window_bounds = array<i64: 1, 2, 1, 128>}, {transform_indices = @transform_4, window_bounds = array<i64: 1, 128, 128>}, {transform_indices = @transform_5, window_bounds = array<i64: 1, 1, 128>}, {transform_indices = @transform_6, window_bounds = array<i64: 1, 128, 128>}, {transform_indices = @transform_7, window_bounds = array<i64: 1, 1, 128>}, {transform_indices = @transform_8, window_bounds = array<i64: 1, 128, 128>}, {transform_indices = @transform_9, window_bounds = array<i64: 1, 1, 128>}, {transform_indices = @transform_10, window_bounds = array<i64: 1, 1, 128, 128>}, {transform_indices = @transform_11, window_bounds = array<i64: 1, 1, 1, 128>}, {transform_indices = @transform_12, window_bounds = array<i64: 1, 128, 1024>}, {transform_indices = @transform_13, window_bounds = array<i64: 1, 1, 1024>}, {transform_indices = @transform_14, window_bounds = array<i64: 1, 1024, 128>}, {transform_indices = @transform_15, window_bounds = array<i64: 1, 1, 128>}, {transform_indices = @transform_16, window_bounds = array<i64: 1, 32, 128>}, {transform_indices = @transform_17, window_bounds = array<i64: 1, 32, 128>}, {transform_indices = @transform_18, window_bounds = array<i64: 1, 32, 128>}, {transform_indices = @transform_19, window_bounds = array<i64: 1, 32, 128>}]} {
    %c0 = arith.constant 0 : index
    %c0_0 = arith.constant 0 : index
    %c0_1 = arith.constant 0 : index
    %0 = vector.load %arg1[%c0, %c0_0, %c0_1] : memref<1x32x128xf32, #tpu.memory_space<vmem>>, vector<1x32x128xf32>
    %1 = vector.shape_cast %0 : vector<1x32x128xf32> to vector<32x128xf32>
    %c0_2 = arith.constant 0 : index
    %c0_3 = arith.constant 0 : index
    %c0_4 = arith.constant 0 : index
    %c0_5 = arith.constant 0 : index
    %2 = vector.load %arg3[%c0_2, %c0_3, %c0_4, %c0_5] : memref<1x2x128x128xf32, #tpu.memory_space<vmem>>, vector<1x1x128x128xf32>
    %3 = vector.shape_cast %2 : vector<1x1x128x128xf32> to vector<128x128xf32>
    %cst = arith.constant dense<0.000000e+00> : vector<32x128xf32>
    %4 = tpu.matmul %1, %3, %cst {dimension_numbers = #tpu.dot_dimension_numbers<[1], [0], [0], [1], [0, 0, 1, 1], [], []>} : vector<32x128xf32>, vector<128x128xf32>, vector<32x128xf32> -> vector<32x128xf32>
    %c0_6 = arith.constant 0 : index
    %c0_7 = arith.constant 0 : index
    %c0_8 = arith.constant 0 : index
    %c0_9 = arith.constant 0 : index
    %5 = vector.load %arg4[%c0_6, %c0_7, %c0_8, %c0_9] : memref<1x2x1x128xf32, #tpu.memory_space<vmem>>, vector<1x1x1x128xf32>
    %6 = vector.shape_cast %5 : vector<1x1x1x128xf32> to vector<1x128xf32>
    %7 = vector.broadcast %6 : vector<1x128xf32> to vector<32x128xf32>
    %8 = arith.addf %4, %7 : vector<32x128xf32>
    %cst_10 = arith.constant 0.000000e+00 : f32
    %9 = vector.broadcast %cst_10 : f32 to vector<32x128xf32>
    %10 = arith.cmpf oge, %8, %9 : vector<32x128xf32>
    %cst_11 = arith.constant 0.00999999977 : f32
    %11 = vector.broadcast %cst_11 : f32 to vector<32x128xf32>
    %12 = arith.mulf %11, %8 : vector<32x128xf32>
    %13 = arith.select %10, %8, %12 : vector<32x128xi1>, vector<32x128xf32>
    %c0_12 = arith.constant 0 : index
    %c1 = arith.constant 1 : index
    %c0_13 = arith.constant 0 : index
    %c0_14 = arith.constant 0 : index
    %14 = vector.load %arg3[%c0_12, %c1, %c0_13, %c0_14] : memref<1x2x128x128xf32, #tpu.memory_space<vmem>>, vector<1x1x128x128xf32>
    %15 = vector.shape_cast %14 : vector<1x1x128x128xf32> to vector<128x128xf32>
    %cst_15 = arith.constant dense<0.000000e+00> : vector<32x128xf32>
    %16 = tpu.matmul %13, %15, %cst_15 {dimension_numbers = #tpu.dot_dimension_numbers<[1], [0], [0], [1], [0, 0, 1, 1], [], []>} : vector<32x128xf32>, vector<128x128xf32>, vector<32x128xf32> -> vector<32x128xf32>
    %c0_16 = arith.constant 0 : index
    %c1_17 = arith.constant 1 : index
    %c0_18 = arith.constant 0 : index
    %c0_19 = arith.constant 0 : index
    %17 = vector.load %arg4[%c0_16, %c1_17, %c0_18, %c0_19] : memref<1x2x1x128xf32, #tpu.memory_space<vmem>>, vector<1x1x1x128xf32>
    %18 = vector.shape_cast %17 : vector<1x1x1x128xf32> to vector<1x128xf32>
    %19 = vector.broadcast %18 : vector<1x128xf32> to vector<32x128xf32>
    %20 = arith.addf %16, %19 : vector<32x128xf32>
    %cst_20 = arith.constant 0.000000e+00 : f32
    %21 = vector.broadcast %cst_20 : f32 to vector<32x128xf32>
    %22 = arith.cmpf oge, %20, %21 : vector<32x128xf32>
    %cst_21 = arith.constant 0.00999999977 : f32
    %23 = vector.broadcast %cst_21 : f32 to vector<32x128xf32>
    %24 = arith.mulf %23, %20 : vector<32x128xf32>
    %25 = arith.select %22, %20, %24 : vector<32x128xi1>, vector<32x128xf32>
    %c0_22 = arith.constant 0 : index
    %c0_23 = arith.constant 0 : index
    %c0_24 = arith.constant 0 : index
    %26 = vector.load %arg5[%c0_22, %c0_23, %c0_24] : memref<1x128x128xf32, #tpu.memory_space<vmem>>, vector<1x128x128xf32>
    %27 = vector.shape_cast %26 : vector<1x128x128xf32> to vector<128x128xf32>
    %cst_25 = arith.constant dense<0.000000e+00> : vector<32x128xf32>
    %28 = tpu.matmul %25, %27, %cst_25 {dimension_numbers = #tpu.dot_dimension_numbers<[1], [0], [0], [1], [0, 0, 1, 1], [], []>} : vector<32x128xf32>, vector<128x128xf32>, vector<32x128xf32> -> vector<32x128xf32>
    %c0_26 = arith.constant 0 : index
    %c0_27 = arith.constant 0 : index
    %c0_28 = arith.constant 0 : index
    %29 = vector.load %arg6[%c0_26, %c0_27, %c0_28] : memref<1x1x128xf32, #tpu.memory_space<vmem>>, vector<1x1x128xf32>
    %30 = vector.shape_cast %29 : vector<1x1x128xf32> to vector<1x128xf32>
    %31 = vector.broadcast %30 : vector<1x128xf32> to vector<32x128xf32>
    %32 = arith.addf %28, %31 : vector<32x128xf32>
    %c0_29 = arith.constant 0 : index
    %c0_30 = arith.constant 0 : index
    %c0_31 = arith.constant 0 : index
    %33 = vector.load %arg7[%c0_29, %c0_30, %c0_31] : memref<1x128x128xf32, #tpu.memory_space<vmem>>, vector<1x128x128xf32>
    %34 = vector.shape_cast %33 : vector<1x128x128xf32> to vector<128x128xf32>
    %cst_32 = arith.constant dense<0.000000e+00> : vector<32x128xf32>
    %35 = tpu.matmul %25, %34, %cst_32 {dimension_numbers = #tpu.dot_dimension_numbers<[1], [0], [0], [1], [0, 0, 1, 1], [], []>} : vector<32x128xf32>, vector<128x128xf32>, vector<32x128xf32> -> vector<32x128xf32>
    %c0_33 = arith.constant 0 : index
    %c0_34 = arith.constant 0 : index
    %c0_35 = arith.constant 0 : index
    %36 = vector.load %arg8[%c0_33, %c0_34, %c0_35] : memref<1x1x128xf32, #tpu.memory_space<vmem>>, vector<1x1x128xf32>
    %37 = vector.shape_cast %36 : vector<1x1x128xf32> to vector<1x128xf32>
    %38 = vector.broadcast %37 : vector<1x128xf32> to vector<32x128xf32>
    %39 = arith.addf %35, %38 : vector<32x128xf32>
    %c0_36 = arith.constant 0 : index
    %c0_37 = arith.constant 0 : index
    %c0_38 = arith.constant 0 : index
    %40 = vector.load %arg2[%c0_36, %c0_37, %c0_38] : memref<1x32x128xf32, #tpu.memory_space<vmem>>, vector<1x32x128xf32>
    %41 = vector.shape_cast %40 : vector<1x32x128xf32> to vector<32x128xf32>
    %cst_39 = arith.constant 5.000000e-01 : f32
    %42 = vector.broadcast %cst_39 : f32 to vector<32x128xf32>
    %43 = arith.mulf %42, %39 : vector<32x128xf32>
    %44 = math.exp %43 : vector<32x128xf32>
    %45 = arith.mulf %41, %44 : vector<32x128xf32>
    %46 = arith.addf %45, %32 : vector<32x128xf32>
    %c0_40 = arith.constant 0 : index
    %c0_41 = arith.constant 0 : index
    %c0_42 = arith.constant 0 : index
    %47 = vector.load %arg9[%c0_40, %c0_41, %c0_42] : memref<1x128x128xf32, #tpu.memory_space<vmem>>, vector<1x128x128xf32>
    %48 = vector.shape_cast %47 : vector<1x128x128xf32> to vector<128x128xf32>
    %cst_43 = arith.constant dense<0.000000e+00> : vector<32x128xf32>
    %49 = tpu.matmul %46, %48, %cst_43 {dimension_numbers = #tpu.dot_dimension_numbers<[1], [0], [0], [1], [0, 0, 1, 1], [], []>} : vector<32x128xf32>, vector<128x128xf32>, vector<32x128xf32> -> vector<32x128xf32>
    %c0_44 = arith.constant 0 : index
    %c0_45 = arith.constant 0 : index
    %c0_46 = arith.constant 0 : index
    %50 = vector.load %arg10[%c0_44, %c0_45, %c0_46] : memref<1x1x128xf32, #tpu.memory_space<vmem>>, vector<1x1x128xf32>
    %51 = vector.shape_cast %50 : vector<1x1x128xf32> to vector<1x128xf32>
    %52 = vector.broadcast %51 : vector<1x128xf32> to vector<32x128xf32>
    %53 = arith.addf %49, %52 : vector<32x128xf32>
    %c0_47 = arith.constant 0 : index
    %c0_48 = arith.constant 0 : index
    %c0_49 = arith.constant 0 : index
    %c0_50 = arith.constant 0 : index
    %54 = vector.load %arg11[%c0_47, %c0_48, %c0_49, %c0_50] : memref<1x1x128x128xf32, #tpu.memory_space<vmem>>, vector<1x1x128x128xf32>
    %55 = vector.shape_cast %54 : vector<1x1x128x128xf32> to vector<128x128xf32>
    %cst_51 = arith.constant dense<0.000000e+00> : vector<32x128xf32>
    %56 = tpu.matmul %53, %55, %cst_51 {dimension_numbers = #tpu.dot_dimension_numbers<[1], [0], [0], [1], [0, 0, 1, 1], [], []>} : vector<32x128xf32>, vector<128x128xf32>, vector<32x128xf32> -> vector<32x128xf32>
    %c0_52 = arith.constant 0 : index
    %c0_53 = arith.constant 0 : index
    %c0_54 = arith.constant 0 : index
    %c0_55 = arith.constant 0 : index
    %57 = vector.load %arg12[%c0_52, %c0_53, %c0_54, %c0_55] : memref<1x1x1x128xf32, #tpu.memory_space<vmem>>, vector<1x1x1x128xf32>
    %58 = vector.shape_cast %57 : vector<1x1x1x128xf32> to vector<1x128xf32>
    %59 = vector.broadcast %58 : vector<1x128xf32> to vector<32x128xf32>
    %60 = arith.addf %56, %59 : vector<32x128xf32>
    %cst_56 = arith.constant 0.000000e+00 : f32
    %61 = vector.broadcast %cst_56 : f32 to vector<32x128xf32>
    %62 = arith.cmpf oge, %60, %61 : vector<32x128xf32>
    %cst_57 = arith.constant 0.00999999977 : f32
    %63 = vector.broadcast %cst_57 : f32 to vector<32x128xf32>
    %64 = arith.mulf %63, %60 : vector<32x128xf32>
    %65 = arith.select %62, %60, %64 : vector<32x128xi1>, vector<32x128xf32>
    %c0_58 = arith.constant 0 : index
    %c0_59 = arith.constant 0 : index
    %c0_60 = arith.constant 0 : index
    %66 = vector.load %arg13[%c0_58, %c0_59, %c0_60] : memref<1x128x1024xf32, #tpu.memory_space<vmem>>, vector<1x128x1024xf32>
    %67 = vector.shape_cast %66 : vector<1x128x1024xf32> to vector<128x1024xf32>
    %cst_61 = arith.constant dense<0.000000e+00> : vector<32x1024xf32>
    %68 = tpu.matmul %65, %67, %cst_61 {dimension_numbers = #tpu.dot_dimension_numbers<[1], [0], [0], [1], [0, 0, 1, 1], [], []>} : vector<32x128xf32>, vector<128x1024xf32>, vector<32x1024xf32> -> vector<32x1024xf32>
    %c0_62 = arith.constant 0 : index
    %c0_63 = arith.constant 0 : index
    %c0_64 = arith.constant 0 : index
    %69 = vector.load %arg14[%c0_62, %c0_63, %c0_64] : memref<1x1x1024xf32, #tpu.memory_space<vmem>>, vector<1x1x1024xf32>
    %70 = vector.shape_cast %69 : vector<1x1x1024xf32> to vector<1x1024xf32>
    %71 = vector.broadcast %70 : vector<1x1024xf32> to vector<32x1024xf32>
    %72 = arith.addf %68, %71 : vector<32x1024xf32>
    %73 = math.tanh %72 : vector<32x1024xf32>
    %cst_65 = arith.constant 0.999994993 : f32
    %74 = vector.broadcast %cst_65 : f32 to vector<32x1024xf32>
    %75 = arith.mulf %73, %74 : vector<32x1024xf32>
    %c0_66 = arith.constant 0 : index
    %c0_67 = arith.constant 0 : index
    %c0_68 = arith.constant 0 : index
    %76 = vector.load %arg15[%c0_66, %c0_67, %c0_68] : memref<1x1024x128xf32, #tpu.memory_space<vmem>>, vector<1x1024x128xf32>
    %77 = vector.shape_cast %76 : vector<1x1024x128xf32> to vector<1024x128xf32>
    %cst_69 = arith.constant dense<0.000000e+00> : vector<32x128xf32>
    %78 = tpu.matmul %75, %77, %cst_69 {dimension_numbers = #tpu.dot_dimension_numbers<[1], [0], [0], [1], [0, 0, 1, 1], [], []>} : vector<32x1024xf32>, vector<1024x128xf32>, vector<32x128xf32> -> vector<32x128xf32>
    %c0_70 = arith.constant 0 : index
    %c0_71 = arith.constant 0 : index
    %c0_72 = arith.constant 0 : index
    %79 = vector.load %arg16[%c0_70, %c0_71, %c0_72] : memref<1x1x128xf32, #tpu.memory_space<vmem>>, vector<1x1x128xf32>
    %80 = vector.shape_cast %79 : vector<1x1x128xf32> to vector<1x128xf32>
    %81 = vector.broadcast %80 : vector<1x128xf32> to vector<32x128xf32>
    %82 = arith.addf %78, %81 : vector<32x128xf32>
    %c0_73 = arith.constant 0 : index
    %c0_74 = arith.constant 0 : index
    %c0_75 = arith.constant 0 : index
    %83 = vector.load %arg17[%c0_73, %c0_74, %c0_75] : memref<1x32x128xf32, #tpu.memory_space<vmem>>, vector<1x32x128xf32>
    %84 = vector.shape_cast %83 : vector<1x32x128xf32> to vector<32x128xf32>
    %85 = vector.shape_cast %32 : vector<32x128xf32> to vector<1x32x128xf32>
    tpu.vector_store %arg17[%c0_73, %c0_74, %c0_75], %85 {strides = array<i32>} : memref<1x32x128xf32, #tpu.memory_space<vmem>>, vector<1x32x128xf32>,
    %c0_76 = arith.constant 0 : index
    %c0_77 = arith.constant 0 : index
    %c0_78 = arith.constant 0 : index
    %86 = vector.load %arg18[%c0_76, %c0_77, %c0_78] : memref<1x32x128xf32, #tpu.memory_space<vmem>>, vector<1x32x128xf32>
    %87 = vector.shape_cast %86 : vector<1x32x128xf32> to vector<32x128xf32>
    %88 = vector.shape_cast %39 : vector<32x128xf32> to vector<1x32x128xf32>
    tpu.vector_store %arg18[%c0_76, %c0_77, %c0_78], %88 {strides = array<i32>} : memref<1x32x128xf32, #tpu.memory_space<vmem>>, vector<1x32x128xf32>,
    %c0_79 = arith.constant 0 : index
    %c0_80 = arith.constant 0 : index
    %c0_81 = arith.constant 0 : index
    %89 = vector.load %arg19[%c0_79, %c0_80, %c0_81] : memref<1x32x128xf32, #tpu.memory_space<vmem>>, vector<1x32x128xf32>
    %90 = vector.shape_cast %89 : vector<1x32x128xf32> to vector<32x128xf32>
    %91 = vector.shape_cast %65 : vector<32x128xf32> to vector<1x32x128xf32>
    tpu.vector_store %arg19[%c0_79, %c0_80, %c0_81], %91 {strides = array<i32>} : memref<1x32x128xf32, #tpu.memory_space<vmem>>, vector<1x32x128xf32>,
    %c0_82 = arith.constant 0 : index
    %c0_83 = arith.constant 0 : index
    %c0_84 = arith.constant 0 : index
    %92 = vector.load %arg20[%c0_82, %c0_83, %c0_84] : memref<1x32x128xf32, #tpu.memory_space<vmem>>, vector<1x32x128xf32>
    %93 = vector.shape_cast %92 : vector<1x32x128xf32> to vector<32x128xf32>
    %94 = vector.shape_cast %82 : vector<32x128xf32> to vector<1x32x128xf32>
    tpu.vector_store %arg20[%c0_82, %c0_83, %c0_84], %94 {strides = array<i32>} : memref<1x32x128xf32, #tpu.memory_space<vmem>>, vector<1x32x128xf32>,
    return
  }
  func.func @transform_0(%arg0: i32) -> (i32, i32, i32) {
    %c0_i32 = arith.constant 0 : i32
    %c0_i32_0 = arith.constant 0 : i32
    %c0_i32_1 = arith.constant 0 : i32
    return %arg0, %c0_i32, %c0_i32_0 : i32, i32, i32
  }
  func.func @transform_1(%arg0: i32) -> (i32, i32, i32) {
    %c0_i32 = arith.constant 0 : i32
    %c0_i32_0 = arith.constant 0 : i32
    %c0_i32_1 = arith.constant 0 : i32
    return %arg0, %c0_i32, %c0_i32_0 : i32, i32, i32
  }
  func.func @transform_2(%arg0: i32) -> (i32, i32, i32, i32) {
    %c0_i32 = arith.constant 0 : i32
    %c0_i32_0 = arith.constant 0 : i32
    %c0_i32_1 = arith.constant 0 : i32
    %c0_i32_2 = arith.constant 0 : i32
    return %arg0, %c0_i32, %c0_i32_0, %c0_i32_1 : i32, i32, i32, i32
  }
  func.func @transform_3(%arg0: i32) -> (i32, i32, i32, i32) {
    %c0_i32 = arith.constant 0 : i32
    %c0_i32_0 = arith.constant 0 : i32
    %c0_i32_1 = arith.constant 0 : i32
    %c0_i32_2 = arith.constant 0 : i32
    return %arg0, %c0_i32, %c0_i32_0, %c0_i32_1 : i32, i32, i32, i32
  }
  func.func @transform_4(%arg0: i32) -> (i32, i32, i32) {
    %c0_i32 = arith.constant 0 : i32
    %c0_i32_0 = arith.constant 0 : i32
    %c0_i32_1 = arith.constant 0 : i32
    return %arg0, %c0_i32, %c0_i32_0 : i32, i32, i32
  }
  func.func @transform_5(%arg0: i32) -> (i32, i32, i32) {
    %c0_i32 = arith.constant 0 : i32
    %c0_i32_0 = arith.constant 0 : i32
    %c0_i32_1 = arith.constant 0 : i32
    return %arg0, %c0_i32, %c0_i32_0 : i32, i32, i32
  }
  func.func @transform_6(%arg0: i32) -> (i32, i32, i32) {
    %c0_i32 = arith.constant 0 : i32
    %c0_i32_0 = arith.constant 0 : i32
    %c0_i32_1 = arith.constant 0 : i32
    return %arg0, %c0_i32, %c0_i32_0 : i32, i32, i32
  }
  func.func @transform_7(%arg0: i32) -> (i32, i32, i32) {
    %c0_i32 = arith.constant 0 : i32
    %c0_i32_0 = arith.constant 0 : i32
    %c0_i32_1 = arith.constant 0 : i32
    return %arg0, %c0_i32, %c0_i32_0 : i32, i32, i32
  }
  func.func @transform_8(%arg0: i32) -> (i32, i32, i32) {
    %c0_i32 = arith.constant 0 : i32
    %c0_i32_0 = arith.constant 0 : i32
    %c0_i32_1 = arith.constant 0 : i32
    return %arg0, %c0_i32, %c0_i32_0 : i32, i32, i32
  }
  func.func @transform_9(%arg0: i32) -> (i32, i32, i32) {
    %c0_i32 = arith.constant 0 : i32
    %c0_i32_0 = arith.constant 0 : i32
    %c0_i32_1 = arith.constant 0 : i32
    return %arg0, %c0_i32, %c0_i32_0 : i32, i32, i32
  }
  func.func @transform_10(%arg0: i32) -> (i32, i32, i32, i32) {
    %c0_i32 = arith.constant 0 : i32
    %c0_i32_0 = arith.constant 0 : i32
    %c0_i32_1 = arith.constant 0 : i32
    %c0_i32_2 = arith.constant 0 : i32
    return %arg0, %c0_i32, %c0_i32_0, %c0_i32_1 : i32, i32, i32, i32
  }
  func.func @transform_11(%arg0: i32) -> (i32, i32, i32, i32) {
    %c0_i32 = arith.constant 0 : i32
    %c0_i32_0 = arith.constant 0 : i32
    %c0_i32_1 = arith.constant 0 : i32
    %c0_i32_2 = arith.constant 0 : i32
    return %arg0, %c0_i32, %c0_i32_0, %c0_i32_1 : i32, i32, i32, i32
  }
  func.func @transform_12(%arg0: i32) -> (i32, i32, i32) {
    %c0_i32 = arith.constant 0 : i32
    %c0_i32_0 = arith.constant 0 : i32
    %c0_i32_1 = arith.constant 0 : i32
    return %arg0, %c0_i32, %c0_i32_0 : i32, i32, i32
  }
  func.func @transform_13(%arg0: i32) -> (i32, i32, i32) {
    %c0_i32 = arith.constant 0 : i32
    %c0_i32_0 = arith.constant 0 : i32
    %c0_i32_1 = arith.constant 0 : i32
    return %arg0, %c0_i32, %c0_i32_0 : i32, i32, i32
  }
  func.func @transform_14(%arg0: i32) -> (i32, i32, i32) {
    %c0_i32 = arith.constant 0 : i32
    %c0_i32_0 = arith.constant 0 : i32
    %c0_i32_1 = arith.constant 0 : i32
    return %arg0, %c0_i32, %c0_i32_0 : i32, i32, i32
  }
  func.func @transform_15(%arg0: i32) -> (i32, i32, i32) {
    %c0_i32 = arith.constant 0 : i32
    %c0_i32_0 = arith.constant 0 : i32
    %c0_i32_1 = arith.constant 0 : i32
    return %arg0, %c0_i32, %c0_i32_0 : i32, i32, i32
  }
  func.func @transform_16(%arg0: i32) -> (i32, i32, i32) {
    %c0_i32 = arith.constant 0 : i32
    %c0_i32_0 = arith.constant 0 : i32
    %c0_i32_1 = arith.constant 0 : i32
    return %arg0, %c0_i32, %c0_i32_0 : i32, i32, i32
  }
  func.func @transform_17(%arg0: i32) -> (i32, i32, i32) {
    %c0_i32 = arith.constant 0 : i32
    %c0_i32_0 = arith.constant 0 : i32
    %c0_i32_1 = arith.constant 0 : i32
    return %arg0, %c0_i32, %c0_i32_0 : i32, i32, i32
  }
  func.func @transform_18(%arg0: i32) -> (i32, i32, i32) {
    %c0_i32 = arith.constant 0 : i32
    %c0_i32_0 = arith.constant 0 : i32
    %c0_i32_1 = arith.constant 0 : i32
    return %arg0, %c0_i32, %c0_i32_0 : i32, i32, i32
  }
  func.func @transform_19(%arg0: i32) -> (i32, i32, i32) {
    %c0_i32 = arith.constant 0 : i32
    %c0_i32_0 = arith.constant 0 : i32
    %c0_i32_1 = arith.constant 0 : i32
    return %arg0, %c0_i32, %c0_i32_0 : i32, i32, i32
  }
}

module attributes {stable_mosaic.version = 11 : i64} {
  func.func @_fusion_kernel(%arg0: memref<32x256xf32, #tpu.memory_space<vmem>>, %arg1: memref<256x128xf32, #tpu.memory_space<vmem>>, %arg2: memref<1x128xf32, #tpu.memory_space<vmem>>, %arg3: memref<32x128xf32, #tpu.memory_space<vmem>>) attributes {dimension_semantics = [], scalar_prefetch = 0 : i64, scratch_operands = 0 : i64, tpu.core_type = #tpu.core_type<tc>} {
    %c0 = arith.constant 0 : index
    %c0_0 = arith.constant 0 : index
    %0 = vector.load %arg0[%c0, %c0_0] : memref<32x256xf32, #tpu.memory_space<vmem>>, vector<32x256xf32>
    %c0_1 = arith.constant 0 : index
    %c0_2 = arith.constant 0 : index
    %1 = vector.load %arg1[%c0_1, %c0_2] : memref<256x128xf32, #tpu.memory_space<vmem>>, vector<256x128xf32>
    %cst = arith.constant dense<0.000000e+00> : vector<32x128xf32>
    %2 = tpu.matmul %0, %1, %cst {dimension_numbers = #tpu.dot_dimension_numbers<[1], [0], [0], [1], [0, 0, 1, 1], [], []>} : vector<32x256xf32>, vector<256x128xf32>, vector<32x128xf32> -> vector<32x128xf32>
    %c0_3 = arith.constant 0 : index
    %c0_4 = arith.constant 0 : index
    %3 = vector.load %arg2[%c0_3, %c0_4] : memref<1x128xf32, #tpu.memory_space<vmem>>, vector<1x128xf32>
    %4 = vector.broadcast %3 : vector<1x128xf32> to vector<32x128xf32>
    %5 = arith.addf %2, %4 : vector<32x128xf32>
    %6 = math.tanh %5 : vector<32x128xf32>
    %c0_5 = arith.constant 0 : index
    %c0_6 = arith.constant 0 : index
    %7 = vector.load %arg3[%c0_5, %c0_6] : memref<32x128xf32, #tpu.memory_space<vmem>>, vector<32x128xf32>
    tpu.vector_store %arg3[%c0_5, %c0_6], %6 {strides = array<i32>} : memref<32x128xf32, #tpu.memory_space<vmem>>, vector<32x128xf32>,
    return
  }
}

</mosaic_0001>

<llo_original>
// kernel: forward.3
$region0: #{forward.3}
  #allocation0 [shape = 'u32[]', space=smem, size = 0x4, offset = 0x4, fixed_abs, tag = 'smem constant byte address 0x4 - core index']
  #allocation1 [shape = 'u32[144,128]{1,0:T(1,128)}', space=vmem, size = 0x12000, scoped, tag = 'internal scratch']
  %s0 = inlined_call_operand.vmem [shape: f32[32,256], index: 0, kind: input, shape index: {}]
  %s1 = inlined_call_operand.vmem [shape: f32[256,128], index: 1, kind: input, shape index: {}]
  %s2 = inlined_call_operand.vmem [shape: f32[1,128], index: 2, kind: input, shape index: {}]
  %s3 = inlined_call_operand.vmem [shape: f32[32,128], index: 3, kind: output, shape index: {}]
  %s4 = sld [smem:[#allocation0]]
  $region22: #{forward.3} parent=0
    _
  %s6 = ssub.s32 1, %s4
  %s7 = scalar_select 0, %s6, %s4
  // Predicated region
  $region2: #{forward.3} parent=0 // pred_check
    _
  $region3: #{forward.3} parent=0 // pred_check_branch
    %9 = sbr.rel (0) target = $region5
  $region4: #{forward.3} parent=0 // pred_region
    _
  $region5: #{forward.3} parent=0 // pred_fallthru
    _
  // Predicated region
  $region6: #{forward.3} parent=0 // pred_check
    _
  $region7: #{forward.3} parent=0 // pred_check_branch
    %11 = sbr.rel (0) target = $region9
  $region8: #{forward.3} parent=0 // pred_region
    _
  $region9: #{forward.3} parent=0 // pred_fallthru
    _
  // Predicated region
  $region10: #{forward.3} parent=0 // pred_check
    _
  $region11: #{forward.3} parent=0 // pred_check_branch
    %13 = sbr.rel (0) target = $region13
  $region12: #{forward.3} parent=0 // pred_region
    _
  $region13: #{forward.3} parent=0 // pred_fallthru
    _
  %v14 = vld [vmem:[%s0] sm:$0xff]
  %v15 = vld [vmem:[%s0 + $0x8] sm:$0xff]
  %v16 = vld [vmem:[%s0 + $0x10] sm:$0xff]
  %v17 = vld [vmem:[%s0 + $0x18] sm:$0xff]
  %v18 = vld [vmem:[%s0 + $0x20] sm:$0xff]
  %v19 = vld [vmem:[%s0 + $0x28] sm:$0xff]
  %v20 = vld [vmem:[%s0 + $0x30] sm:$0xff]
  %v21 = vld [vmem:[%s0 + $0x38] sm:$0xff]
  %v22 = vld [vmem:[%s1] sm:$0xff]
  %v23 = vld [vmem:[%s1 + $0x8] sm:$0xff]
  %v24 = vld [vmem:[%s1 + $0x10] sm:$0xff]
  %v25 = vld [vmem:[%s1 + $0x18] sm:$0xff]
  %v26 = vld [vmem:[%s1 + $0x20] sm:$0xff]
  %v27 = vld [vmem:[%s1 + $0x28] sm:$0xff]
  %v28 = vld [vmem:[%s1 + $0x30] sm:$0xff]
  %v29 = vld [vmem:[%s1 + $0x38] sm:$0xff]
  %v30 = vld [vmem:[%s1 + $0x40] sm:$0xff]
  %v31 = vld [vmem:[%s1 + $0x48] sm:$0xff]
  %v32 = vld [vmem:[%s1 + $0x50] sm:$0xff]
  %v33 = vld [vmem:[%s1 + $0x58] sm:$0xff]
  %v34 = vld [vmem:[%s1 + $0x60] sm:$0xff]
  %v35 = vld [vmem:[%s1 + $0x68] sm:$0xff]
  %v36 = vld [vmem:[%s1 + $0x70] sm:$0xff]
  %v37 = vld [vmem:[%s1 + $0x78] sm:$0xff]
  %v38 = vld [vmem:[%s1 + $0x80] sm:$0xff]
  %v39 = vld [vmem:[%s1 + $0x88] sm:$0xff]
  %v40 = vld [vmem:[%s1 + $0x90] sm:$0xff]
  %v41 = vld [vmem:[%s1 + $0x98] sm:$0xff]
  %v42 = vld [vmem:[%s1 + $0xa0] sm:$0xff]
  %v43 = vld [vmem:[%s1 + $0xa8] sm:$0xff]
  %v44 = vld [vmem:[%s1 + $0xb0] sm:$0xff]
  %v45 = vld [vmem:[%s1 + $0xb8] sm:$0xff]
  %v46 = vld [vmem:[%s1 + $0xc0] sm:$0xff]
  %v47 = vld [vmem:[%s1 + $0xc8] sm:$0xff]
  %v48 = vld [vmem:[%s1 + $0xd0] sm:$0xff]
  %v49 = vld [vmem:[%s1 + $0xd8] sm:$0xff]
  %v50 = vld [vmem:[%s1 + $0xe0] sm:$0xff]
  %v51 = vld [vmem:[%s1 + $0xe8] sm:$0xff]
  %v52 = vld [vmem:[%s1 + $0xf0] sm:$0xff]
  %v53 = vld [vmem:[%s1 + $0xf8] sm:$0xff]
  %v54 = vld [vmem:[%s2] sm:$0x1]
  %v56 = vlaneseq
  %v57 = vshrl.u32 %v56, 7
  %v58 = vsub.s32 0, %v57
  %v59 = vrot.slane %v54, %v58
  %61 = vmatprep.subr.mxu0 0.0
  %62 = vmatpush1.msra.mxu0 %v22
  %63 = vmatprep.subr.mxu0 0.0
  %64 = vmatpush1.msra.mxu0 %v23
  %65 = vmatprep.subr.mxu0 0.0
  %66 = vmatpush1.msra.mxu0 %v24
  %67 = vmatprep.subr.mxu0 0.0
  %68 = vmatpush1.msra.mxu0 %v25
  %69 = vmatprep.subr.mxu0 0.0
  %70 = vmatpush1.msra.mxu0 %v26
  %71 = vmatprep.subr.mxu0 0.0
  %72 = vmatpush1.msra.mxu0 %v27
  %73 = vmatprep.subr.mxu0 0.0
  %74 = vmatpush1.msra.mxu0 %v28
  %75 = vmatprep.subr.mxu0 0.0
  %76 = vmatpush1.msra.mxu0 %v29
  %77 = vmatprep.subr.mxu0 0.0
  %78 = vmatpush1.msra.mxu0 %v30
  %79 = vmatprep.subr.mxu0 0.0
  %80 = vmatpush1.msra.mxu0 %v31
  %81 = vmatprep.subr.mxu0 0.0
  %82 = vmatpush1.msra.mxu0 %v32
  %83 = vmatprep.subr.mxu0 0.0
  %84 = vmatpush1.msra.mxu0 %v33
  %85 = vmatprep.subr.mxu0 0.0
  %86 = vmatpush1.msra.mxu0 %v34
  %87 = vmatprep.subr.mxu0 0.0
  %88 = vmatpush1.msra.mxu0 %v35
  %89 = vmatprep.subr.mxu0 0.0
  %90 = vmatpush1.msra.mxu0 %v36
  %91 = vmatprep.subr.mxu0 0.0
  %92 = vmatpush1.msra.mxu0 %v37
  %93 = vmatprep.subr.mxu0 0.0
  %94 = vmatpush1.msra.mxu0 %v38
  %95 = vmatprep.subr.mxu0 0.0
  %96 = vmatpush1.msra.mxu0 %v39
  %97 = vmatprep.subr.mxu0 0.0
  %98 = vmatpush1.msra.mxu0 %v40
  %99 = vmatprep.subr.mxu0 0.0
  %100 = vmatpush1.msra.mxu0 %v41
  %101 = vmatprep.subr.mxu0 0.0
  %102 = vmatpush1.msra.mxu0 %v42
  %103 = vmatprep.subr.mxu0 0.0
  %104 = vmatpush1.msra.mxu0 %v43
  %105 = vmatprep.subr.mxu0 0.0
  %106 = vmatpush1.msra.mxu0 %v44
  %107 = vmatprep.subr.mxu0 0.0
  %108 = vmatpush1.msra.mxu0 %v45
  %109 = vmatprep.subr.mxu0 0.0
  %110 = vmatpush1.msra.mxu0 %v46
  %111 = vmatprep.subr.mxu0 0.0
  %112 = vmatpush1.msra.mxu0 %v47
  %113 = vmatprep.subr.mxu0 0.0
  %114 = vmatpush1.msra.mxu0 %v48
  %115 = vmatprep.subr.mxu0 0.0
  %116 = vmatpush1.msra.mxu0 %v49
  %117 = vmatprep.subr.mxu0 0.0
  %118 = vmatpush1.msra.mxu0 %v50
  %119 = vmatprep.subr.mxu0 0.0
  %120 = vmatpush1.msra.mxu0 %v51
  %121 = vmatprep.subr.mxu0 0.0
  %122 = vmatpush1.msra.mxu0 %v52
  %123 = vmatprep.subr.mxu0 0.0
  %124 = vmatpush1.msra.mxu0 %v53
  %125 = vmatprep.mubr.f32.mxu0 %v15
  %126 = vmatmul.mubr.f32.gmra.mrb[0].mxu0 %v14
  %v127 = vpop.f32.mrb[0].mxu0
  %v128 = vadd.f32 %v59, %v127
  %v129 = vpop.f32.mrb[0].mxu0
  %130 = vmatprep.mubr.f32.mxu0 %v17
  %131 = vmatmul.mubr.f32.gmra.mrb[0].mxu0 %v16
  %v132 = vpop.f32.mrb[0].mxu0
  %v133 = vadd.f32 %v59, %v132
  %v134 = vpop.f32.mrb[0].mxu0
  %135 = vmatprep.mubr.f32.mxu0 %v19
  %136 = vmatmul.mubr.f32.gmra.mrb[0].mxu0 %v18
  %v137 = vpop.f32.mrb[0].mxu0
  %v138 = vadd.f32 %v59, %v137
  %v139 = vpop.f32.mrb[0].mxu0
  %140 = vmatprep.mubr.f32.mxu0 %v21
  %141 = vmatmul.mubr.f32.gmra.mrb[0].mxu0 %v20
  %v142 = vpop.f32.mrb[0].mxu0
  %v143 = vadd.f32 %v59, %v142
  %v144 = vpop.f32.mrb[0].mxu0
  %145 = vdwg.mxu0
  %v146 = vtanh.pop %v128
  %v147 = vtanh.pop %v133
  %v148 = vtanh.pop %v138
  %v149 = vtanh.pop %v143
  %150 = vst [vmem:[%s3] sm:$0xff] %v146
  %151 = vst [vmem:[%s3 + $0x8] sm:$0xff] %v147
  %152 = vst [vmem:[%s3 + $0x10] sm:$0xff] %v148
  %153 = vst [vmem:[%s3 + $0x18] sm:$0xff] %v149
  // Predicated region
  $region14: #{forward.3} parent=0 // pred_check
    _
  $region15: #{forward.3} parent=0 // pred_check_branch
    %155 = sbr.rel (0) target = $region17
  $region16: #{forward.3} parent=0 // pred_region
    _
  $region17: #{forward.3} parent=0 // pred_fallthru
    _
  // Predicated region
  $region18: #{forward.3} parent=0 // pred_check
    _
  $region19: #{forward.3} parent=0 // pred_check_branch
    %157 = sbr.rel (0) target = $region21
  $region20: #{forward.3} parent=0 // pred_region
    _
  $region21: #{forward.3} parent=0 // pred_fallthru
    _

// kernel: forward.2
$region0: #{forward.2}
  #allocation0 [shape = 'u32[]', space=smem, size = 0x4, offset = 0x4, fixed_abs, tag = 'smem constant byte address 0x4 - core index']
  #allocation1 [shape = 'u32[144,128]{1,0:T(1,128)}', space=vmem, size = 0x12000, scoped, tag = 'internal scratch']
  %s0 = inlined_call_operand.vmem [shape: f32[2,32,128], index: 0, kind: input, shape index: {}]
  %s1 = inlined_call_operand.vmem [shape: f32[2,32,128], index: 1, kind: input, shape index: {}]
  %s2 = inlined_call_operand.vmem [shape: f32[2,2,128,128], index: 2, kind: input, shape index: {}]
  %s3 = inlined_call_operand.hbm [shape: f32[2,2,1,128], index: 3, kind: input, shape index: {}]
  %s4 = inlined_call_operand.vmem [shape: f32[2,128,128], index: 4, kind: input, shape index: {}]
  %s5 = inlined_call_operand.vmem [shape: f32[2,1,128], index: 5, kind: input, shape index: {}]
  %s6 = inlined_call_operand.vmem [shape: f32[2,128,128], index: 6, kind: input, shape index: {}]
  %s7 = inlined_call_operand.hbm [shape: f32[2,1,128], index: 7, kind: input, shape index: {}]
  %s8 = inlined_call_operand.vmem [shape: f32[2,128,128], index: 8, kind: input, shape index: {}]
  %s9 = inlined_call_operand.hbm [shape: f32[2,1,128], index: 9, kind: input, shape index: {}]
  %s10 = inlined_call_operand.hbm [shape: f32[2,1,128,128], index: 10, kind: input, shape index: {}]
  %s11 = inlined_call_operand.hbm [shape: f32[2,1,1,128], index: 11, kind: input, shape index: {}]
  %s12 = inlined_call_operand.hbm [shape: f32[2,128,1024], index: 12, kind: input, shape index: {}]
  %s13 = inlined_call_operand.hbm [shape: f32[2,1,1024], index: 13, kind: input, shape index: {}]
  %s14 = inlined_call_operand.hbm [shape: f32[2,1024,128], index: 14, kind: input, shape index: {}]
  %s15 = inlined_call_operand.hbm [shape: f32[2,1,128], index: 15, kind: input, shape index: {}]
  %s16 = inlined_call_operand.vmem [shape: f32[2,32,128], index: 16, kind: output, shape index: {0}]
  %s17 = inlined_call_operand.vmem [shape: f32[2,32,128], index: 17, kind: output, shape index: {1}]
  %s18 = inlined_call_operand.vmem [shape: f32[2,32,128], index: 18, kind: output, shape index: {2}]
  %s19 = inlined_call_operand.vmem [shape: f32[2,32,128], index: 19, kind: output, shape index: {3}]
  %20 = xla_tuple %s16, %s17, %s18, %s19
  %s21 = sld [smem:[#allocation0]]
  $region157: #{forward.2} parent=0
    _
  %s23 = ssub.s32 1, %s21
  %s24 = scalar_select 0, %s23, %s21
  $region1: #{forward.2} parent=0
    #allocation2 [shape = 'u8[2048]{0}', space=vmem, size = 0x800, scoped, tag = 'input window, operand 3']
    #allocation3 [shape = 's32[2]{0}', space=sflag, size = 0x8, scoped, tag = 'scoped memory for forward.2']
    #allocation4 [shape = 'u8[1024]{0}', space=vmem, size = 0x400, scoped, tag = 'input window, operand 7']
    #allocation5 [shape = 's32[2]{0}', space=sflag, size = 0x8, scoped, tag = 'scoped memory for forward.2']
    #allocation6 [shape = 'u8[1024]{0}', space=vmem, size = 0x400, scoped, tag = 'input window, operand 9']
    #allocation7 [shape = 'u8[131072]{0}', space=vmem, size = 0x20000, scoped, tag = 'input window, operand 10']
    #allocation8 [shape = 's32[2]{0}', space=sflag, size = 0x8, scoped, tag = 'scoped memory for forward.2']
    #allocation9 [shape = 'u8[1024]{0}', space=vmem, size = 0x400, scoped, tag = 'input window, operand 11']
    #allocation10 [shape = 'u8[1048576]{0}', space=vmem, size = 0x100000, scoped, tag = 'input window, operand 12']
    #allocation11 [shape = 's32[2]{0}', space=sflag, size = 0x8, scoped, tag = 'scoped memory for forward.2']
    #allocation12 [shape = 'u8[8192]{0}', space=vmem, size = 0x2000, scoped, tag = 'input window, operand 13']
    #allocation13 [shape = 'u8[1048576]{0}', space=vmem, size = 0x100000, scoped, tag = 'input window, operand 14']
    #allocation14 [shape = 's32[2]{0}', space=sflag, size = 0x8, scoped, tag = 'scoped memory for forward.2']
    #allocation15 [shape = 'u8[1024]{0}', space=vmem, size = 0x400, scoped, tag = 'input window, operand 15']
    %25 = vsyncpa [#allocation3], 0
    %s26 = scalar_lea.sflag [#allocation3], 1
    %27 = vsyncpa %s26, 0
    %28 = vsyncpa [#allocation5], 0
    %s29 = scalar_lea.sflag [#allocation5], 1
    %30 = vsyncpa %s29, 0
    %31 = vsyncpa [#allocation8], 0
    %s32 = scalar_lea.sflag [#allocation8], 1
    %33 = vsyncpa %s32, 0
    %34 = vsyncpa [#allocation11], 0
    %s35 = scalar_lea.sflag [#allocation11], 1
    %36 = vsyncpa %s35, 0
    %37 = vsyncpa [#allocation14], 0
    %s38 = scalar_lea.sflag [#allocation14], 1
    %39 = vsyncpa %s38, 0
    loop: start=0, step=1, limit=4
    $region2: #{forward.2} parent=1 // loop_pre_header
      _
    $region3: #{forward.2} parent=1 // loop_header
      %s41 = sphi 0, %s45
      %p42 = scmp.ge.s32.totalorder %s41, 4
      %s51 = sphi 0, %s53
      %s54 = sphi 0, %s51
      %s55 = sphi 0, %s54
      %s71 = sphi 0, %s55
      %s77 = sphi 0, %s79
      %s80 = sphi 0, %s77
      %s81 = sphi 0, %s80
      %s97 = sphi 0, %s81
      %s103 = sphi 0, %s105
      %s106 = sphi 0, %s103
      %s107 = sphi 0, %s106
      %s123 = sphi 0, %s107
      %s129 = sphi 0, %s131
      %s132 = sphi 0, %s129
      %s133 = sphi 0, %s132
      %s149 = sphi 0, %s133
      %s155 = sphi 0, %s157
      %s158 = sphi 0, %s155
      %s159 = sphi 0, %s158
      %s175 = sphi 0, %s159
      %s181 = sphi 0, %s183
      %s184 = sphi 0, %s181
      %s185 = sphi 0, %s184
      %s201 = sphi 0, %s185
      %s207 = sphi 0, %s209
      %s210 = sphi 0, %s207
      %s211 = sphi 0, %s210
      %s227 = sphi 0, %s211
      %s233 = sphi 0, %s235
      %s236 = sphi 0, %s233
      %s237 = sphi 0, %s236
      %s253 = sphi 0, %s237
      %s259 = sphi 0, %s261
      %s262 = sphi 0, %s259
      %s263 = sphi 0, %s262
      %s279 = sphi 0, %s263
      %s285 = sphi 0, %s287
      %s288 = sphi 0, %s285
      %s289 = sphi 0, %s288
      %s305 = sphi 0, %s289
      %s311 = sphi 0, %s313
      %s314 = sphi 0, %s311
      %s315 = sphi 0, %s314
      %s331 = sphi 0, %s315
      %s337 = sphi 0, %s339
      %s340 = sphi 0, %s337
      %s341 = sphi 0, %s340
      %s357 = sphi 0, %s341
      %s363 = sphi 0, %s365
      %s366 = sphi 0, %s363
      %s367 = sphi 0, %s366
      %s383 = sphi 0, %s367
      %s389 = sphi 0, %s391
      %s392 = sphi 0, %s389
      %s393 = sphi 0, %s392
      %s409 = sphi 0, %s393
      %s415 = sphi 0, %s417
      %s418 = sphi 0, %s415
      %s419 = sphi 0, %s418
      %s435 = sphi 0, %s419
      %s441 = sphi 0, %s443
      %s444 = sphi 0, %s441
      %s445 = sphi 0, %s444
      %s461 = sphi 0, %s445
      %s467 = sphi 0, %s469
      %s470 = sphi 0, %s467
      %s471 = sphi 0, %s470
      %s487 = sphi 0, %s471
      %s493 = sphi 0, %s495
      %s496 = sphi 0, %s493
      %s497 = sphi 0, %s496
      %s513 = sphi 0, %s497
      %s519 = sphi 0, %s521
      %s522 = sphi 0, %s519
      %s523 = sphi 0, %s522
      %s539 = sphi 0, %s523
      %s545 = sphi 0, %s547
      %s548 = sphi 0, %s545
      %s549 = sphi 0, %s548
      %s565 = sphi 0, %s549
    $region4: #{forward.2} parent=1 // loop_header_branch
      %44 = sbr.rel (%p42) target = $region8
    $region5: #{forward.2} parent=1 // loop_body
      %s46 = ssub.s32 %s41, 1
      %s47 = ssub.s32 %s41, 2
      %s48 = sadd.s32 %s41, 1
      %s49 = ssub.s32 %s41, %s48
      %p50 = scmp.eq.s32.totalorder %s49, 0
      %s52 = sadd.s32 %s51, 1
      %s53 = scalar_select %p50, %s51, %s52
      %p56 = pneg %p50
      %p57 = scmp.eq.s32.totalorder %s41, 1
      %p58 = por %p56, %p57
      %p59 = scmp.ne.s32.totalorder %s51, %s54
      %p60 = scmp.eq.s32.totalorder %s41, 0
      %p61 = por %p59, %p60
      %p62 = scmp.ne.s32.totalorder %s51, %s54
      %p63 = scmp.eq.s32.totalorder %s46, 1
      %p64 = por %p62, %p63
      %p65 = scmp.ne.s32.totalorder %s54, %s55
      %p66 = scmp.eq.s32.totalorder %s46, 0
      %p67 = por %p65, %p66
      %p68 = scmp.ne.s32.totalorder %s54, %s55
      %p69 = scmp.eq.s32.totalorder %s47, 1
      %p70 = por %p68, %p69
      %p72 = scmp.ne.s32.totalorder %s55, %s71
      %p73 = scmp.eq.s32.totalorder %s47, 0
      %p74 = por %p72, %p73
      %s75 = ssub.s32 %s41, %s48
      %p76 = scmp.eq.s32.totalorder %s75, 0
      %s78 = sadd.s32 %s77, 1
      %s79 = scalar_select %p76, %s77, %s78
      %p82 = pneg %p76
      %p83 = scmp.eq.s32.totalorder %s41, 1
      %p84 = por %p82, %p83
      %p85 = scmp.ne.s32.totalorder %s77, %s80
      %p86 = scmp.eq.s32.totalorder %s41, 0
      %p87 = por %p85, %p86
      %p88 = scmp.ne.s32.totalorder %s77, %s80
      %p89 = scmp.eq.s32.totalorder %s46, 1
      %p90 = por %p88, %p89
      %p91 = scmp.ne.s32.totalorder %s80, %s81
      %p92 = scmp.eq.s32.totalorder %s46, 0
      %p93 = por %p91, %p92
      %p94 = scmp.ne.s32.totalorder %s80, %s81
      %p95 = scmp.eq.s32.totalorder %s47, 1
      %p96 = por %p94, %p95
      %p98 = scmp.ne.s32.totalorder %s81, %s97
      %p99 = scmp.eq.s32.totalorder %s47, 0
      %p100 = por %p98, %p99
      %s101 = ssub.s32 %s41, %s48
      %p102 = scmp.eq.s32.totalorder %s101, 0
      %s104 = sadd.s32 %s103, 1
      %s105 = scalar_select %p102, %s103, %s104
      %p108 = pneg %p102
      %p109 = scmp.eq.s32.totalorder %s41, 1
      %p110 = por %p108, %p109
      %p111 = scmp.ne.s32.totalorder %s103, %s106
      %p112 = scmp.eq.s32.totalorder %s41, 0
      %p113 = por %p111, %p112
      %p114 = scmp.ne.s32.totalorder %s103, %s106
      %p115 = scmp.eq.s32.totalorder %s46, 1
      %p116 = por %p114, %p115
      %p117 = scmp.ne.s32.totalorder %s106, %s107
      %p118 = scmp.eq.s32.totalorder %s46, 0
      %p119 = por %p117, %p118
      %p120 = scmp.ne.s32.totalorder %s106, %s107
      %p121 = scmp.eq.s32.totalorder %s47, 1
      %p122 = por %p120, %p121
      %p124 = scmp.ne.s32.totalorder %s107, %s123
      %p125 = scmp.eq.s32.totalorder %s47, 0
      %p126 = por %p124, %p125
      %s127 = ssub.s32 %s41, %s48
      %p128 = scmp.eq.s32.totalorder %s127, 0
      %s130 = sadd.s32 %s129, 1
      %s131 = scalar_select %p128, %s129, %s130
      %p134 = pneg %p128
      %p135 = scmp.eq.s32.totalorder %s41, 1
      %p136 = por %p134, %p135
      %p137 = scmp.ne.s32.totalorder %s129, %s132
      %p138 = scmp.eq.s32.totalorder %s41, 0
      %p139 = por %p137, %p138
      %p140 = scmp.ne.s32.totalorder %s129, %s132
      %p141 = scmp.eq.s32.totalorder %s46, 1
      %p142 = por %p140, %p141
      %p143 = scmp.ne.s32.totalorder %s132, %s133
      %p144 = scmp.eq.s32.totalorder %s46, 0
      %p145 = por %p143, %p144
      %p146 = scmp.ne.s32.totalorder %s132, %s133
      %p147 = scmp.eq.s32.totalorder %s47, 1
      %p148 = por %p146, %p147
      %p150 = scmp.ne.s32.totalorder %s133, %s149
      %p151 = scmp.eq.s32.totalorder %s47, 0
      %p152 = por %p150, %p151
      %s153 = ssub.s32 %s41, %s48
      %p154 = scmp.eq.s32.totalorder %s153, 0
      %s156 = sadd.s32 %s155, 1
      %s157 = scalar_select %p154, %s155, %s156
      %p160 = pneg %p154
      %p161 = scmp.eq.s32.totalorder %s41, 1
      %p162 = por %p160, %p161
      %p163 = scmp.ne.s32.totalorder %s155, %s158
      %p164 = scmp.eq.s32.totalorder %s41, 0
      %p165 = por %p163, %p164
      %p166 = scmp.ne.s32.totalorder %s155, %s158
      %p167 = scmp.eq.s32.totalorder %s46, 1
      %p168 = por %p166, %p167
      %p169 = scmp.ne.s32.totalorder %s158, %s159
      %p170 = scmp.eq.s32.totalorder %s46, 0
      %p171 = por %p169, %p170
      %p172 = scmp.ne.s32.totalorder %s158, %s159
      %p173 = scmp.eq.s32.totalorder %s47, 1
      %p174 = por %p172, %p173
      %p176 = scmp.ne.s32.totalorder %s159, %s175
      %p177 = scmp.eq.s32.totalorder %s47, 0
      %p178 = por %p176, %p177
      %s179 = ssub.s32 %s41, %s48
      %p180 = scmp.eq.s32.totalorder %s179, 0
      %s182 = sadd.s32 %s181, 1
      %s183 = scalar_select %p180, %s181, %s182
      %p186 = pneg %p180
      %p187 = scmp.eq.s32.totalorder %s41, 1
      %p188 = por %p186, %p187
      %p189 = scmp.ne.s32.totalorder %s181, %s184
      %p190 = scmp.eq.s32.totalorder %s41, 0
      %p191 = por %p189, %p190
      %p192 = scmp.ne.s32.totalorder %s181, %s184
      %p193 = scmp.eq.s32.totalorder %s46, 1
      %p194 = por %p192, %p193
      %p195 = scmp.ne.s32.totalorder %s184, %s185
      %p196 = scmp.eq.s32.totalorder %s46, 0
      %p197 = por %p195, %p196
      %p198 = scmp.ne.s32.totalorder %s184, %s185
      %p199 = scmp.eq.s32.totalorder %s47, 1
      %p200 = por %p198, %p199
      %p202 = scmp.ne.s32.totalorder %s185, %s201
      %p203 = scmp.eq.s32.totalorder %s47, 0
      %p204 = por %p202, %p203
      %s205 = ssub.s32 %s41, %s48
      %p206 = scmp.eq.s32.totalorder %s205, 0
      %s208 = sadd.s32 %s207, 1
      %s209 = scalar_select %p206, %s207, %s208
      %p212 = pneg %p206
      %p213 = scmp.eq.s32.totalorder %s41, 1
      %p214 = por %p212, %p213
      %p215 = scmp.ne.s32.totalorder %s207, %s210
      %p216 = scmp.eq.s32.totalorder %s41, 0
      %p217 = por %p215, %p216
      %p218 = scmp.ne.s32.totalorder %s207, %s210
      %p219 = scmp.eq.s32.totalorder %s46, 1
      %p220 = por %p218, %p219
      %p221 = scmp.ne.s32.totalorder %s210, %s211
      %p222 = scmp.eq.s32.totalorder %s46, 0
      %p223 = por %p221, %p222
      %p224 = scmp.ne.s32.totalorder %s210, %s211
      %p225 = scmp.eq.s32.totalorder %s47, 1
      %p226 = por %p224, %p225
      %p228 = scmp.ne.s32.totalorder %s211, %s227
      %p229 = scmp.eq.s32.totalorder %s47, 0
      %p230 = por %p228, %p229
      %s231 = ssub.s32 %s41, %s48
      %p232 = scmp.eq.s32.totalorder %s231, 0
      %s234 = sadd.s32 %s233, 1
      %s235 = scalar_select %p232, %s233, %s234
      %p238 = pneg %p232
      %p239 = scmp.eq.s32.totalorder %s41, 1
      %p240 = por %p238, %p239
      %p241 = scmp.ne.s32.totalorder %s233, %s236
      %p242 = scmp.eq.s32.totalorder %s41, 0
      %p243 = por %p241, %p242
      %p244 = scmp.ne.s32.totalorder %s233, %s236
      %p245 = scmp.eq.s32.totalorder %s46, 1
      %p246 = por %p244, %p245
      %p247 = scmp.ne.s32.totalorder %s236, %s237
      %p248 = scmp.eq.s32.totalorder %s46, 0
      %p249 = por %p247, %p248
      %p250 = scmp.ne.s32.totalorder %s236, %s237
      %p251 = scmp.eq.s32.totalorder %s47, 1
      %p252 = por %p250, %p251
      %p254 = scmp.ne.s32.totalorder %s237, %s253
      %p255 = scmp.eq.s32.totalorder %s47, 0
      %p256 = por %p254, %p255
      %s257 = ssub.s32 %s41, %s48
      %p258 = scmp.eq.s32.totalorder %s257, 0
      %s260 = sadd.s32 %s259, 1
      %s261 = scalar_select %p258, %s259, %s260
      %p264 = pneg %p258
      %p265 = scmp.eq.s32.totalorder %s41, 1
      %p266 = por %p264, %p265
      %p267 = scmp.ne.s32.totalorder %s259, %s262
      %p268 = scmp.eq.s32.totalorder %s41, 0
      %p269 = por %p267, %p268
      %p270 = scmp.ne.s32.totalorder %s259, %s262
      %p271 = scmp.eq.s32.totalorder %s46, 1
      %p272 = por %p270, %p271
      %p273 = scmp.ne.s32.totalorder %s262, %s263
      %p274 = scmp.eq.s32.totalorder %s46, 0
      %p275 = por %p273, %p274
      %p276 = scmp.ne.s32.totalorder %s262, %s263
      %p277 = scmp.eq.s32.totalorder %s47, 1
      %p278 = por %p276, %p277
      %p280 = scmp.ne.s32.totalorder %s263, %s279
      %p281 = scmp.eq.s32.totalorder %s47, 0
      %p282 = por %p280, %p281
      %s283 = ssub.s32 %s41, %s48
      %p284 = scmp.eq.s32.totalorder %s283, 0
      %s286 = sadd.s32 %s285, 1
      %s287 = scalar_select %p284, %s285, %s286
      %p290 = pneg %p284
      %p291 = scmp.eq.s32.totalorder %s41, 1
      %p292 = por %p290, %p291
      %p293 = scmp.ne.s32.totalorder %s285, %s288
      %p294 = scmp.eq.s32.totalorder %s41, 0
      %p295 = por %p293, %p294
      %p296 = scmp.ne.s32.totalorder %s285, %s288
      %p297 = scmp.eq.s32.totalorder %s46, 1
      %p298 = por %p296, %p297
      %p299 = scmp.ne.s32.totalorder %s288, %s289
      %p300 = scmp.eq.s32.totalorder %s46, 0
      %p301 = por %p299, %p300
      %p302 = scmp.ne.s32.totalorder %s288, %s289
      %p303 = scmp.eq.s32.totalorder %s47, 1
      %p304 = por %p302, %p303
      %p306 = scmp.ne.s32.totalorder %s289, %s305
      %p307 = scmp.eq.s32.totalorder %s47, 0
      %p308 = por %p306, %p307
      %s309 = ssub.s32 %s41, %s48
      %p310 = scmp.eq.s32.totalorder %s309, 0
      %s312 = sadd.s32 %s311, 1
      %s313 = scalar_select %p310, %s311, %s312
      %p316 = pneg %p310
      %p317 = scmp.eq.s32.totalorder %s41, 1
      %p318 = por %p316, %p317
      %p319 = scmp.ne.s32.totalorder %s311, %s314
      %p320 = scmp.eq.s32.totalorder %s41, 0
      %p321 = por %p319, %p320
      %p322 = scmp.ne.s32.totalorder %s311, %s314
      %p323 = scmp.eq.s32.totalorder %s46, 1
      %p324 = por %p322, %p323
      %p325 = scmp.ne.s32.totalorder %s314, %s315
      %p326 = scmp.eq.s32.totalorder %s46, 0
      %p327 = por %p325, %p326
      %p328 = scmp.ne.s32.totalorder %s314, %s315
      %p329 = scmp.eq.s32.totalorder %s47, 1
      %p330 = por %p328, %p329
      %p332 = scmp.ne.s32.totalorder %s315, %s331
      %p333 = scmp.eq.s32.totalorder %s47, 0
      %p334 = por %p332, %p333
      %s335 = ssub.s32 %s41, %s48
      %p336 = scmp.eq.s32.totalorder %s335, 0
      %s338 = sadd.s32 %s337, 1
      %s339 = scalar_select %p336, %s337, %s338
      %p342 = pneg %p336
      %p343 = scmp.eq.s32.totalorder %s41, 1
      %p344 = por %p342, %p343
      %p345 = scmp.ne.s32.totalorder %s337, %s340
      %p346 = scmp.eq.s32.totalorder %s41, 0
      %p347 = por %p345, %p346
      %p348 = scmp.ne.s32.totalorder %s337, %s340
      %p349 = scmp.eq.s32.totalorder %s46, 1
      %p350 = por %p348, %p349
      %p351 = scmp.ne.s32.totalorder %s340, %s341
      %p352 = scmp.eq.s32.totalorder %s46, 0
      %p353 = por %p351, %p352
      %p354 = scmp.ne.s32.totalorder %s340, %s341
      %p355 = scmp.eq.s32.totalorder %s47, 1
      %p356 = por %p354, %p355
      %p358 = scmp.ne.s32.totalorder %s341, %s357
      %p359 = scmp.eq.s32.totalorder %s47, 0
      %p360 = por %p358, %p359
      %s361 = ssub.s32 %s41, %s48
      %p362 = scmp.eq.s32.totalorder %s361, 0
      %s364 = sadd.s32 %s363, 1
      %s365 = scalar_select %p362, %s363, %s364
      %p368 = pneg %p362
      %p369 = scmp.eq.s32.totalorder %s41, 1
      %p370 = por %p368, %p369
      %p371 = scmp.ne.s32.totalorder %s363, %s366
      %p372 = scmp.eq.s32.totalorder %s41, 0
      %p373 = por %p371, %p372
      %p374 = scmp.ne.s32.totalorder %s363, %s366
      %p375 = scmp.eq.s32.totalorder %s46, 1
      %p376 = por %p374, %p375
      %p377 = scmp.ne.s32.totalorder %s366, %s367
      %p378 = scmp.eq.s32.totalorder %s46, 0
      %p379 = por %p377, %p378
      %p380 = scmp.ne.s32.totalorder %s366, %s367
      %p381 = scmp.eq.s32.totalorder %s47, 1
      %p382 = por %p380, %p381
      %p384 = scmp.ne.s32.totalorder %s367, %s383
      %p385 = scmp.eq.s32.totalorder %s47, 0
      %p386 = por %p384, %p385
      %s387 = ssub.s32 %s41, %s48
      %p388 = scmp.eq.s32.totalorder %s387, 0
      %s390 = sadd.s32 %s389, 1
      %s391 = scalar_select %p388, %s389, %s390
      %p394 = pneg %p388
      %p395 = scmp.eq.s32.totalorder %s41, 1
      %p396 = por %p394, %p395
      %p397 = scmp.ne.s32.totalorder %s389, %s392
      %p398 = scmp.eq.s32.totalorder %s41, 0
      %p399 = por %p397, %p398
      %p400 = scmp.ne.s32.totalorder %s389, %s392
      %p401 = scmp.eq.s32.totalorder %s46, 1
      %p402 = por %p400, %p401
      %p403 = scmp.ne.s32.totalorder %s392, %s393
      %p404 = scmp.eq.s32.totalorder %s46, 0
      %p405 = por %p403, %p404
      %p406 = scmp.ne.s32.totalorder %s392, %s393
      %p407 = scmp.eq.s32.totalorder %s47, 1
      %p408 = por %p406, %p407
      %p410 = scmp.ne.s32.totalorder %s393, %s409
      %p411 = scmp.eq.s32.totalorder %s47, 0
      %p412 = por %p410, %p411
      %s413 = ssub.s32 %s41, %s48
      %p414 = scmp.eq.s32.totalorder %s413, 0
      %s416 = sadd.s32 %s415, 1
      %s417 = scalar_select %p414, %s415, %s416
      %p420 = pneg %p414
      %p421 = scmp.eq.s32.totalorder %s41, 1
      %p422 = por %p420, %p421
      %p423 = scmp.ne.s32.totalorder %s415, %s418
      %p424 = scmp.eq.s32.totalorder %s41, 0
      %p425 = por %p423, %p424
      %p426 = scmp.ne.s32.totalorder %s415, %s418
      %p427 = scmp.eq.s32.totalorder %s46, 1
      %p428 = por %p426, %p427
      %p429 = scmp.ne.s32.totalorder %s418, %s419
      %p430 = scmp.eq.s32.totalorder %s46, 0
      %p431 = por %p429, %p430
      %p432 = scmp.ne.s32.totalorder %s418, %s419
      %p433 = scmp.eq.s32.totalorder %s47, 1
      %p434 = por %p432, %p433
      %p436 = scmp.ne.s32.totalorder %s419, %s435
      %p437 = scmp.eq.s32.totalorder %s47, 0
      %p438 = por %p436, %p437
      %s439 = ssub.s32 %s41, %s48
      %p440 = scmp.eq.s32.totalorder %s439, 0
      %s442 = sadd.s32 %s441, 1
      %s443 = scalar_select %p440, %s441, %s442
      %p446 = pneg %p440
      %p447 = scmp.eq.s32.totalorder %s41, 1
      %p448 = por %p446, %p447
      %p449 = scmp.ne.s32.totalorder %s441, %s444
      %p450 = scmp.eq.s32.totalorder %s41, 0
      %p451 = por %p449, %p450
      %p452 = scmp.ne.s32.totalorder %s441, %s444
      %p453 = scmp.eq.s32.totalorder %s46, 1
      %p454 = por %p452, %p453
      %p455 = scmp.ne.s32.totalorder %s444, %s445
      %p456 = scmp.eq.s32.totalorder %s46, 0
      %p457 = por %p455, %p456
      %p458 = scmp.ne.s32.totalorder %s444, %s445
      %p459 = scmp.eq.s32.totalorder %s47, 1
      %p460 = por %p458, %p459
      %p462 = scmp.ne.s32.totalorder %s445, %s461
      %p463 = scmp.eq.s32.totalorder %s47, 0
      %p464 = por %p462, %p463
      %s465 = ssub.s32 %s41, %s48
      %p466 = scmp.eq.s32.totalorder %s465, 0
      %s468 = sadd.s32 %s467, 1
      %s469 = scalar_select %p466, %s467, %s468
      %p472 = pneg %p466
      %p473 = scmp.eq.s32.totalorder %s41, 1
      %p474 = por %p472, %p473
      %p475 = scmp.ne.s32.totalorder %s467, %s470
      %p476 = scmp.eq.s32.totalorder %s41, 0
      %p477 = por %p475, %p476
      %p478 = scmp.ne.s32.totalorder %s467, %s470
      %p479 = scmp.eq.s32.totalorder %s46, 1
      %p480 = por %p478, %p479
      %p481 = scmp.ne.s32.totalorder %s470, %s471
      %p482 = scmp.eq.s32.totalorder %s46, 0
      %p483 = por %p481, %p482
      %p484 = scmp.ne.s32.totalorder %s470, %s471
      %p485 = scmp.eq.s32.totalorder %s47, 1
      %p486 = por %p484, %p485
      %p488 = scmp.ne.s32.totalorder %s471, %s487
      %p489 = scmp.eq.s32.totalorder %s47, 0
      %p490 = por %p488, %p489
      %s491 = ssub.s32 %s41, %s48
      %p492 = scmp.eq.s32.totalorder %s491, 0
      %s494 = sadd.s32 %s493, 1
      %s495 = scalar_select %p492, %s493, %s494
      %p498 = pneg %p492
      %p499 = scmp.eq.s32.totalorder %s41, 1
      %p500 = por %p498, %p499
      %p501 = scmp.ne.s32.totalorder %s493, %s496
      %p502 = scmp.eq.s32.totalorder %s41, 0
      %p503 = por %p501, %p502
      %p504 = scmp.ne.s32.totalorder %s493, %s496
      %p505 = scmp.eq.s32.totalorder %s46, 1
      %p506 = por %p504, %p505
      %p507 = scmp.ne.s32.totalorder %s496, %s497
      %p508 = scmp.eq.s32.totalorder %s46, 0
      %p509 = por %p507, %p508
      %p510 = scmp.ne.s32.totalorder %s496, %s497
      %p511 = scmp.eq.s32.totalorder %s47, 1
      %p512 = por %p510, %p511
      %p514 = scmp.ne.s32.totalorder %s497, %s513
      %p515 = scmp.eq.s32.totalorder %s47, 0
      %p516 = por %p514, %p515
      %s517 = ssub.s32 %s41, %s48
      %p518 = scmp.eq.s32.totalorder %s517, 0
      %s520 = sadd.s32 %s519, 1
      %s521 = scalar_select %p518, %s519, %s520
      %p524 = pneg %p518
      %p525 = scmp.eq.s32.totalorder %s41, 1
      %p526 = por %p524, %p525
      %p527 = scmp.ne.s32.totalorder %s519, %s522
      %p528 = scmp.eq.s32.totalorder %s41, 0
      %p529 = por %p527, %p528
      %p530 = scmp.ne.s32.totalorder %s519, %s522
      %p531 = scmp.eq.s32.totalorder %s46, 1
      %p532 = por %p530, %p531
      %p533 = scmp.ne.s32.totalorder %s522, %s523
      %p534 = scmp.eq.s32.totalorder %s46, 0
      %p535 = por %p533, %p534
      %p536 = scmp.ne.s32.totalorder %s522, %s523
      %p537 = scmp.eq.s32.totalorder %s47, 1
      %p538 = por %p536, %p537
      %p540 = scmp.ne.s32.totalorder %s523, %s539
      %p541 = scmp.eq.s32.totalorder %s47, 0
      %p542 = por %p540, %p541
      %s543 = ssub.s32 %s41, %s48
      %p544 = scmp.eq.s32.totalorder %s543, 0
      %s546 = sadd.s32 %s545, 1
      %s547 = scalar_select %p544, %s545, %s546
      %p550 = pneg %p544
      %p551 = scmp.eq.s32.totalorder %s41, 1
      %p552 = por %p550, %p551
      %p553 = scmp.ne.s32.totalorder %s545, %s548
      %p554 = scmp.eq.s32.totalorder %s41, 0
      %p555 = por %p553, %p554
      %p556 = scmp.ne.s32.totalorder %s545, %s548
      %p557 = scmp.eq.s32.totalorder %s46, 1
      %p558 = por %p556, %p557
      %p559 = scmp.ne.s32.totalorder %s548, %s549
      %p560 = scmp.eq.s32.totalorder %s46, 0
      %p561 = por %p559, %p560
      %p562 = scmp.ne.s32.totalorder %s548, %s549
      %p563 = scmp.eq.s32.totalorder %s47, 1
      %p564 = por %p562, %p563
      %p566 = scmp.ne.s32.totalorder %s549, %s565
      %p567 = scmp.eq.s32.totalorder %s47, 0
      %p568 = por %p566, %p567
      %p569 = scmp.le.s32.totalorder 1, %s41
      %p570 = scmp.lt.s32.totalorder %s41, 3
      %p571 = pnand %p569, %p570
      %p572 = pneg %p571
      // Predicated region
      $region9: #{forward.2} parent=5 // pred_check
        _
      $region10: #{forward.2} parent=5 // pred_check_branch
        %574 = sbr.rel (%p571) target = $region12
      $region11: #{forward.2} parent=5 // pred_region
        %s575 = ssub.s32 %s41, 1
      $region12: #{forward.2} parent=5 // pred_fallthru
        _
      %p576 = scmp.lt.s32.totalorder %s41, 2
      // Predicated region
      $region13: #{forward.2} parent=5 // pred_check
        %p577 = pneg %p576
      $region14: #{forward.2} parent=5 // pred_check_branch
        %579 = sbr.rel (%p577) target = $region16
      $region15: #{forward.2} parent=5 // pred_region
        // Predicated region
        $region17: #{forward.2} parent=15 // pred_check
          %p580 = pneg %p61
        $region18: #{forward.2} parent=15 // pred_check_branch
          %582 = sbr.rel (%p580) target = $region20
        $region19: #{forward.2} parent=15 // pred_region
          %p583 = scmp.lt.s32.totalorder %s41, 1
          %s584 = scalar_select %p583, %s41, 1
          %s585 = smul.addr %s584, 4
          %s586 = smul.addr %s585, 8
          %s587 = scalar_lea.vmem %s0, %s586
        $region20: #{forward.2} parent=15 // pred_fallthru
          _
        // Predicated region
        $region21: #{forward.2} parent=15 // pred_check
          %p588 = pneg %p87
        $region22: #{forward.2} parent=15 // pred_check_branch
          %590 = sbr.rel (%p588) target = $region24
        $region23: #{forward.2} parent=15 // pred_region
          %p591 = scmp.lt.s32.totalorder %s41, 1
          %s592 = scalar_select %p591, %s41, 1
          %s593 = smul.addr %s592, 4
          %s594 = smul.addr %s593, 8
          %s595 = scalar_lea.vmem %s1, %s594
        $region24: #{forward.2} parent=15 // pred_fallthru
          _
        // Predicated region
        $region25: #{forward.2} parent=15 // pred_check
          %p596 = pneg %p113
        $region26: #{forward.2} parent=15 // pred_check_branch
          %598 = sbr.rel (%p596) target = $region28
        $region27: #{forward.2} parent=15 // pred_region
          %p599 = scmp.lt.s32.totalorder %s41, 1
          %s600 = scalar_select %p599, %s41, 1
          %s601 = smul.addr %s600, 32
          %s602 = smul.addr %s601, 8
          %s603 = scalar_lea.vmem %s2, %s602
        $region28: #{forward.2} parent=15 // pred_fallthru
          _
        // Predicated region
        $region29: #{forward.2} parent=15 // pred_check
          %p604 = pneg %p139
        $region30: #{forward.2} parent=15 // pred_check_branch
          %606 = sbr.rel (%p604) target = $region32
        $region31: #{forward.2} parent=15 // pred_region
          %s607 = sand.u32 %s129, 1
          %s608 = scalar_lea.sflag [#allocation3], %s607
          %s609 = sand.u32 %s129, 1
          %s610 = smul.addr %s609, 2
          %s611 = scalar_lea.vmem [#allocation2], %s610
          %s613 = ssub.s32 32, 32
          %614 = vsyncadd %s608, %s613
          %s615 = smul.addr %s41, 2
          %s616 = smul.addr %s615, 16
          %s617 = scalar_lea.hbm %s3, %s616
          %s618 = sshll.u32 %s611, 4
          %s619 = int_to_ptr.vmem [resolvable:$true] %s618
          %624 = dma.hbm_to_vmem [thread:$0]  %s617, 32, %s619, %s608, 16, 16, 1
        $region32: #{forward.2} parent=15 // pred_fallthru
          _
        // Predicated region
        $region33: #{forward.2} parent=15 // pred_check
          %p625 = pneg %p165
        $region34: #{forward.2} parent=15 // pred_check_branch
          %627 = sbr.rel (%p625) target = $region36
        $region35: #{forward.2} parent=15 // pred_region
          %p628 = scmp.lt.s32.totalorder %s41, 1
          %s629 = scalar_select %p628, %s41, 1
          %s630 = smul.addr %s629, 16
          %s631 = smul.addr %s630, 8
          %s632 = scalar_lea.vmem %s4, %s631
        $region36: #{forward.2} parent=15 // pred_fallthru
          _
        // Predicated region
        $region37: #{forward.2} parent=15 // pred_check
          %p633 = pneg %p191
        $region38: #{forward.2} parent=15 // pred_check_branch
          %635 = sbr.rel (%p633) target = $region40
        $region39: #{forward.2} parent=15 // pred_region
          %p636 = scmp.lt.s32.totalorder %s41, 1
          %s637 = scalar_select %p636, %s41, 1
          %s638 = scalar_lea.vmem %s5, %s637
        $region40: #{forward.2} parent=15 // pred_fallthru
          _
        // Predicated region
        $region41: #{forward.2} parent=15 // pred_check
          %p639 = pneg %p217
        $region42: #{forward.2} parent=15 // pred_check_branch
          %641 = sbr.rel (%p639) target = $region44
        $region43: #{forward.2} parent=15 // pred_region
          %p642 = scmp.lt.s32.totalorder %s41, 1
          %s643 = scalar_select %p642, %s41, 1
          %s644 = smul.addr %s643, 16
          %s645 = smul.addr %s644, 8
          %s646 = scalar_lea.vmem %s6, %s645
        $region44: #{forward.2} parent=15 // pred_fallthru
          _
        // Predicated region
        $region45: #{forward.2} parent=15 // pred_check
          %p647 = pneg %p243
        $region46: #{forward.2} parent=15 // pred_check_branch
          %649 = sbr.rel (%p647) target = $region48
        $region47: #{forward.2} parent=15 // pred_region
          %s650 = sand.u32 %s41, 1
          %s651 = scalar_lea.sflag [#allocation5], %s650
          %s652 = sand.u32 %s233, 1
          %s653 = scalar_lea.vmem [#allocation4], %s652
          %s655 = ssub.s32 16, 16
          %656 = vsyncadd %s651, %s655
          %s657 = smul.addr %s41, 16
          %s658 = scalar_lea.hbm %s7, %s657
          %s660 = sshll.u32 %s653, 4
          %s661 = int_to_ptr.vmem [resolvable:$true] %s660
          %663 = dma.hbm_to_vmem [thread:$0]  %s658, 16, %s661, %s651
        $region48: #{forward.2} parent=15 // pred_fallthru
          _
        // Predicated region
        $region49: #{forward.2} parent=15 // pred_check
          %p664 = pneg %p269
        $region50: #{forward.2} parent=15 // pred_check_branch
          %666 = sbr.rel (%p664) target = $region52
        $region51: #{forward.2} parent=15 // pred_region
          %p667 = scmp.lt.s32.totalorder %s41, 1
          %s668 = scalar_select %p667, %s41, 1
          %s669 = smul.addr %s668, 16
          %s670 = smul.addr %s669, 8
          %s671 = scalar_lea.vmem %s8, %s670
        $region52: #{forward.2} parent=15 // pred_fallthru
          _
        // Predicated region
        $region53: #{forward.2} parent=15 // pred_check
          %p672 = pneg %p295
        $region54: #{forward.2} parent=15 // pred_check_branch
          %674 = sbr.rel (%p672) target = $region56
        $region55: #{forward.2} parent=15 // pred_region
          %s675 = sand.u32 %s41, 1
          %s676 = scalar_lea.sflag [#allocation5], %s675
          %s677 = sand.u32 %s285, 1
          %s678 = scalar_lea.vmem [#allocation6], %s677
          %s680 = ssub.s32 16, 16
          %681 = vsyncadd %s676, %s680
          %s682 = smul.addr %s41, 16
          %s683 = scalar_lea.hbm %s9, %s682
          %s685 = sshll.u32 %s678, 4
          %s686 = int_to_ptr.vmem [resolvable:$true] %s685
          %688 = dma.hbm_to_vmem [thread:$0]  %s683, 16, %s686, %s676
        $region56: #{forward.2} parent=15 // pred_fallthru
          _
        // Predicated region
        $region57: #{forward.2} parent=15 // pred_check
          %p689 = pneg %p321
        $region58: #{forward.2} parent=15 // pred_check_branch
          %691 = sbr.rel (%p689) target = $region60
        $region59: #{forward.2} parent=15 // pred_region
          %s692 = sand.u32 %s41, 1
          %s693 = scalar_lea.sflag [#allocation8], %s692
          %s694 = sand.u32 %s311, 1
          %s695 = smul.addr %s694, 128
          %s696 = scalar_lea.vmem [#allocation7], %s695
          %s698 = ssub.s32 2048, 2048
          %699 = vsyncadd %s693, %s698
          %s700 = smul.addr %s41, 16
          %s701 = smul.addr %s700, 128
          %s702 = scalar_lea.hbm %s10, %s701
          %s703 = sshll.u32 %s696, 4
          %s704 = int_to_ptr.vmem [resolvable:$true] %s703
          %709 = dma.hbm_to_vmem [thread:$0]  %s702, 2048, %s704, %s693, 128, 128, 8
        $region60: #{forward.2} parent=15 // pred_fallthru
          _
        // Predicated region
        $region61: #{forward.2} parent=15 // pred_check
          %p710 = pneg %p347
        $region62: #{forward.2} parent=15 // pred_check_branch
          %712 = sbr.rel (%p710) target = $region64
        $region63: #{forward.2} parent=15 // pred_region
          %s713 = sand.u32 %s41, 1
          %s714 = scalar_lea.sflag [#allocation8], %s713
          %s715 = sand.u32 %s337, 1
          %s716 = scalar_lea.vmem [#allocation9], %s715
          %s718 = ssub.s32 16, 16
          %719 = vsyncadd %s714, %s718
          %s720 = smul.addr %s41, 16
          %s721 = scalar_lea.hbm %s11, %s720
          %s723 = sshll.u32 %s716, 4
          %s724 = int_to_ptr.vmem [resolvable:$true] %s723
          %726 = dma.hbm_to_vmem [thread:$0]  %s721, 16, %s724, %s714
        $region64: #{forward.2} parent=15 // pred_fallthru
          _
        // Predicated region
        $region65: #{forward.2} parent=15 // pred_check
          %p727 = pneg %p373
        $region66: #{forward.2} parent=15 // pred_check_branch
          %729 = sbr.rel (%p727) target = $region68
        $region67: #{forward.2} parent=15 // pred_region
          %s730 = sand.u32 %s41, 1
          %s731 = scalar_lea.sflag [#allocation11], %s730
          %s732 = sand.u32 %s363, 1
          %s733 = smul.addr %s732, 1024
          %s734 = scalar_lea.vmem [#allocation10], %s733
          %s736 = ssub.s32 16384, 16384
          %737 = vsyncadd %s731, %s736
          %s738 = smul.addr %s41, 128
          %s739 = smul.addr %s738, 128
          %s740 = scalar_lea.hbm %s12, %s739
          %s741 = sshll.u32 %s734, 4
          %s742 = int_to_ptr.vmem [resolvable:$true] %s741
          %747 = dma.hbm_to_vmem [thread:$0]  %s740, 16384, %s742, %s731, 1024, 1024, 64
        $region68: #{forward.2} parent=15 // pred_fallthru
          _
        // Predicated region
        $region69: #{forward.2} parent=15 // pred_check
          %p748 = pneg %p399
        $region70: #{forward.2} parent=15 // pred_check_branch
          %750 = sbr.rel (%p748) target = $region72
        $region71: #{forward.2} parent=15 // pred_region
          %s751 = sand.u32 %s41, 1
          %s752 = scalar_lea.sflag [#allocation11], %s751
          %s753 = sand.u32 %s389, 1
          %s754 = smul.addr %s753, 8
          %s755 = scalar_lea.vmem [#allocation12], %s754
          %s757 = ssub.s32 128, 128
          %758 = vsyncadd %s752, %s757
          %s759 = smul.addr %s41, 8
          %s760 = smul.addr %s759, 16
          %s761 = scalar_lea.hbm %s13, %s760
          %s763 = sshll.u32 %s755, 4
          %s764 = int_to_ptr.vmem [resolvable:$true] %s763
          %766 = dma.hbm_to_vmem [thread:$0]  %s761, 128, %s764, %s752
        $region72: #{forward.2} parent=15 // pred_fallthru
          _
        // Predicated region
        $region73: #{forward.2} parent=15 // pred_check
          %p767 = pneg %p425
        $region74: #{forward.2} parent=15 // pred_check_branch
          %769 = sbr.rel (%p767) target = $region76
        $region75: #{forward.2} parent=15 // pred_region
          %s770 = sand.u32 %s41, 1
          %s771 = scalar_lea.sflag [#allocation14], %s770
          %s772 = sand.u32 %s415, 1
          %s773 = smul.addr %s772, 1024
          %s774 = scalar_lea.vmem [#allocation13], %s773
          %s776 = ssub.s32 16384, 16384
          %777 = vsyncadd %s771, %s776
          %s778 = smul.addr %s41, 128
          %s779 = smul.addr %s778, 128
          %s780 = scalar_lea.hbm %s14, %s779
          %s781 = sshll.u32 %s774, 4
          %s782 = int_to_ptr.vmem [resolvable:$true] %s781
          %787 = dma.hbm_to_vmem [thread:$0]  %s780, 16384, %s782, %s771, 128, 128, 8
        $region76: #{forward.2} parent=15 // pred_fallthru
          _
        // Predicated region
        $region77: #{forward.2} parent=15 // pred_check
          %p788 = pneg %p451
        $region78: #{forward.2} parent=15 // pred_check_branch
          %790 = sbr.rel (%p788) target = $region80
        $region79: #{forward.2} parent=15 // pred_region
          %s791 = sand.u32 %s41, 1
          %s792 = scalar_lea.sflag [#allocation14], %s791
          %s793 = sand.u32 %s441, 1
          %s794 = scalar_lea.vmem [#allocation15], %s793
          %s796 = ssub.s32 16, 16
          %797 = vsyncadd %s792, %s796
          %s798 = smul.addr %s41, 16
          %s799 = scalar_lea.hbm %s15, %s798
          %s801 = sshll.u32 %s794, 4
          %s802 = int_to_ptr.vmem [resolvable:$true] %s801
          %804 = dma.hbm_to_vmem [thread:$0]  %s799, 16, %s802, %s792
        $region80: #{forward.2} parent=15 // pred_fallthru
          _
      $region16: #{forward.2} parent=5 // pred_fallthru
        _
      %p805 = scmp.le.s32.totalorder 1, %s41
      %p806 = scmp.lt.s32.totalorder %s41, 3
      %p807 = pnand %p805, %p806
      %p808 = pneg %p807
      // Predicated region
      $region81: #{forward.2} parent=5 // pred_check
        _
      $region82: #{forward.2} parent=5 // pred_check_branch
        %810 = sbr.rel (%p807) target = $region84
      $region83: #{forward.2} parent=5 // pred_region
        %s811 = ssub.s32 %s41, 1
        %s812 = sand.u32 %s132, 1
        %s813 = scalar_lea.sflag [#allocation3], %s812
        %s814 = sand.u32 %s132, 1
        %s815 = smul.addr %s814, 2
        %s816 = scalar_lea.vmem [#allocation2], %s815
        // Predicated region
        $region85: #{forward.2} parent=83 // pred_check
          %p817 = pneg %p145
        $region86: #{forward.2} parent=83 // pred_check_branch
          %819 = sbr.rel (%p817) target = $region88
        $region87: #{forward.2} parent=83 // pred_region
          %820 = dma.done %s813, 32
        $region88: #{forward.2} parent=83 // pred_fallthru
          _
        %s821 = sand.u32 %s46, 1
        %s822 = scalar_lea.sflag [#allocation5], %s821
        %s823 = sand.u32 %s236, 1
        %s824 = scalar_lea.vmem [#allocation4], %s823
        // Predicated region
        $region89: #{forward.2} parent=83 // pred_check
          %p825 = pneg %p249
        $region90: #{forward.2} parent=83 // pred_check_branch
          %827 = sbr.rel (%p825) target = $region92
        $region91: #{forward.2} parent=83 // pred_region
          %828 = dma.done %s822, 16
        $region92: #{forward.2} parent=83 // pred_fallthru
          _
        %s829 = sand.u32 %s46, 1
        %s830 = scalar_lea.sflag [#allocation5], %s829
        %s831 = sand.u32 %s288, 1
        %s832 = scalar_lea.vmem [#allocation6], %s831
        // Predicated region
        $region93: #{forward.2} parent=83 // pred_check
          %p833 = pneg %p301
        $region94: #{forward.2} parent=83 // pred_check_branch
          %835 = sbr.rel (%p833) target = $region96
        $region95: #{forward.2} parent=83 // pred_region
          %836 = dma.done %s830, 16
        $region96: #{forward.2} parent=83 // pred_fallthru
          _
        %s837 = sand.u32 %s46, 1
        %s838 = scalar_lea.sflag [#allocation8], %s837
        %s839 = sand.u32 %s314, 1
        %s840 = smul.addr %s839, 128
        %s841 = scalar_lea.vmem [#allocation7], %s840
        // Predicated region
        $region97: #{forward.2} parent=83 // pred_check
          %p842 = pneg %p327
        $region98: #{forward.2} parent=83 // pred_check_branch
          %844 = sbr.rel (%p842) target = $region100
        $region99: #{forward.2} parent=83 // pred_region
          %845 = dma.done %s838, 2048
        $region100: #{forward.2} parent=83 // pred_fallthru
          _
        %s846 = sand.u32 %s46, 1
        %s847 = scalar_lea.sflag [#allocation8], %s846
        %s848 = sand.u32 %s340, 1
        %s849 = scalar_lea.vmem [#allocation9], %s848
        // Predicated region
        $region101: #{forward.2} parent=83 // pred_check
          %p850 = pneg %p353
        $region102: #{forward.2} parent=83 // pred_check_branch
          %852 = sbr.rel (%p850) target = $region104
        $region103: #{forward.2} parent=83 // pred_region
          %853 = dma.done %s847, 16
        $region104: #{forward.2} parent=83 // pred_fallthru
          _
        %s854 = sand.u32 %s46, 1
        %s855 = scalar_lea.sflag [#allocation11], %s854
        %s856 = sand.u32 %s366, 1
        %s857 = smul.addr %s856, 1024
        %s858 = scalar_lea.vmem [#allocation10], %s857
        // Predicated region
        $region105: #{forward.2} parent=83 // pred_check
          %p859 = pneg %p379
        $region106: #{forward.2} parent=83 // pred_check_branch
          %861 = sbr.rel (%p859) target = $region108
        $region107: #{forward.2} parent=83 // pred_region
          %862 = dma.done %s855, 16384
        $region108: #{forward.2} parent=83 // pred_fallthru
          _
        %s863 = sand.u32 %s46, 1
        %s864 = scalar_lea.sflag [#allocation11], %s863
        %s865 = sand.u32 %s392, 1
        %s866 = smul.addr %s865, 8
        %s867 = scalar_lea.vmem [#allocation12], %s866
        // Predicated region
        $region109: #{forward.2} parent=83 // pred_check
          %p868 = pneg %p405
        $region110: #{forward.2} parent=83 // pred_check_branch
          %870 = sbr.rel (%p868) target = $region112
        $region111: #{forward.2} parent=83 // pred_region
          %871 = dma.done %s864, 128
        $region112: #{forward.2} parent=83 // pred_fallthru
          _
        %s872 = sand.u32 %s46, 1
        %s873 = scalar_lea.sflag [#allocation14], %s872
        %s874 = sand.u32 %s418, 1
        %s875 = smul.addr %s874, 1024
        %s876 = scalar_lea.vmem [#allocation13], %s875
        // Predicated region
        $region113: #{forward.2} parent=83 // pred_check
          %p877 = pneg %p431
        $region114: #{forward.2} parent=83 // pred_check_branch
          %879 = sbr.rel (%p877) target = $region116
        $region115: #{forward.2} parent=83 // pred_region
          %880 = dma.done %s873, 16384
        $region116: #{forward.2} parent=83 // pred_fallthru
          _
        %s881 = sand.u32 %s46, 1
        %s882 = scalar_lea.sflag [#allocation14], %s881
        %s883 = sand.u32 %s444, 1
        %s884 = scalar_lea.vmem [#allocation15], %s883
        // Predicated region
        $region117: #{forward.2} parent=83 // pred_check
          %p885 = pneg %p457
        $region118: #{forward.2} parent=83 // pred_check_branch
          %887 = sbr.rel (%p885) target = $region120
        $region119: #{forward.2} parent=83 // pred_region
          %888 = dma.done %s882, 16
        $region120: #{forward.2} parent=83 // pred_fallthru
          _
        %p889 = scmp.lt.s32.totalorder %s46, 1
        %s890 = scalar_select %p889, %s46, 1
        %s891 = smul.addr %s890, 4
        %s892 = smul.addr %s891, 8
        %s893 = scalar_lea.vmem %s0, %s892
        %p894 = pneg %p67
        %p895 = pneg %p64
        %p896 = scmp.lt.s32.totalorder %s46, 1
        %s897 = scalar_select %p896, %s46, 1
        %s898 = smul.addr %s897, 4
        %s899 = smul.addr %s898, 8
        %s900 = scalar_lea.vmem %s1, %s899
        %p901 = pneg %p93
        %p902 = pneg %p90
        %p903 = scmp.lt.s32.totalorder %s46, 1
        %s904 = scalar_select %p903, %s46, 1
        %s905 = smul.addr %s904, 32
        %s906 = smul.addr %s905, 8
        %s907 = scalar_lea.vmem %s2, %s906
        %p908 = pneg %p119
        %p909 = pneg %p116
        %s910 = sand.u32 %s132, 1
        %s911 = scalar_lea.sflag [#allocation3], %s910
        %s912 = sand.u32 %s132, 1
        %s913 = smul.addr %s912, 2
        %s914 = scalar_lea.vmem [#allocation2], %s913
        %p915 = pneg %p145
        %p916 = pneg %p142
        %p917 = scmp.lt.s32.totalorder %s46, 1
        %s918 = scalar_select %p917, %s46, 1
        %s919 = smul.addr %s918, 16
        %s920 = smul.addr %s919, 8
        %s921 = scalar_lea.vmem %s4, %s920
        %p922 = pneg %p171
        %p923 = pneg %p168
        %p924 = scmp.lt.s32.totalorder %s46, 1
        %s925 = scalar_select %p924, %s46, 1
        %s926 = scalar_lea.vmem %s5, %s925
        %p927 = pneg %p197
        %p928 = pneg %p194
        %p929 = scmp.lt.s32.totalorder %s46, 1
        %s930 = scalar_select %p929, %s46, 1
        %s931 = smul.addr %s930, 16
        %s932 = smul.addr %s931, 8
        %s933 = scalar_lea.vmem %s6, %s932
        %p934 = pneg %p223
        %p935 = pneg %p220
        %s936 = sand.u32 %s46, 1
        %s937 = scalar_lea.sflag [#allocation5], %s936
        %s938 = sand.u32 %s236, 1
        %s939 = scalar_lea.vmem [#allocation4], %s938
        %p940 = pneg %p249
        %p941 = pneg %p246
        %p942 = scmp.lt.s32.totalorder %s46, 1
        %s943 = scalar_select %p942, %s46, 1
        %s944 = smul.addr %s943, 16
        %s945 = smul.addr %s944, 8
        %s946 = scalar_lea.vmem %s8, %s945
        %p947 = pneg %p275
        %p948 = pneg %p272
        %s949 = sand.u32 %s46, 1
        %s950 = scalar_lea.sflag [#allocation5], %s949
        %s951 = sand.u32 %s288, 1
        %s952 = scalar_lea.vmem [#allocation6], %s951
        %p953 = pneg %p301
        %p954 = pneg %p298
        %s955 = sand.u32 %s46, 1
        %s956 = scalar_lea.sflag [#allocation8], %s955
        %s957 = sand.u32 %s314, 1
        %s958 = smul.addr %s957, 128
        %s959 = scalar_lea.vmem [#allocation7], %s958
        %p960 = pneg %p327
        %p961 = pneg %p324
        %s962 = sand.u32 %s46, 1
        %s963 = scalar_lea.sflag [#allocation8], %s962
        %s964 = sand.u32 %s340, 1
        %s965 = scalar_lea.vmem [#allocation9], %s964
        %p966 = pneg %p353
        %p967 = pneg %p350
        %s968 = sand.u32 %s46, 1
        %s969 = scalar_lea.sflag [#allocation11], %s968
        %s970 = sand.u32 %s366, 1
        %s971 = smul.addr %s970, 1024
        %s972 = scalar_lea.vmem [#allocation10], %s971
        %p973 = pneg %p379
        %p974 = pneg %p376
        %s975 = sand.u32 %s46, 1
        %s976 = scalar_lea.sflag [#allocation11], %s975
        %s977 = sand.u32 %s392, 1
        %s978 = smul.addr %s977, 8
        %s979 = scalar_lea.vmem [#allocation12], %s978
        %p980 = pneg %p405
        %p981 = pneg %p402
        %s982 = sand.u32 %s46, 1
        %s983 = scalar_lea.sflag [#allocation14], %s982
        %s984 = sand.u32 %s418, 1
        %s985 = smul.addr %s984, 1024
        %s986 = scalar_lea.vmem [#allocation13], %s985
        %p987 = pneg %p431
        %p988 = pneg %p428
        %s989 = sand.u32 %s46, 1
        %s990 = scalar_lea.sflag [#allocation14], %s989
        %s991 = sand.u32 %s444, 1
        %s992 = scalar_lea.vmem [#allocation15], %s991
        %p993 = pneg %p457
        %p994 = pneg %p454
        %p995 = pneg %p483
        %p996 = pneg %p480
        %p997 = scmp.lt.s32.totalorder %s46, 1
        %s998 = scalar_select %p997, %s46, 1
        %s999 = smul.addr %s998, 4
        %s1000 = smul.addr %s999, 8
        %s1001 = scalar_lea.vmem %s16, %s1000
        %p1002 = pneg %p509
        %p1003 = pneg %p506
        %p1004 = scmp.lt.s32.totalorder %s46, 1
        %s1005 = scalar_select %p1004, %s46, 1
        %s1006 = smul.addr %s1005, 4
        %s1007 = smul.addr %s1006, 8
        %s1008 = scalar_lea.vmem %s17, %s1007
        %p1009 = pneg %p535
        %p1010 = pneg %p532
        %p1011 = scmp.lt.s32.totalorder %s46, 1
        %s1012 = scalar_select %p1011, %s46, 1
        %s1013 = smul.addr %s1012, 4
        %s1014 = smul.addr %s1013, 8
        %s1015 = scalar_lea.vmem %s18, %s1014
        %p1016 = pneg %p561
        %p1017 = pneg %p558
        %p1018 = scmp.lt.s32.totalorder %s46, 1
        %s1019 = scalar_select %p1018, %s46, 1
        %s1020 = smul.addr %s1019, 4
        %s1021 = smul.addr %s1020, 8
        %s1022 = scalar_lea.vmem %s19, %s1021
        %p1023 = scmp.lt.s32.totalorder %s46, 1
        %s1024 = scalar_select %p1023, %s46, 1
        %s1025 = smul.addr %s1024, 4
        %s1026 = smul.addr %s1025, 8
        %s1027 = scalar_lea.vmem %s0, %s1026
        %p1028 = scmp.lt.s32.totalorder %s46, 1
        %s1029 = scalar_select %p1028, %s46, 1
        %s1030 = smul.addr %s1029, 4
        %s1031 = smul.addr %s1030, 8
        %s1032 = scalar_lea.vmem %s1, %s1031
        %p1033 = scmp.lt.s32.totalorder %s46, 1
        %s1034 = scalar_select %p1033, %s46, 1
        %s1035 = smul.addr %s1034, 32
        %s1036 = smul.addr %s1035, 8
        %s1037 = scalar_lea.vmem %s2, %s1036
        %p1038 = scmp.lt.s32.totalorder %s46, 1
        %s1039 = scalar_select %p1038, %s46, 1
        %s1040 = smul.addr %s1039, 16
        %s1041 = smul.addr %s1040, 8
        %s1042 = scalar_lea.vmem %s4, %s1041
        %p1043 = scmp.lt.s32.totalorder %s46, 1
        %s1044 = scalar_select %p1043, %s46, 1
        %s1045 = scalar_lea.vmem %s5, %s1044
        %p1046 = scmp.lt.s32.totalorder %s46, 1
        %s1047 = scalar_select %p1046, %s46, 1
        %s1048 = smul.addr %s1047, 16
        %s1049 = smul.addr %s1048, 8
        %s1050 = scalar_lea.vmem %s6, %s1049
        %p1051 = scmp.lt.s32.totalorder %s46, 1
        %s1052 = scalar_select %p1051, %s46, 1
        %s1053 = smul.addr %s1052, 16
        %s1054 = smul.addr %s1053, 8
        %s1055 = scalar_lea.vmem %s8, %s1054
        %p1056 = scmp.lt.s32.totalorder %s46, 1
        %s1057 = scalar_select %p1056, %s46, 1
        %s1058 = smul.addr %s1057, 4
        %s1059 = smul.addr %s1058, 8
        %s1060 = scalar_lea.vmem %s16, %s1059
        %p1061 = scmp.lt.s32.totalorder %s46, 1
        %s1062 = scalar_select %p1061, %s46, 1
        %s1063 = smul.addr %s1062, 4
        %s1064 = smul.addr %s1063, 8
        %s1065 = scalar_lea.vmem %s17, %s1064
        %p1066 = scmp.lt.s32.totalorder %s46, 1
        %s1067 = scalar_select %p1066, %s46, 1
        %s1068 = smul.addr %s1067, 4
        %s1069 = smul.addr %s1068, 8
        %s1070 = scalar_lea.vmem %s18, %s1069
        %p1071 = scmp.lt.s32.totalorder %s46, 1
        %s1072 = scalar_select %p1071, %s46, 1
        %s1073 = smul.addr %s1072, 4
        %s1074 = smul.addr %s1073, 8
        %s1075 = scalar_lea.vmem %s19, %s1074
        %v1076 = vld [vmem:[%s1027] sm:$0xff]
        %v1077 = vld [vmem:[%s1027 + $0x8] sm:$0xff]
        %v1078 = vld [vmem:[%s1027 + $0x10] sm:$0xff]
        %v1079 = vld [vmem:[%s1027 + $0x18] sm:$0xff]
        %v1080 = vld [vmem:[%s1037] sm:$0xff]
        %v1081 = vld [vmem:[%s1037 + $0x8] sm:$0xff]
        %v1082 = vld [vmem:[%s1037 + $0x10] sm:$0xff]
        %v1083 = vld [vmem:[%s1037 + $0x18] sm:$0xff]
        %v1084 = vld [vmem:[%s1037 + $0x20] sm:$0xff]
        %v1085 = vld [vmem:[%s1037 + $0x28] sm:$0xff]
        %v1086 = vld [vmem:[%s1037 + $0x30] sm:$0xff]
        %v1087 = vld [vmem:[%s1037 + $0x38] sm:$0xff]
        %v1088 = vld [vmem:[%s1037 + $0x40] sm:$0xff]
        %v1089 = vld [vmem:[%s1037 + $0x48] sm:$0xff]
        %v1090 = vld [vmem:[%s1037 + $0x50] sm:$0xff]
        %v1091 = vld [vmem:[%s1037 + $0x58] sm:$0xff]
        %v1092 = vld [vmem:[%s1037 + $0x60] sm:$0xff]
        %v1093 = vld [vmem:[%s1037 + $0x68] sm:$0xff]
        %v1094 = vld [vmem:[%s1037 + $0x70] sm:$0xff]
        %v1095 = vld [vmem:[%s1037 + $0x78] sm:$0xff]
        %v1096 = vld [vmem:[%s816] sm:$0x1]
        %v1098 = vlaneseq
        %v1099 = vshrl.u32 %v1098, 7
        %v1100 = vsub.s32 0, %v1099
        %v1101 = vrot.slane %v1096, %v1100
        %1103 = vmatprep.subr.mxu0 0.0
        %1104 = vmatpush1.msra.mxu0 %v1080
        %1105 = vmatprep.subr.mxu0 0.0
        %1106 = vmatpush1.msra.mxu0 %v1081
        %1107 = vmatprep.subr.mxu0 0.0
        %1108 = vmatpush1.msra.mxu0 %v1082
        %1109 = vmatprep.subr.mxu0 0.0
        %1110 = vmatpush1.msra.mxu0 %v1083
        %1111 = vmatprep.subr.mxu0 0.0
        %1112 = vmatpush1.msra.mxu0 %v1084
        %1113 = vmatprep.subr.mxu0 0.0
        %1114 = vmatpush1.msra.mxu0 %v1085
        %1115 = vmatprep.subr.mxu0 0.0
        %1116 = vmatpush1.msra.mxu0 %v1086
        %1117 = vmatprep.subr.mxu0 0.0
        %1118 = vmatpush1.msra.mxu0 %v1087
        %1119 = vmatprep.subr.mxu0 0.0
        %1120 = vmatpush1.msra.mxu0 %v1088
        %1121 = vmatprep.subr.mxu0 0.0
        %1122 = vmatpush1.msra.mxu0 %v1089
        %1123 = vmatprep.subr.mxu0 0.0
        %1124 = vmatpush1.msra.mxu0 %v1090
        %1125 = vmatprep.subr.mxu0 0.0
        %1126 = vmatpush1.msra.mxu0 %v1091
        %1127 = vmatprep.subr.mxu0 0.0
        %1128 = vmatpush1.msra.mxu0 %v1092
        %1129 = vmatprep.subr.mxu0 0.0
        %1130 = vmatpush1.msra.mxu0 %v1093
        %1131 = vmatprep.subr.mxu0 0.0
        %1132 = vmatpush1.msra.mxu0 %v1094
        %1133 = vmatprep.subr.mxu0 0.0
        %1134 = vmatpush1.msra.mxu0 %v1095
        %1135 = vmatprep.subr.mxu0 0.0
        %1136 = vmatpush1.msra.mxu0 0.0
        %1137 = vmatprep.subr.mxu0 0.0
        %1138 = vmatpush1.msra.mxu0 0.0
        %1139 = vmatprep.subr.mxu0 0.0
        %1140 = vmatpush1.msra.mxu0 0.0
        %1141 = vmatprep.subr.mxu0 0.0
        %1142 = vmatpush1.msra.mxu0 0.0
        %1143 = vmatprep.subr.mxu0 0.0
        %1144 = vmatpush1.msra.mxu0 0.0
        %1145 = vmatprep.subr.mxu0 0.0
        %1146 = vmatpush1.msra.mxu0 0.0
        %1147 = vmatprep.subr.mxu0 0.0
        %1148 = vmatpush1.msra.mxu0 0.0
        %1149 = vmatprep.subr.mxu0 0.0
        %1150 = vmatpush1.msra.mxu0 0.0
        %1151 = vmatprep.subr.mxu0 0.0
        %1152 = vmatpush1.msra.mxu0 0.0
        %1153 = vmatprep.subr.mxu0 0.0
        %1154 = vmatpush1.msra.mxu0 0.0
        %1155 = vmatprep.subr.mxu0 0.0
        %1156 = vmatpush1.msra.mxu0 0.0
        %1157 = vmatprep.subr.mxu0 0.0
        %1158 = vmatpush1.msra.mxu0 0.0
        %1159 = vmatprep.subr.mxu0 0.0
        %1160 = vmatpush1.msra.mxu0 0.0
        %1161 = vmatprep.subr.mxu0 0.0
        %1162 = vmatpush1.msra.mxu0 0.0
        %1163 = vmatprep.subr.mxu0 0.0
        %1164 = vmatpush1.msra.mxu0 0.0
        %1165 = vmatprep.subr.mxu0 0.0
        %1166 = vmatpush1.msra.mxu0 0.0
        %1167 = vmatprep.mubr.f32.mxu0 0.0
        %1168 = vmatmul.mubr.f32.gmra.mrb[0].mxu0 %v1076
        %v1169 = vpop.f32.mrb[0].mxu0
        %v1170 = vadd.f32 %v1101, %v1169
        %v1171 = vpop.f32.mrb[0].mxu0
        %1172 = vmatprep.mubr.f32.mxu0 0.0
        %1173 = vmatmul.mubr.f32.gmra.mrb[0].mxu0 %v1077
        %v1174 = vpop.f32.mrb[0].mxu0
        %v1175 = vadd.f32 %v1101, %v1174
        %v1176 = vpop.f32.mrb[0].mxu0
        %1177 = vmatprep.mubr.f32.mxu0 0.0
        %1178 = vmatmul.mubr.f32.gmra.mrb[0].mxu0 %v1078
        %v1179 = vpop.f32.mrb[0].mxu0
        %v1180 = vadd.f32 %v1101, %v1179
        %v1181 = vpop.f32.mrb[0].mxu0
        %1182 = vmatprep.mubr.f32.mxu0 0.0
        %1183 = vmatmul.mubr.f32.gmra.mrb[0].mxu0 %v1079
        %v1184 = vpop.f32.mrb[0].mxu0
        %v1185 = vadd.f32 %v1101, %v1184
        %v1186 = vpop.f32.mrb[0].mxu0
        %1187 = vdwg.mxu0
        %vm1188 = vcmp.ge.f32.partialorder %v1170, 0.0
        %vm1189 = vcmp.ge.f32.partialorder %v1175, 0.0
        %vm1190 = vcmp.ge.f32.partialorder %v1180, 0.0
        %vm1191 = vcmp.ge.f32.partialorder %v1185, 0.0
        %v1192 = vmul.f32 %v1170, 0.01
        %v1193 = vmul.f32 %v1175, 0.01
        %v1194 = vmul.f32 %v1180, 0.01
        %v1195 = vmul.f32 %v1185, 0.01
        %v1196 = vsel %vm1188, %v1170, %v1192
        %v1197 = vsel %vm1189, %v1175, %v1193
        %v1198 = vsel %vm1190, %v1180, %v1194
        %v1199 = vsel %vm1191, %v1185, %v1195
        %s1200 = scalar_lea.vmem %s1037, 128
        %v1201 = vld [vmem:[%s1200] sm:$0xff]
        %v1202 = vld [vmem:[%s1200 + $0x8] sm:$0xff]
        %v1203 = vld [vmem:[%s1200 + $0x10] sm:$0xff]
        %v1204 = vld [vmem:[%s1200 + $0x18] sm:$0xff]
        %v1205 = vld [vmem:[%s1200 + $0x20] sm:$0xff]
        %v1206 = vld [vmem:[%s1200 + $0x28] sm:$0xff]
        %v1207 = vld [vmem:[%s1200 + $0x30] sm:$0xff]
        %v1208 = vld [vmem:[%s1200 + $0x38] sm:$0xff]
        %v1209 = vld [vmem:[%s1200 + $0x40] sm:$0xff]
        %v1210 = vld [vmem:[%s1200 + $0x48] sm:$0xff]
        %v1211 = vld [vmem:[%s1200 + $0x50] sm:$0xff]
        %v1212 = vld [vmem:[%s1200 + $0x58] sm:$0xff]
        %v1213 = vld [vmem:[%s1200 + $0x60] sm:$0xff]
        %v1214 = vld [vmem:[%s1200 + $0x68] sm:$0xff]
        %v1215 = vld [vmem:[%s1200 + $0x70] sm:$0xff]
        %v1216 = vld [vmem:[%s1200 + $0x78] sm:$0xff]
        %s1217 = scalar_lea.vmem %s816, 1 [#allocation2]
        %v1218 = vld [vmem:[%s1217] sm:$0x1]
        %v1220 = vlaneseq
        %v1221 = vshrl.u32 %v1220, 7
        %v1222 = vsub.s32 0, %v1221
        %v1223 = vrot.slane %v1218, %v1222
        %1225 = vmatprep.subr.mxu0 0.0
        %1226 = vmatpush1.msra.mxu0 %v1201
        %1227 = vmatprep.subr.mxu0 0.0
        %1228 = vmatpush1.msra.mxu0 %v1202
        %1229 = vmatprep.subr.mxu0 0.0
        %1230 = vmatpush1.msra.mxu0 %v1203
        %1231 = vmatprep.subr.mxu0 0.0
        %1232 = vmatpush1.msra.mxu0 %v1204
        %1233 = vmatprep.subr.mxu0 0.0
        %1234 = vmatpush1.msra.mxu0 %v1205
        %1235 = vmatprep.subr.mxu0 0.0
        %1236 = vmatpush1.msra.mxu0 %v1206
        %1237 = vmatprep.subr.mxu0 0.0
        %1238 = vmatpush1.msra.mxu0 %v1207
        %1239 = vmatprep.subr.mxu0 0.0
        %1240 = vmatpush1.msra.mxu0 %v1208
        %1241 = vmatprep.subr.mxu0 0.0
        %1242 = vmatpush1.msra.mxu0 %v1209
        %1243 = vmatprep.subr.mxu0 0.0
        %1244 = vmatpush1.msra.mxu0 %v1210
        %1245 = vmatprep.subr.mxu0 0.0
        %1246 = vmatpush1.msra.mxu0 %v1211
        %1247 = vmatprep.subr.mxu0 0.0
        %1248 = vmatpush1.msra.mxu0 %v1212
        %1249 = vmatprep.subr.mxu0 0.0
        %1250 = vmatpush1.msra.mxu0 %v1213
        %1251 = vmatprep.subr.mxu0 0.0
        %1252 = vmatpush1.msra.mxu0 %v1214
        %1253 = vmatprep.subr.mxu0 0.0
        %1254 = vmatpush1.msra.mxu0 %v1215
        %1255 = vmatprep.subr.mxu0 0.0
        %1256 = vmatpush1.msra.mxu0 %v1216
        %1257 = vmatprep.subr.mxu0 0.0
        %1258 = vmatpush1.msra.mxu0 0.0
        %1259 = vmatprep.subr.mxu0 0.0
        %1260 = vmatpush1.msra.mxu0 0.0
        %1261 = vmatprep.subr.mxu0 0.0
        %1262 = vmatpush1.msra.mxu0 0.0
        %1263 = vmatprep.subr.mxu0 0.0
        %1264 = vmatpush1.msra.mxu0 0.0
        %1265 = vmatprep.subr.mxu0 0.0
        %1266 = vmatpush1.msra.mxu0 0.0
        %1267 = vmatprep.subr.mxu0 0.0
        %1268 = vmatpush1.msra.mxu0 0.0
        %1269 = vmatprep.subr.mxu0 0.0
        %1270 = vmatpush1.msra.mxu0 0.0
        %1271 = vmatprep.subr.mxu0 0.0
        %1272 = vmatpush1.msra.mxu0 0.0
        %1273 = vmatprep.subr.mxu0 0.0
        %1274 = vmatpush1.msra.mxu0 0.0
        %1275 = vmatprep.subr.mxu0 0.0
        %1276 = vmatpush1.msra.mxu0 0.0
        %1277 = vmatprep.subr.mxu0 0.0
        %1278 = vmatpush1.msra.mxu0 0.0
        %1279 = vmatprep.subr.mxu0 0.0
        %1280 = vmatpush1.msra.mxu0 0.0
        %1281 = vmatprep.subr.mxu0 0.0
        %1282 = vmatpush1.msra.mxu0 0.0
        %1283 = vmatprep.subr.mxu0 0.0
        %1284 = vmatpush1.msra.mxu0 0.0
        %1285 = vmatprep.subr.mxu0 0.0
        %1286 = vmatpush1.msra.mxu0 0.0
        %1287 = vmatprep.subr.mxu0 0.0
        %1288 = vmatpush1.msra.mxu0 0.0
        %1289 = vmatprep.mubr.f32.mxu0 0.0
        %1290 = vmatmul.mubr.f32.gmra.mrb[0].mxu0 %v1196
        %v1291 = vpop.f32.mrb[0].mxu0
        %v1292 = vadd.f32 %v1223, %v1291
        %v1293 = vpop.f32.mrb[0].mxu0
        %1294 = vmatprep.mubr.f32.mxu0 0.0
        %1295 = vmatmul.mubr.f32.gmra.mrb[0].mxu0 %v1197
        %v1296 = vpop.f32.mrb[0].mxu0
        %v1297 = vadd.f32 %v1223, %v1296
        %v1298 = vpop.f32.mrb[0].mxu0
        %1299 = vmatprep.mubr.f32.mxu0 0.0
        %1300 = vmatmul.mubr.f32.gmra.mrb[0].mxu0 %v1198
        %v1301 = vpop.f32.mrb[0].mxu0
        %v1302 = vadd.f32 %v1223, %v1301
        %v1303 = vpop.f32.mrb[0].mxu0
        %1304 = vmatprep.mubr.f32.mxu0 0.0
        %1305 = vmatmul.mubr.f32.gmra.mrb[0].mxu0 %v1199
        %v1306 = vpop.f32.mrb[0].mxu0
        %v1307 = vadd.f32 %v1223, %v1306
        %v1308 = vpop.f32.mrb[0].mxu0
        %1309 = vdwg.mxu0
        %vm1310 = vcmp.ge.f32.partialorder %v1292, 0.0
        %vm1311 = vcmp.ge.f32.partialorder %v1297, 0.0
        %vm1312 = vcmp.ge.f32.partialorder %v1302, 0.0
        %vm1313 = vcmp.ge.f32.partialorder %v1307, 0.0
        %v1314 = vmul.f32 %v1292, 0.01
        %v1315 = vmul.f32 %v1297, 0.01
        %v1316 = vmul.f32 %v1302, 0.01
        %v1317 = vmul.f32 %v1307, 0.01
        %v1318 = vsel %vm1310, %v1292, %v1314
        %v1319 = vsel %vm1311, %v1297, %v1315
        %v1320 = vsel %vm1312, %v1302, %v1316
        %v1321 = vsel %vm1313, %v1307, %v1317
        %v1322 = vld [vmem:[%s1042] sm:$0xff]
        %v1323 = vld [vmem:[%s1042 + $0x8] sm:$0xff]
        %v1324 = vld [vmem:[%s1042 + $0x10] sm:$0xff]
        %v1325 = vld [vmem:[%s1042 + $0x18] sm:$0xff]
        %v1326 = vld [vmem:[%s1042 + $0x20] sm:$0xff]
        %v1327 = vld [vmem:[%s1042 + $0x28] sm:$0xff]
        %v1328 = vld [vmem:[%s1042 + $0x30] sm:$0xff]
        %v1329 = vld [vmem:[%s1042 + $0x38] sm:$0xff]
        %v1330 = vld [vmem:[%s1042 + $0x40] sm:$0xff]
        %v1331 = vld [vmem:[%s1042 + $0x48] sm:$0xff]
        %v1332 = vld [vmem:[%s1042 + $0x50] sm:$0xff]
        %v1333 = vld [vmem:[%s1042 + $0x58] sm:$0xff]
        %v1334 = vld [vmem:[%s1042 + $0x60] sm:$0xff]
        %v1335 = vld [vmem:[%s1042 + $0x68] sm:$0xff]
        %v1336 = vld [vmem:[%s1042 + $0x70] sm:$0xff]
        %v1337 = vld [vmem:[%s1042 + $0x78] sm:$0xff]
        %v1338 = vld [vmem:[%s1045] sm:$0x1]
        %v1340 = vlaneseq
        %v1341 = vshrl.u32 %v1340, 7
        %v1342 = vsub.s32 0, %v1341
        %v1343 = vrot.slane %v1338, %v1342
        %1345 = vmatprep.subr.mxu0 0.0
        %1346 = vmatpush1.msra.mxu0 %v1322
        %1347 = vmatprep.subr.mxu0 0.0
        %1348 = vmatpush1.msra.mxu0 %v1323
        %1349 = vmatprep.subr.mxu0 0.0
        %1350 = vmatpush1.msra.mxu0 %v1324
        %1351 = vmatprep.subr.mxu0 0.0
        %1352 = vmatpush1.msra.mxu0 %v1325
        %1353 = vmatprep.subr.mxu0 0.0
        %1354 = vmatpush1.msra.mxu0 %v1326
        %1355 = vmatprep.subr.mxu0 0.0
        %1356 = vmatpush1.msra.mxu0 %v1327
        %1357 = vmatprep.subr.mxu0 0.0
        %1358 = vmatpush1.msra.mxu0 %v1328
        %1359 = vmatprep.subr.mxu0 0.0
        %1360 = vmatpush1.msra.mxu0 %v1329
        %1361 = vmatprep.subr.mxu0 0.0
        %1362 = vmatpush1.msra.mxu0 %v1330
        %1363 = vmatprep.subr.mxu0 0.0
        %1364 = vmatpush1.msra.mxu0 %v1331
        %1365 = vmatprep.subr.mxu0 0.0
        %1366 = vmatpush1.msra.mxu0 %v1332
        %1367 = vmatprep.subr.mxu0 0.0
        %1368 = vmatpush1.msra.mxu0 %v1333
        %1369 = vmatprep.subr.mxu0 0.0
        %1370 = vmatpush1.msra.mxu0 %v1334
        %1371 = vmatprep.subr.mxu0 0.0
        %1372 = vmatpush1.msra.mxu0 %v1335
        %1373 = vmatprep.subr.mxu0 0.0
        %1374 = vmatpush1.msra.mxu0 %v1336
        %1375 = vmatprep.subr.mxu0 0.0
        %1376 = vmatpush1.msra.mxu0 %v1337
        %1377 = vmatprep.subr.mxu0 0.0
        %1378 = vmatpush1.msra.mxu0 0.0
        %1379 = vmatprep.subr.mxu0 0.0
        %1380 = vmatpush1.msra.mxu0 0.0
        %1381 = vmatprep.subr.mxu0 0.0
        %1382 = vmatpush1.msra.mxu0 0.0
        %1383 = vmatprep.subr.mxu0 0.0
        %1384 = vmatpush1.msra.mxu0 0.0
        %1385 = vmatprep.subr.mxu0 0.0
        %1386 = vmatpush1.msra.mxu0 0.0
        %1387 = vmatprep.subr.mxu0 0.0
        %1388 = vmatpush1.msra.mxu0 0.0
        %1389 = vmatprep.subr.mxu0 0.0
        %1390 = vmatpush1.msra.mxu0 0.0
        %1391 = vmatprep.subr.mxu0 0.0
        %1392 = vmatpush1.msra.mxu0 0.0
        %1393 = vmatprep.subr.mxu0 0.0
        %1394 = vmatpush1.msra.mxu0 0.0
        %1395 = vmatprep.subr.mxu0 0.0
        %1396 = vmatpush1.msra.mxu0 0.0
        %1397 = vmatprep.subr.mxu0 0.0
        %1398 = vmatpush1.msra.mxu0 0.0
        %1399 = vmatprep.subr.mxu0 0.0
        %1400 = vmatpush1.msra.mxu0 0.0
        %1401 = vmatprep.subr.mxu0 0.0
        %1402 = vmatpush1.msra.mxu0 0.0
        %1403 = vmatprep.subr.mxu0 0.0
        %1404 = vmatpush1.msra.mxu0 0.0
        %1405 = vmatprep.subr.mxu0 0.0
        %1406 = vmatpush1.msra.mxu0 0.0
        %1407 = vmatprep.subr.mxu0 0.0
        %1408 = vmatpush1.msra.mxu0 0.0
        %1409 = vmatprep.mubr.f32.mxu0 0.0
        %1410 = vmatmul.mubr.f32.gmra.mrb[0].mxu0 %v1318
        %v1411 = vpop.f32.mrb[0].mxu0
        %v1412 = vadd.f32 %v1343, %v1411
        %v1413 = vpop.f32.mrb[0].mxu0
        %1414 = vmatprep.mubr.f32.mxu0 0.0
        %1415 = vmatmul.mubr.f32.gmra.mrb[0].mxu0 %v1319
        %v1416 = vpop.f32.mrb[0].mxu0
        %v1417 = vadd.f32 %v1343, %v1416
        %v1418 = vpop.f32.mrb[0].mxu0
        %1419 = vmatprep.mubr.f32.mxu0 0.0
        %1420 = vmatmul.mubr.f32.gmra.mrb[0].mxu0 %v1320
        %v1421 = vpop.f32.mrb[0].mxu0
        %v1422 = vadd.f32 %v1343, %v1421
        %v1423 = vpop.f32.mrb[0].mxu0
        %1424 = vmatprep.mubr.f32.mxu0 0.0
        %1425 = vmatmul.mubr.f32.gmra.mrb[0].mxu0 %v1321
        %v1426 = vpop.f32.mrb[0].mxu0
        %v1427 = vadd.f32 %v1343, %v1426
        %v1428 = vpop.f32.mrb[0].mxu0
        %1429 = vdwg.mxu0
        %v1430 = vld [vmem:[%s1050] sm:$0xff]
        %v1431 = vld [vmem:[%s1050 + $0x8] sm:$0xff]
        %v1432 = vld [vmem:[%s1050 + $0x10] sm:$0xff]
        %v1433 = vld [vmem:[%s1050 + $0x18] sm:$0xff]
        %v1434 = vld [vmem:[%s1050 + $0x20] sm:$0xff]
        %v1435 = vld [vmem:[%s1050 + $0x28] sm:$0xff]
        %v1436 = vld [vmem:[%s1050 + $0x30] sm:$0xff]
        %v1437 = vld [vmem:[%s1050 + $0x38] sm:$0xff]
        %v1438 = vld [vmem:[%s1050 + $0x40] sm:$0xff]
        %v1439 = vld [vmem:[%s1050 + $0x48] sm:$0xff]
        %v1440 = vld [vmem:[%s1050 + $0x50] sm:$0xff]
        %v1441 = vld [vmem:[%s1050 + $0x58] sm:$0xff]
        %v1442 = vld [vmem:[%s1050 + $0x60] sm:$0xff]
        %v1443 = vld [vmem:[%s1050 + $0x68] sm:$0xff]
        %v1444 = vld [vmem:[%s1050 + $0x70] sm:$0xff]
        %v1445 = vld [vmem:[%s1050 + $0x78] sm:$0xff]
        %v1446 = vld [vmem:[%s824] sm:$0x1]
        %v1448 = vlaneseq
        %v1449 = vshrl.u32 %v1448, 7
        %v1450 = vsub.s32 0, %v1449
        %v1451 = vrot.slane %v1446, %v1450
        %1453 = vmatprep.subr.mxu0 0.0
        %1454 = vmatpush1.msra.mxu0 %v1430
        %1455 = vmatprep.subr.mxu0 0.0
        %1456 = vmatpush1.msra.mxu0 %v1431
        %1457 = vmatprep.subr.mxu0 0.0
        %1458 = vmatpush1.msra.mxu0 %v1432
        %1459 = vmatprep.subr.mxu0 0.0
        %1460 = vmatpush1.msra.mxu0 %v1433
        %1461 = vmatprep.subr.mxu0 0.0
        %1462 = vmatpush1.msra.mxu0 %v1434
        %1463 = vmatprep.subr.mxu0 0.0
        %1464 = vmatpush1.msra.mxu0 %v1435
        %1465 = vmatprep.subr.mxu0 0.0
        %1466 = vmatpush1.msra.mxu0 %v1436
        %1467 = vmatprep.subr.mxu0 0.0
        %1468 = vmatpush1.msra.mxu0 %v1437
        %1469 = vmatprep.subr.mxu0 0.0
        %1470 = vmatpush1.msra.mxu0 %v1438
        %1471 = vmatprep.subr.mxu0 0.0
        %1472 = vmatpush1.msra.mxu0 %v1439
        %1473 = vmatprep.subr.mxu0 0.0
        %1474 = vmatpush1.msra.mxu0 %v1440
        %1475 = vmatprep.subr.mxu0 0.0
        %1476 = vmatpush1.msra.mxu0 %v1441
        %1477 = vmatprep.subr.mxu0 0.0
        %1478 = vmatpush1.msra.mxu0 %v1442
        %1479 = vmatprep.subr.mxu0 0.0
        %1480 = vmatpush1.msra.mxu0 %v1443
        %1481 = vmatprep.subr.mxu0 0.0
        %1482 = vmatpush1.msra.mxu0 %v1444
        %1483 = vmatprep.subr.mxu0 0.0
        %1484 = vmatpush1.msra.mxu0 %v1445
        %1485 = vmatprep.subr.mxu0 0.0
        %1486 = vmatpush1.msra.mxu0 0.0
        %1487 = vmatprep.subr.mxu0 0.0
        %1488 = vmatpush1.msra.mxu0 0.0
        %1489 = vmatprep.subr.mxu0 0.0
        %1490 = vmatpush1.msra.mxu0 0.0
        %1491 = vmatprep.subr.mxu0 0.0
        %1492 = vmatpush1.msra.mxu0 0.0
        %1493 = vmatprep.subr.mxu0 0.0
        %1494 = vmatpush1.msra.mxu0 0.0
        %1495 = vmatprep.subr.mxu0 0.0
        %1496 = vmatpush1.msra.mxu0 0.0
        %1497 = vmatprep.subr.mxu0 0.0
        %1498 = vmatpush1.msra.mxu0 0.0
        %1499 = vmatprep.subr.mxu0 0.0
        %1500 = vmatpush1.msra.mxu0 0.0
        %1501 = vmatprep.subr.mxu0 0.0
        %1502 = vmatpush1.msra.mxu0 0.0
        %1503 = vmatprep.subr.mxu0 0.0
        %1504 = vmatpush1.msra.mxu0 0.0
        %1505 = vmatprep.subr.mxu0 0.0
        %1506 = vmatpush1.msra.mxu0 0.0
        %1507 = vmatprep.subr.mxu0 0.0
        %1508 = vmatpush1.msra.mxu0 0.0
        %1509 = vmatprep.subr.mxu0 0.0
        %1510 = vmatpush1.msra.mxu0 0.0
        %1511 = vmatprep.subr.mxu0 0.0
        %1512 = vmatpush1.msra.mxu0 0.0
        %1513 = vmatprep.subr.mxu0 0.0
        %1514 = vmatpush1.msra.mxu0 0.0
        %1515 = vmatprep.subr.mxu0 0.0
        %1516 = vmatpush1.msra.mxu0 0.0
        %1517 = vmatprep.mubr.f32.mxu0 0.0
        %1518 = vmatmul.mubr.f32.gmra.mrb[0].mxu0 %v1318
        %v1519 = vpop.f32.mrb[0].mxu0
        %v1520 = vadd.f32 %v1451, %v1519
        %v1521 = vpop.f32.mrb[0].mxu0
        %1522 = vmatprep.mubr.f32.mxu0 0.0
        %1523 = vmatmul.mubr.f32.gmra.mrb[0].mxu0 %v1319
        %v1524 = vpop.f32.mrb[0].mxu0
        %v1525 = vadd.f32 %v1451, %v1524
        %v1526 = vpop.f32.mrb[0].mxu0
        %1527 = vmatprep.mubr.f32.mxu0 0.0
        %1528 = vmatmul.mubr.f32.gmra.mrb[0].mxu0 %v1320
        %v1529 = vpop.f32.mrb[0].mxu0
        %v1530 = vadd.f32 %v1451, %v1529
        %v1531 = vpop.f32.mrb[0].mxu0
        %1532 = vmatprep.mubr.f32.mxu0 0.0
        %1533 = vmatmul.mubr.f32.gmra.mrb[0].mxu0 %v1321
        %v1534 = vpop.f32.mrb[0].mxu0
        %v1535 = vadd.f32 %v1451, %v1534
        %v1536 = vpop.f32.mrb[0].mxu0
        %1537 = vdwg.mxu0
        %v1538 = vld [vmem:[%s1032] sm:$0xff]
        %v1539 = vld [vmem:[%s1032 + $0x8] sm:$0xff]
        %v1540 = vld [vmem:[%s1032 + $0x10] sm:$0xff]
        %v1541 = vld [vmem:[%s1032 + $0x18] sm:$0xff]
        %v1542 = vmul.f32 %v1520, 0.5
        %v1543 = vmul.f32 %v1525, 0.5
        %v1544 = vmul.f32 %v1530, 0.5
        %v1545 = vmul.f32 %v1535, 0.5
        %v1546 = vmul.f32 %v1542, 1.442695
        %v1547 = vpow.pop %v1546
        %v1548 = vmul.f32 %v1543, 1.442695
        %v1549 = vpow.pop %v1548
        %v1550 = vmul.f32 %v1544, 1.442695
        %v1551 = vpow.pop %v1550
        %v1552 = vmul.f32 %v1545, 1.442695
        %v1553 = vpow.pop %v1552
        %v1554 = vmul.f32 %v1538, %v1547
        %v1555 = vmul.f32 %v1539, %v1549
        %v1556 = vmul.f32 %v1540, %v1551
        %v1557 = vmul.f32 %v1541, %v1553
        %v1558 = vadd.f32 %v1554, %v1412
        %v1559 = vadd.f32 %v1555, %v1417
        %v1560 = vadd.f32 %v1556, %v1422
        %v1561 = vadd.f32 %v1557, %v1427
        %v1562 = vld [vmem:[%s1055] sm:$0xff]
        %v1563 = vld [vmem:[%s1055 + $0x8] sm:$0xff]
        %v1564 = vld [vmem:[%s1055 + $0x10] sm:$0xff]
        %v1565 = vld [vmem:[%s1055 + $0x18] sm:$0xff]
        %v1566 = vld [vmem:[%s1055 + $0x20] sm:$0xff]
        %v1567 = vld [vmem:[%s1055 + $0x28] sm:$0xff]
        %v1568 = vld [vmem:[%s1055 + $0x30] sm:$0xff]
        %v1569 = vld [vmem:[%s1055 + $0x38] sm:$0xff]
        %v1570 = vld [vmem:[%s1055 + $0x40] sm:$0xff]
        %v1571 = vld [vmem:[%s1055 + $0x48] sm:$0xff]
        %v1572 = vld [vmem:[%s1055 + $0x50] sm:$0xff]
        %v1573 = vld [vmem:[%s1055 + $0x58] sm:$0xff]
        %v1574 = vld [vmem:[%s1055 + $0x60] sm:$0xff]
        %v1575 = vld [vmem:[%s1055 + $0x68] sm:$0xff]
        %v1576 = vld [vmem:[%s1055 + $0x70] sm:$0xff]
        %v1577 = vld [vmem:[%s1055 + $0x78] sm:$0xff]
        %v1578 = vld [vmem:[%s832] sm:$0x1]
        %v1580 = vlaneseq
        %v1581 = vshrl.u32 %v1580, 7
        %v1582 = vsub.s32 0, %v1581
        %v1583 = vrot.slane %v1578, %v1582
        %1585 = vmatprep.subr.mxu0 0.0
        %1586 = vmatpush1.msra.mxu0 %v1562
        %1587 = vmatprep.subr.mxu0 0.0
        %1588 = vmatpush1.msra.mxu0 %v1563
        %1589 = vmatprep.subr.mxu0 0.0
        %1590 = vmatpush1.msra.mxu0 %v1564
        %1591 = vmatprep.subr.mxu0 0.0
        %1592 = vmatpush1.msra.mxu0 %v1565
        %1593 = vmatprep.subr.mxu0 0.0
        %1594 = vmatpush1.msra.mxu0 %v1566
        %1595 = vmatprep.subr.mxu0 0.0
        %1596 = vmatpush1.msra.mxu0 %v1567
        %1597 = vmatprep.subr.mxu0 0.0
        %1598 = vmatpush1.msra.mxu0 %v1568
        %1599 = vmatprep.subr.mxu0 0.0
        %1600 = vmatpush1.msra.mxu0 %v1569
        %1601 = vmatprep.subr.mxu0 0.0
        %1602 = vmatpush1.msra.mxu0 %v1570
        %1603 = vmatprep.subr.mxu0 0.0
        %1604 = vmatpush1.msra.mxu0 %v1571
        %1605 = vmatprep.subr.mxu0 0.0
        %1606 = vmatpush1.msra.mxu0 %v1572
        %1607 = vmatprep.subr.mxu0 0.0
        %1608 = vmatpush1.msra.mxu0 %v1573
        %1609 = vmatprep.subr.mxu0 0.0
        %1610 = vmatpush1.msra.mxu0 %v1574
        %1611 = vmatprep.subr.mxu0 0.0
        %1612 = vmatpush1.msra.mxu0 %v1575
        %1613 = vmatprep.subr.mxu0 0.0
        %1614 = vmatpush1.msra.mxu0 %v1576
        %1615 = vmatprep.subr.mxu0 0.0
        %1616 = vmatpush1.msra.mxu0 %v1577
        %1617 = vmatprep.subr.mxu0 0.0
        %1618 = vmatpush1.msra.mxu0 0.0
        %1619 = vmatprep.subr.mxu0 0.0
        %1620 = vmatpush1.msra.mxu0 0.0
        %1621 = vmatprep.subr.mxu0 0.0
        %1622 = vmatpush1.msra.mxu0 0.0
        %1623 = vmatprep.subr.mxu0 0.0
        %1624 = vmatpush1.msra.mxu0 0.0
        %1625 = vmatprep.subr.mxu0 0.0
        %1626 = vmatpush1.msra.mxu0 0.0
        %1627 = vmatprep.subr.mxu0 0.0
        %1628 = vmatpush1.msra.mxu0 0.0
        %1629 = vmatprep.subr.mxu0 0.0
        %1630 = vmatpush1.msra.mxu0 0.0
        %1631 = vmatprep.subr.mxu0 0.0
        %1632 = vmatpush1.msra.mxu0 0.0
        %1633 = vmatprep.subr.mxu0 0.0
        %1634 = vmatpush1.msra.mxu0 0.0
        %1635 = vmatprep.subr.mxu0 0.0
        %1636 = vmatpush1.msra.mxu0 0.0
        %1637 = vmatprep.subr.mxu0 0.0
        %1638 = vmatpush1.msra.mxu0 0.0
        %1639 = vmatprep.subr.mxu0 0.0
        %1640 = vmatpush1.msra.mxu0 0.0
        %1641 = vmatprep.subr.mxu0 0.0
        %1642 = vmatpush1.msra.mxu0 0.0
        %1643 = vmatprep.subr.mxu0 0.0
        %1644 = vmatpush1.msra.mxu0 0.0
        %1645 = vmatprep.subr.mxu0 0.0
        %1646 = vmatpush1.msra.mxu0 0.0
        %1647 = vmatprep.subr.mxu0 0.0
        %1648 = vmatpush1.msra.mxu0 0.0
        %1649 = vmatprep.mubr.f32.mxu0 0.0
        %1650 = vmatmul.mubr.f32.gmra.mrb[0].mxu0 %v1558
        %v1651 = vpop.f32.mrb[0].mxu0
        %v1652 = vadd.f32 %v1583, %v1651
        %v1653 = vpop.f32.mrb[0].mxu0
        %1654 = vmatprep.mubr.f32.mxu0 0.0
        %1655 = vmatmul.mubr.f32.gmra.mrb[0].mxu0 %v1559
        %v1656 = vpop.f32.mrb[0].mxu0
        %v1657 = vadd.f32 %v1583, %v1656
        %v1658 = vpop.f32.mrb[0].mxu0
        %1659 = vmatprep.mubr.f32.mxu0 0.0
        %1660 = vmatmul.mubr.f32.gmra.mrb[0].mxu0 %v1560
        %v1661 = vpop.f32.mrb[0].mxu0
        %v1662 = vadd.f32 %v1583, %v1661
        %v1663 = vpop.f32.mrb[0].mxu0
        %1664 = vmatprep.mubr.f32.mxu0 0.0
        %1665 = vmatmul.mubr.f32.gmra.mrb[0].mxu0 %v1561
        %v1666 = vpop.f32.mrb[0].mxu0
        %v1667 = vadd.f32 %v1583, %v1666
        %v1668 = vpop.f32.mrb[0].mxu0
        %1669 = vdwg.mxu0
        %v1670 = vld [vmem:[%s841] sm:$0xff]
        %v1671 = vld [vmem:[%s841 + $0x8] sm:$0xff]
        %v1672 = vld [vmem:[%s841 + $0x10] sm:$0xff]
        %v1673 = vld [vmem:[%s841 + $0x18] sm:$0xff]
        %v1674 = vld [vmem:[%s841 + $0x20] sm:$0xff]
        %v1675 = vld [vmem:[%s841 + $0x28] sm:$0xff]
        %v1676 = vld [vmem:[%s841 + $0x30] sm:$0xff]
        %v1677 = vld [vmem:[%s841 + $0x38] sm:$0xff]
        %v1678 = vld [vmem:[%s841 + $0x40] sm:$0xff]
        %v1679 = vld [vmem:[%s841 + $0x48] sm:$0xff]
        %v1680 = vld [vmem:[%s841 + $0x50] sm:$0xff]
        %v1681 = vld [vmem:[%s841 + $0x58] sm:$0xff]
        %v1682 = vld [vmem:[%s841 + $0x60] sm:$0xff]
        %v1683 = vld [vmem:[%s841 + $0x68] sm:$0xff]
        %v1684 = vld [vmem:[%s841 + $0x70] sm:$0xff]
        %v1685 = vld [vmem:[%s841 + $0x78] sm:$0xff]
        %v1686 = vld [vmem:[%s849] sm:$0x1]
        %v1688 = vlaneseq
        %v1689 = vshrl.u32 %v1688, 7
        %v1690 = vsub.s32 0, %v1689
        %v1691 = vrot.slane %v1686, %v1690
        %1693 = vmatprep.subr.mxu0 0.0
        %1694 = vmatpush1.msra.mxu0 %v1670
        %1695 = vmatprep.subr.mxu0 0.0
        %1696 = vmatpush1.msra.mxu0 %v1671
        %1697 = vmatprep.subr.mxu0 0.0
        %1698 = vmatpush1.msra.mxu0 %v1672
        %1699 = vmatprep.subr.mxu0 0.0
        %1700 = vmatpush1.msra.mxu0 %v1673
        %1701 = vmatprep.subr.mxu0 0.0
        %1702 = vmatpush1.msra.mxu0 %v1674
        %1703 = vmatprep.subr.mxu0 0.0
        %1704 = vmatpush1.msra.mxu0 %v1675
        %1705 = vmatprep.subr.mxu0 0.0
        %1706 = vmatpush1.msra.mxu0 %v1676
        %1707 = vmatprep.subr.mxu0 0.0
        %1708 = vmatpush1.msra.mxu0 %v1677
        %1709 = vmatprep.subr.mxu0 0.0
        %1710 = vmatpush1.msra.mxu0 %v1678
        %1711 = vmatprep.subr.mxu0 0.0
        %1712 = vmatpush1.msra.mxu0 %v1679
        %1713 = vmatprep.subr.mxu0 0.0
        %1714 = vmatpush1.msra.mxu0 %v1680
        %1715 = vmatprep.subr.mxu0 0.0
        %1716 = vmatpush1.msra.mxu0 %v1681
        %1717 = vmatprep.subr.mxu0 0.0
        %1718 = vmatpush1.msra.mxu0 %v1682
        %1719 = vmatprep.subr.mxu0 0.0
        %1720 = vmatpush1.msra.mxu0 %v1683
        %1721 = vmatprep.subr.mxu0 0.0
        %1722 = vmatpush1.msra.mxu0 %v1684
        %1723 = vmatprep.subr.mxu0 0.0
        %1724 = vmatpush1.msra.mxu0 %v1685
        %1725 = vmatprep.subr.mxu0 0.0
        %1726 = vmatpush1.msra.mxu0 0.0
        %1727 = vmatprep.subr.mxu0 0.0
        %1728 = vmatpush1.msra.mxu0 0.0
        %1729 = vmatprep.subr.mxu0 0.0
        %1730 = vmatpush1.msra.mxu0 0.0
        %1731 = vmatprep.subr.mxu0 0.0
        %1732 = vmatpush1.msra.mxu0 0.0
        %1733 = vmatprep.subr.mxu0 0.0
        %1734 = vmatpush1.msra.mxu0 0.0
        %1735 = vmatprep.subr.mxu0 0.0
        %1736 = vmatpush1.msra.mxu0 0.0
        %1737 = vmatprep.subr.mxu0 0.0
        %1738 = vmatpush1.msra.mxu0 0.0
        %1739 = vmatprep.subr.mxu0 0.0
        %1740 = vmatpush1.msra.mxu0 0.0
        %1741 = vmatprep.subr.mxu0 0.0
        %1742 = vmatpush1.msra.mxu0 0.0
        %1743 = vmatprep.subr.mxu0 0.0
        %1744 = vmatpush1.msra.mxu0 0.0
        %1745 = vmatprep.subr.mxu0 0.0
        %1746 = vmatpush1.msra.mxu0 0.0
        %1747 = vmatprep.subr.mxu0 0.0
        %1748 = vmatpush1.msra.mxu0 0.0
        %1749 = vmatprep.subr.mxu0 0.0
        %1750 = vmatpush1.msra.mxu0 0.0
        %1751 = vmatprep.subr.mxu0 0.0
        %1752 = vmatpush1.msra.mxu0 0.0
        %1753 = vmatprep.subr.mxu0 0.0
        %1754 = vmatpush1.msra.mxu0 0.0
        %1755 = vmatprep.subr.mxu0 0.0
        %1756 = vmatpush1.msra.mxu0 0.0
        %1757 = vmatprep.mubr.f32.mxu0 0.0
        %1758 = vmatmul.mubr.f32.gmra.mrb[0].mxu0 %v1652
        %v1759 = vpop.f32.mrb[0].mxu0
        %v1760 = vadd.f32 %v1691, %v1759
        %v1761 = vpop.f32.mrb[0].mxu0
        %1762 = vmatprep.mubr.f32.mxu0 0.0
        %1763 = vmatmul.mubr.f32.gmra.mrb[0].mxu0 %v1657
        %v1764 = vpop.f32.mrb[0].mxu0
        %v1765 = vadd.f32 %v1691, %v1764
        %v1766 = vpop.f32.mrb[0].mxu0
        %1767 = vmatprep.mubr.f32.mxu0 0.0
        %1768 = vmatmul.mubr.f32.gmra.mrb[0].mxu0 %v1662
        %v1769 = vpop.f32.mrb[0].mxu0
        %v1770 = vadd.f32 %v1691, %v1769
        %v1771 = vpop.f32.mrb[0].mxu0
        %1772 = vmatprep.mubr.f32.mxu0 0.0
        %1773 = vmatmul.mubr.f32.gmra.mrb[0].mxu0 %v1667
        %v1774 = vpop.f32.mrb[0].mxu0
        %v1775 = vadd.f32 %v1691, %v1774
        %v1776 = vpop.f32.mrb[0].mxu0
        %1777 = vdwg.mxu0
        %vm1778 = vcmp.ge.f32.partialorder %v1760, 0.0
        %vm1779 = vcmp.ge.f32.partialorder %v1765, 0.0
        %vm1780 = vcmp.ge.f32.partialorder %v1770, 0.0
        %vm1781 = vcmp.ge.f32.partialorder %v1775, 0.0
        %v1782 = vmul.f32 %v1760, 0.01
        %v1783 = vmul.f32 %v1765, 0.01
        %v1784 = vmul.f32 %v1770, 0.01
        %v1785 = vmul.f32 %v1775, 0.01
        %v1786 = vsel %vm1778, %v1760, %v1782
        %v1787 = vsel %vm1779, %v1765, %v1783
        %v1788 = vsel %vm1780, %v1770, %v1784
        %v1789 = vsel %vm1781, %v1775, %v1785
        %v1790 = vld [vmem:[%s858] sm:$0xff]
        %v1791 = vld [vmem:[%s858 + $0x8] sm:$0xff]
        %v1792 = vld [vmem:[%s858 + $0x10] sm:$0xff]
        %v1793 = vld [vmem:[%s858 + $0x18] sm:$0xff]
        %v1794 = vld [vmem:[%s858 + $0x20] sm:$0xff]
        %v1795 = vld [vmem:[%s858 + $0x28] sm:$0xff]
        %v1796 = vld [vmem:[%s858 + $0x30] sm:$0xff]
        %v1797 = vld [vmem:[%s858 + $0x38] sm:$0xff]
        %v1798 = vld [vmem:[%s858 + $0x40] sm:$0xff]
        %v1799 = vld [vmem:[%s858 + $0x48] sm:$0xff]
        %v1800 = vld [vmem:[%s858 + $0x50] sm:$0xff]
        %v1801 = vld [vmem:[%s858 + $0x58] sm:$0xff]
        %v1802 = vld [vmem:[%s858 + $0x60] sm:$0xff]
        %v1803 = vld [vmem:[%s858 + $0x68] sm:$0xff]
        %v1804 = vld [vmem:[%s858 + $0x70] sm:$0xff]
        %v1805 = vld [vmem:[%s858 + $0x78] sm:$0xff]
        %v1806 = vld [vmem:[%s858 + $0x80] sm:$0xff]
        %v1807 = vld [vmem:[%s858 + $0x88] sm:$0xff]
        %v1808 = vld [vmem:[%s858 + $0x90] sm:$0xff]
        %v1809 = vld [vmem:[%s858 + $0x98] sm:$0xff]
        %v1810 = vld [vmem:[%s858 + $0xa0] sm:$0xff]
        %v1811 = vld [vmem:[%s858 + $0xa8] sm:$0xff]
        %v1812 = vld [vmem:[%s858 + $0xb0] sm:$0xff]
        %v1813 = vld [vmem:[%s858 + $0xb8] sm:$0xff]
        %v1814 = vld [vmem:[%s858 + $0xc0] sm:$0xff]
        %v1815 = vld [vmem:[%s858 + $0xc8] sm:$0xff]
        %v1816 = vld [vmem:[%s858 + $0xd0] sm:$0xff]
        %v1817 = vld [vmem:[%s858 + $0xd8] sm:$0xff]
        %v1818 = vld [vmem:[%s858 + $0xe0] sm:$0xff]
        %v1819 = vld [vmem:[%s858 + $0xe8] sm:$0xff]
        %v1820 = vld [vmem:[%s858 + $0xf0] sm:$0xff]
        %v1821 = vld [vmem:[%s858 + $0xf8] sm:$0xff]
        %v1822 = vld [vmem:[%s858 + $0x100] sm:$0xff]
        %v1823 = vld [vmem:[%s858 + $0x108] sm:$0xff]
        %v1824 = vld [vmem:[%s858 + $0x110] sm:$0xff]
        %v1825 = vld [vmem:[%s858 + $0x118] sm:$0xff]
        %v1826 = vld [vmem:[%s858 + $0x120] sm:$0xff]
        %v1827 = vld [vmem:[%s858 + $0x128] sm:$0xff]
        %v1828 = vld [vmem:[%s858 + $0x130] sm:$0xff]
        %v1829 = vld [vmem:[%s858 + $0x138] sm:$0xff]
        %v1830 = vld [vmem:[%s858 + $0x140] sm:$0xff]
        %v1831 = vld [vmem:[%s858 + $0x148] sm:$0xff]
        %v1832 = vld [vmem:[%s858 + $0x150] sm:$0xff]
        %v1833 = vld [vmem:[%s858 + $0x158] sm:$0xff]
        %v1834 = vld [vmem:[%s858 + $0x160] sm:$0xff]
        %v1835 = vld [vmem:[%s858 + $0x168] sm:$0xff]
        %v1836 = vld [vmem:[%s858 + $0x170] sm:$0xff]
        %v1837 = vld [vmem:[%s858 + $0x178] sm:$0xff]
        %v1838 = vld [vmem:[%s858 + $0x180] sm:$0xff]
        %v1839 = vld [vmem:[%s858 + $0x188] sm:$0xff]
        %v1840 = vld [vmem:[%s858 + $0x190] sm:$0xff]
        %v1841 = vld [vmem:[%s858 + $0x198] sm:$0xff]
        %v1842 = vld [vmem:[%s858 + $0x1a0] sm:$0xff]
        %v1843 = vld [vmem:[%s858 + $0x1a8] sm:$0xff]
        %v1844 = vld [vmem:[%s858 + $0x1b0] sm:$0xff]
        %v1845 = vld [vmem:[%s858 + $0x1b8] sm:$0xff]
        %v1846 = vld [vmem:[%s858 + $0x1c0] sm:$0xff]
        %v1847 = vld [vmem:[%s858 + $0x1c8] sm:$0xff]
        %v1848 = vld [vmem:[%s858 + $0x1d0] sm:$0xff]
        %v1849 = vld [vmem:[%s858 + $0x1d8] sm:$0xff]
        %v1850 = vld [vmem:[%s858 + $0x1e0] sm:$0xff]
        %v1851 = vld [vmem:[%s858 + $0x1e8] sm:$0xff]
        %v1852 = vld [vmem:[%s858 + $0x1f0] sm:$0xff]
        %v1853 = vld [vmem:[%s858 + $0x1f8] sm:$0xff]
        %v1854 = vld [vmem:[%s858 + $0x200] sm:$0xff]
        %v1855 = vld [vmem:[%s858 + $0x208] sm:$0xff]
        %v1856 = vld [vmem:[%s858 + $0x210] sm:$0xff]
        %v1857 = vld [vmem:[%s858 + $0x218] sm:$0xff]
        %v1858 = vld [vmem:[%s858 + $0x220] sm:$0xff]
        %v1859 = vld [vmem:[%s858 + $0x228] sm:$0xff]
        %v1860 = vld [vmem:[%s858 + $0x230] sm:$0xff]
        %v1861 = vld [vmem:[%s858 + $0x238] sm:$0xff]
        %v1862 = vld [vmem:[%s858 + $0x240] sm:$0xff]
        %v1863 = vld [vmem:[%s858 + $0x248] sm:$0xff]
        %v1864 = vld [vmem:[%s858 + $0x250] sm:$0xff]
        %v1865 = vld [vmem:[%s858 + $0x258] sm:$0xff]
        %v1866 = vld [vmem:[%s858 + $0x260] sm:$0xff]
        %v1867 = vld [vmem:[%s858 + $0x268] sm:$0xff]
        %v1868 = vld [vmem:[%s858 + $0x270] sm:$0xff]
        %v1869 = vld [vmem:[%s858 + $0x278] sm:$0xff]
        %v1870 = vld [vmem:[%s858 + $0x280] sm:$0xff]
        %v1871 = vld [vmem:[%s858 + $0x288] sm:$0xff]
        %v1872 = vld [vmem:[%s858 + $0x290] sm:$0xff]
        %v1873 = vld [vmem:[%s858 + $0x298] sm:$0xff]
        %v1874 = vld [vmem:[%s858 + $0x2a0] sm:$0xff]
        %v1875 = vld [vmem:[%s858 + $0x2a8] sm:$0xff]
        %v1876 = vld [vmem:[%s858 + $0x2b0] sm:$0xff]
        %v1877 = vld [vmem:[%s858 + $0x2b8] sm:$0xff]
        %v1878 = vld [vmem:[%s858 + $0x2c0] sm:$0xff]
        %v1879 = vld [vmem:[%s858 + $0x2c8] sm:$0xff]
        %v1880 = vld [vmem:[%s858 + $0x2d0] sm:$0xff]
        %v1881 = vld [vmem:[%s858 + $0x2d8] sm:$0xff]
        %v1882 = vld [vmem:[%s858 + $0x2e0] sm:$0xff]
        %v1883 = vld [vmem:[%s858 + $0x2e8] sm:$0xff]
        %v1884 = vld [vmem:[%s858 + $0x2f0] sm:$0xff]
        %v1885 = vld [vmem:[%s858 + $0x2f8] sm:$0xff]
        %v1886 = vld [vmem:[%s858 + $0x300] sm:$0xff]
        %v1887 = vld [vmem:[%s858 + $0x308] sm:$0xff]
        %v1888 = vld [vmem:[%s858 + $0x310] sm:$0xff]
        %v1889 = vld [vmem:[%s858 + $0x318] sm:$0xff]
        %v1890 = vld [vmem:[%s858 + $0x320] sm:$0xff]
        %v1891 = vld [vmem:[%s858 + $0x328] sm:$0xff]
        %v1892 = vld [vmem:[%s858 + $0x330] sm:$0xff]
        %v1893 = vld [vmem:[%s858 + $0x338] sm:$0xff]
        %v1894 = vld [vmem:[%s858 + $0x340] sm:$0xff]
        %v1895 = vld [vmem:[%s858 + $0x348] sm:$0xff]
        %v1896 = vld [vmem:[%s858 + $0x350] sm:$0xff]
        %v1897 = vld [vmem:[%s858 + $0x358] sm:$0xff]
        %v1898 = vld [vmem:[%s858 + $0x360] sm:$0xff]
        %v1899 = vld [vmem:[%s858 + $0x368] sm:$0xff]
        %v1900 = vld [vmem:[%s858 + $0x370] sm:$0xff]
        %v1901 = vld [vmem:[%s858 + $0x378] sm:$0xff]
        %v1902 = vld [vmem:[%s858 + $0x380] sm:$0xff]
        %v1903 = vld [vmem:[%s858 + $0x388] sm:$0xff]
        %v1904 = vld [vmem:[%s858 + $0x390] sm:$0xff]
        %v1905 = vld [vmem:[%s858 + $0x398] sm:$0xff]
        %v1906 = vld [vmem:[%s858 + $0x3a0] sm:$0xff]
        %v1907 = vld [vmem:[%s858 + $0x3a8] sm:$0xff]
        %v1908 = vld [vmem:[%s858 + $0x3b0] sm:$0xff]
        %v1909 = vld [vmem:[%s858 + $0x3b8] sm:$0xff]
        %v1910 = vld [vmem:[%s858 + $0x3c0] sm:$0xff]
        %v1911 = vld [vmem:[%s858 + $0x3c8] sm:$0xff]
        %v1912 = vld [vmem:[%s858 + $0x3d0] sm:$0xff]
        %v1913 = vld [vmem:[%s858 + $0x3d8] sm:$0xff]
        %v1914 = vld [vmem:[%s858 + $0x3e0] sm:$0xff]
        %v1915 = vld [vmem:[%s858 + $0x3e8] sm:$0xff]
        %v1916 = vld [vmem:[%s858 + $0x3f0] sm:$0xff]
        %v1917 = vld [vmem:[%s858 + $0x3f8] sm:$0xff]
        %v1918 = vld [vmem:[%s867] sm:$0xff]
        %v1920 = vlaneseq
        %v1921 = vshrl.u32 %v1920, 7
        %v1922 = vsub.s32 0, %v1921
        %v1923 = vrot.slane %v1918, %v1922
        %v1924 = vlaneseq
        %v1925 = vshrl.u32 %v1924, 7
        %v1926 = vsub.s32 1, %v1925
        %v1927 = vrot.slane %v1918, %v1926
        %v1928 = vlaneseq
        %v1929 = vshrl.u32 %v1928, 7
        %v1930 = vsub.s32 2, %v1929
        %v1931 = vrot.slane %v1918, %v1930
        %v1932 = vlaneseq
        %v1933 = vshrl.u32 %v1932, 7
        %v1934 = vsub.s32 3, %v1933
        %v1935 = vrot.slane %v1918, %v1934
        %v1936 = vlaneseq
        %v1937 = vshrl.u32 %v1936, 7
        %v1938 = vsub.s32 4, %v1937
        %v1939 = vrot.slane %v1918, %v1938
        %v1940 = vlaneseq
        %v1941 = vshrl.u32 %v1940, 7
        %v1942 = vsub.s32 5, %v1941
        %v1943 = vrot.slane %v1918, %v1942
        %v1944 = vlaneseq
        %v1945 = vshrl.u32 %v1944, 7
        %v1946 = vsub.s32 6, %v1945
        %v1947 = vrot.slane %v1918, %v1946
        %v1948 = vlaneseq
        %v1949 = vshrl.u32 %v1948, 7
        %v1950 = vsub.s32 7, %v1949
        %v1951 = vrot.slane %v1918, %v1950
        %1960 = vmatprep.subr.mxu0 %v1791
        %1961 = vmatpush1.msra.mxu0 %v1790
        %1962 = vmatprep.subr.mxu0 %v1799
        %1963 = vmatpush1.msra.mxu0 %v1798
        %1964 = vmatprep.subr.mxu0 %v1807
        %1965 = vmatpush1.msra.mxu0 %v1806
        %1966 = vmatprep.subr.mxu0 %v1815
        %1967 = vmatpush1.msra.mxu0 %v1814
        %1968 = vmatprep.subr.mxu0 %v1823
        %1969 = vmatpush1.msra.mxu0 %v1822
        %1970 = vmatprep.subr.mxu0 %v1831
        %1971 = vmatpush1.msra.mxu0 %v1830
        %1972 = vmatprep.subr.mxu0 %v1839
        %1973 = vmatpush1.msra.mxu0 %v1838
        %1974 = vmatprep.subr.mxu0 %v1847
        %1975 = vmatpush1.msra.mxu0 %v1846
        %1976 = vmatprep.subr.mxu0 %v1855
        %1977 = vmatpush1.msra.mxu0 %v1854
        %1978 = vmatprep.subr.mxu0 %v1863
        %1979 = vmatpush1.msra.mxu0 %v1862
        %1980 = vmatprep.subr.mxu0 %v1871
        %1981 = vmatpush1.msra.mxu0 %v1870
        %1982 = vmatprep.subr.mxu0 %v1879
        %1983 = vmatpush1.msra.mxu0 %v1878
        %1984 = vmatprep.subr.mxu0 %v1887
        %1985 = vmatpush1.msra.mxu0 %v1886
        %1986 = vmatprep.subr.mxu0 %v1895
        %1987 = vmatpush1.msra.mxu0 %v1894
        %1988 = vmatprep.subr.mxu0 %v1903
        %1989 = vmatpush1.msra.mxu0 %v1902
        %1990 = vmatprep.subr.mxu0 %v1911
        %1991 = vmatpush1.msra.mxu0 %v1910
        %1992 = vmatprep.subr.mxu0 0.0
        %1993 = vmatpush1.msra.mxu0 0.0
        %1994 = vmatprep.subr.mxu0 0.0
        %1995 = vmatpush1.msra.mxu0 0.0
        %1996 = vmatprep.subr.mxu0 0.0
        %1997 = vmatpush1.msra.mxu0 0.0
        %1998 = vmatprep.subr.mxu0 0.0
        %1999 = vmatpush1.msra.mxu0 0.0
        %2000 = vmatprep.subr.mxu0 0.0
        %2001 = vmatpush1.msra.mxu0 0.0
        %2002 = vmatprep.subr.mxu0 0.0
        %2003 = vmatpush1.msra.mxu0 0.0
        %2004 = vmatprep.subr.mxu0 0.0
        %2005 = vmatpush1.msra.mxu0 0.0
        %2006 = vmatprep.subr.mxu0 0.0
        %2007 = vmatpush1.msra.mxu0 0.0
        %2008 = vmatprep.subr.mxu0 0.0
        %2009 = vmatpush1.msra.mxu0 0.0
        %2010 = vmatprep.subr.mxu0 0.0
        %2011 = vmatpush1.msra.mxu0 0.0
        %2012 = vmatprep.subr.mxu0 0.0
        %2013 = vmatpush1.msra.mxu0 0.0
        %2014 = vmatprep.subr.mxu0 0.0
        %2015 = vmatpush1.msra.mxu0 0.0
        %2016 = vmatprep.subr.mxu0 0.0
        %2017 = vmatpush1.msra.mxu0 0.0
        %2018 = vmatprep.subr.mxu0 0.0
        %2019 = vmatpush1.msra.mxu0 0.0
        %2020 = vmatprep.subr.mxu0 0.0
        %2021 = vmatpush1.msra.mxu0 0.0
        %2022 = vmatprep.subr.mxu0 0.0
        %2023 = vmatpush1.msra.mxu0 0.0
        %2024 = vmatprep.mubr.f32.mxu0 0.0
        %2025 = vmatmul.mubr.f32.gmra.mrb[0].mxu0 %v1786
        %v2026 = vpop.f32.mrb[0].mxu0
        %v2027 = vadd.f32 %v1923, %v2026
        %v2028 = vpop.f32.mrb[0].mxu0
        %v2029 = vadd.f32 %v1927, %v2028
        %2030 = vmatprep.mubr.f32.mxu0 0.0
        %2031 = vmatmul.mubr.f32.gmra.mrb[0].mxu0 %v1787
        %v2032 = vpop.f32.mrb[0].mxu0
        %v2033 = vadd.f32 %v1923, %v2032
        %v2034 = vpop.f32.mrb[0].mxu0
        %v2035 = vadd.f32 %v1927, %v2034
        %2036 = vmatprep.mubr.f32.mxu0 0.0
        %2037 = vmatmul.mubr.f32.gmra.mrb[0].mxu0 %v1788
        %v2038 = vpop.f32.mrb[0].mxu0
        %v2039 = vadd.f32 %v1923, %v2038
        %v2040 = vpop.f32.mrb[0].mxu0
        %v2041 = vadd.f32 %v1927, %v2040
        %2042 = vmatprep.mubr.f32.mxu0 0.0
        %2043 = vmatmul.mubr.f32.gmra.mrb[0].mxu0 %v1789
        %v2044 = vpop.f32.mrb[0].mxu0
        %v2045 = vadd.f32 %v1923, %v2044
        %v2046 = vpop.f32.mrb[0].mxu0
        %v2047 = vadd.f32 %v1927, %v2046
        %2048 = vdwg.mxu0
        %2049 = vmatprep.subr.mxu0 %v1793
        %2050 = vmatpush1.msra.mxu0 %v1792
        %2051 = vmatprep.subr.mxu0 %v1801
        %2052 = vmatpush1.msra.mxu0 %v1800
        %2053 = vmatprep.subr.mxu0 %v1809
        %2054 = vmatpush1.msra.mxu0 %v1808
        %2055 = vmatprep.subr.mxu0 %v1817
        %2056 = vmatpush1.msra.mxu0 %v1816
        %2057 = vmatprep.subr.mxu0 %v1825
        %2058 = vmatpush1.msra.mxu0 %v1824
        %2059 = vmatprep.subr.mxu0 %v1833
        %2060 = vmatpush1.msra.mxu0 %v1832
        %2061 = vmatprep.subr.mxu0 %v1841
        %2062 = vmatpush1.msra.mxu0 %v1840
        %2063 = vmatprep.subr.mxu0 %v1849
        %2064 = vmatpush1.msra.mxu0 %v1848
        %2065 = vmatprep.subr.mxu0 %v1857
        %2066 = vmatpush1.msra.mxu0 %v1856
        %2067 = vmatprep.subr.mxu0 %v1865
        %2068 = vmatpush1.msra.mxu0 %v1864
        %2069 = vmatprep.subr.mxu0 %v1873
        %2070 = vmatpush1.msra.mxu0 %v1872
        %2071 = vmatprep.subr.mxu0 %v1881
        %2072 = vmatpush1.msra.mxu0 %v1880
        %2073 = vmatprep.subr.mxu0 %v1889
        %2074 = vmatpush1.msra.mxu0 %v1888
        %2075 = vmatprep.subr.mxu0 %v1897
        %2076 = vmatpush1.msra.mxu0 %v1896
        %2077 = vmatprep.subr.mxu0 %v1905
        %2078 = vmatpush1.msra.mxu0 %v1904
        %2079 = vmatprep.subr.mxu0 %v1913
        %2080 = vmatpush1.msra.mxu0 %v1912
        %2081 = vmatprep.subr.mxu0 0.0
        %2082 = vmatpush1.msra.mxu0 0.0
        %2083 = vmatprep.subr.mxu0 0.0
        %2084 = vmatpush1.msra.mxu0 0.0
        %2085 = vmatprep.subr.mxu0 0.0
        %2086 = vmatpush1.msra.mxu0 0.0
        %2087 = vmatprep.subr.mxu0 0.0
        %2088 = vmatpush1.msra.mxu0 0.0
        %2089 = vmatprep.subr.mxu0 0.0
        %2090 = vmatpush1.msra.mxu0 0.0
        %2091 = vmatprep.subr.mxu0 0.0
        %2092 = vmatpush1.msra.mxu0 0.0
        %2093 = vmatprep.subr.mxu0 0.0
        %2094 = vmatpush1.msra.mxu0 0.0
        %2095 = vmatprep.subr.mxu0 0.0
        %2096 = vmatpush1.msra.mxu0 0.0
        %2097 = vmatprep.subr.mxu0 0.0
        %2098 = vmatpush1.msra.mxu0 0.0
        %2099 = vmatprep.subr.mxu0 0.0
        %2100 = vmatpush1.msra.mxu0 0.0
        %2101 = vmatprep.subr.mxu0 0.0
        %2102 = vmatpush1.msra.mxu0 0.0
        %2103 = vmatprep.subr.mxu0 0.0
        %2104 = vmatpush1.msra.mxu0 0.0
        %2105 = vmatprep.subr.mxu0 0.0
        %2106 = vmatpush1.msra.mxu0 0.0
        %2107 = vmatprep.subr.mxu0 0.0
        %2108 = vmatpush1.msra.mxu0 0.0
        %2109 = vmatprep.subr.mxu0 0.0
        %2110 = vmatpush1.msra.mxu0 0.0
        %2111 = vmatprep.subr.mxu0 0.0
        %2112 = vmatpush1.msra.mxu0 0.0
        %2113 = vmatprep.mubr.f32.mxu0 0.0
        %2114 = vmatmul.mubr.f32.gmra.mrb[0].mxu0 %v1786
        %v2115 = vpop.f32.mrb[0].mxu0
        %v2116 = vadd.f32 %v1931, %v2115
        %v2117 = vpop.f32.mrb[0].mxu0
        %v2118 = vadd.f32 %v1935, %v2117
        %2119 = vmatprep.mubr.f32.mxu0 0.0
        %2120 = vmatmul.mubr.f32.gmra.mrb[0].mxu0 %v1787
        %v2121 = vpop.f32.mrb[0].mxu0
        %v2122 = vadd.f32 %v1931, %v2121
        %v2123 = vpop.f32.mrb[0].mxu0
        %v2124 = vadd.f32 %v1935, %v2123
        %2125 = vmatprep.mubr.f32.mxu0 0.0
        %2126 = vmatmul.mubr.f32.gmra.mrb[0].mxu0 %v1788
        %v2127 = vpop.f32.mrb[0].mxu0
        %v2128 = vadd.f32 %v1931, %v2127
        %v2129 = vpop.f32.mrb[0].mxu0
        %v2130 = vadd.f32 %v1935, %v2129
        %2131 = vmatprep.mubr.f32.mxu0 0.0
        %2132 = vmatmul.mubr.f32.gmra.mrb[0].mxu0 %v1789
        %v2133 = vpop.f32.mrb[0].mxu0
        %v2134 = vadd.f32 %v1931, %v2133
        %v2135 = vpop.f32.mrb[0].mxu0
        %v2136 = vadd.f32 %v1935, %v2135
        %2137 = vdwg.mxu0
        %2138 = vmatprep.subr.mxu0 %v1795
        %2139 = vmatpush1.msra.mxu0 %v1794
        %2140 = vmatprep.subr.mxu0 %v1803
        %2141 = vmatpush1.msra.mxu0 %v1802
        %2142 = vmatprep.subr.mxu0 %v1811
        %2143 = vmatpush1.msra.mxu0 %v1810
        %2144 = vmatprep.subr.mxu0 %v1819
        %2145 = vmatpush1.msra.mxu0 %v1818
        %2146 = vmatprep.subr.mxu0 %v1827
        %2147 = vmatpush1.msra.mxu0 %v1826
        %2148 = vmatprep.subr.mxu0 %v1835
        %2149 = vmatpush1.msra.mxu0 %v1834
        %2150 = vmatprep.subr.mxu0 %v1843
        %2151 = vmatpush1.msra.mxu0 %v1842
        %2152 = vmatprep.subr.mxu0 %v1851
        %2153 = vmatpush1.msra.mxu0 %v1850
        %2154 = vmatprep.subr.mxu0 %v1859
        %2155 = vmatpush1.msra.mxu0 %v1858
        %2156 = vmatprep.subr.mxu0 %v1867
        %2157 = vmatpush1.msra.mxu0 %v1866
        %2158 = vmatprep.subr.mxu0 %v1875
        %2159 = vmatpush1.msra.mxu0 %v1874
        %2160 = vmatprep.subr.mxu0 %v1883
        %2161 = vmatpush1.msra.mxu0 %v1882
        %2162 = vmatprep.subr.mxu0 %v1891
        %2163 = vmatpush1.msra.mxu0 %v1890
        %2164 = vmatprep.subr.mxu0 %v1899
        %2165 = vmatpush1.msra.mxu0 %v1898
        %2166 = vmatprep.subr.mxu0 %v1907
        %2167 = vmatpush1.msra.mxu0 %v1906
        %2168 = vmatprep.subr.mxu0 %v1915
        %2169 = vmatpush1.msra.mxu0 %v1914
        %2170 = vmatprep.subr.mxu0 0.0
        %2171 = vmatpush1.msra.mxu0 0.0
        %2172 = vmatprep.subr.mxu0 0.0
        %2173 = vmatpush1.msra.mxu0 0.0
        %2174 = vmatprep.subr.mxu0 0.0
        %2175 = vmatpush1.msra.mxu0 0.0
        %2176 = vmatprep.subr.mxu0 0.0
        %2177 = vmatpush1.msra.mxu0 0.0
        %2178 = vmatprep.subr.mxu0 0.0
        %2179 = vmatpush1.msra.mxu0 0.0
        %2180 = vmatprep.subr.mxu0 0.0
        %2181 = vmatpush1.msra.mxu0 0.0
        %2182 = vmatprep.subr.mxu0 0.0
        %2183 = vmatpush1.msra.mxu0 0.0
        %2184 = vmatprep.subr.mxu0 0.0
        %2185 = vmatpush1.msra.mxu0 0.0
        %2186 = vmatprep.subr.mxu0 0.0
        %2187 = vmatpush1.msra.mxu0 0.0
        %2188 = vmatprep.subr.mxu0 0.0
        %2189 = vmatpush1.msra.mxu0 0.0
        %2190 = vmatprep.subr.mxu0 0.0
        %2191 = vmatpush1.msra.mxu0 0.0
        %2192 = vmatprep.subr.mxu0 0.0
        %2193 = vmatpush1.msra.mxu0 0.0
        %2194 = vmatprep.subr.mxu0 0.0
        %2195 = vmatpush1.msra.mxu0 0.0
        %2196 = vmatprep.subr.mxu0 0.0
        %2197 = vmatpush1.msra.mxu0 0.0
        %2198 = vmatprep.subr.mxu0 0.0
        %2199 = vmatpush1.msra.mxu0 0.0
        %2200 = vmatprep.subr.mxu0 0.0
        %2201 = vmatpush1.msra.mxu0 0.0
        %2202 = vmatprep.mubr.f32.mxu0 0.0
        %2203 = vmatmul.mubr.f32.gmra.mrb[0].mxu0 %v1786
        %v2204 = vpop.f32.mrb[0].mxu0
        %v2205 = vadd.f32 %v1939, %v2204
        %v2206 = vpop.f32.mrb[0].mxu0
        %v2207 = vadd.f32 %v1943, %v2206
        %2208 = vmatprep.mubr.f32.mxu0 0.0
        %2209 = vmatmul.mubr.f32.gmra.mrb[0].mxu0 %v1787
        %v2210 = vpop.f32.mrb[0].mxu0
        %v2211 = vadd.f32 %v1939, %v2210
        %v2212 = vpop.f32.mrb[0].mxu0
        %v2213 = vadd.f32 %v1943, %v2212
        %2214 = vmatprep.mubr.f32.mxu0 0.0
        %2215 = vmatmul.mubr.f32.gmra.mrb[0].mxu0 %v1788
        %v2216 = vpop.f32.mrb[0].mxu0
        %v2217 = vadd.f32 %v1939, %v2216
        %v2218 = vpop.f32.mrb[0].mxu0
        %v2219 = vadd.f32 %v1943, %v2218
        %2220 = vmatprep.mubr.f32.mxu0 0.0
        %2221 = vmatmul.mubr.f32.gmra.mrb[0].mxu0 %v1789
        %v2222 = vpop.f32.mrb[0].mxu0
        %v2223 = vadd.f32 %v1939, %v2222
        %v2224 = vpop.f32.mrb[0].mxu0
        %v2225 = vadd.f32 %v1943, %v2224
        %2226 = vdwg.mxu0
        %2227 = vmatprep.subr.mxu0 %v1797
        %2228 = vmatpush1.msra.mxu0 %v1796
        %2229 = vmatprep.subr.mxu0 %v1805
        %2230 = vmatpush1.msra.mxu0 %v1804
        %2231 = vmatprep.subr.mxu0 %v1813
        %2232 = vmatpush1.msra.mxu0 %v1812
        %2233 = vmatprep.subr.mxu0 %v1821
        %2234 = vmatpush1.msra.mxu0 %v1820
        %2235 = vmatprep.subr.mxu0 %v1829
        %2236 = vmatpush1.msra.mxu0 %v1828
        %2237 = vmatprep.subr.mxu0 %v1837
        %2238 = vmatpush1.msra.mxu0 %v1836
        %2239 = vmatprep.subr.mxu0 %v1845
        %2240 = vmatpush1.msra.mxu0 %v1844
        %2241 = vmatprep.subr.mxu0 %v1853
        %2242 = vmatpush1.msra.mxu0 %v1852
        %2243 = vmatprep.subr.mxu0 %v1861
        %2244 = vmatpush1.msra.mxu0 %v1860
        %2245 = vmatprep.subr.mxu0 %v1869
        %2246 = vmatpush1.msra.mxu0 %v1868
        %2247 = vmatprep.subr.mxu0 %v1877
        %2248 = vmatpush1.msra.mxu0 %v1876
        %2249 = vmatprep.subr.mxu0 %v1885
        %2250 = vmatpush1.msra.mxu0 %v1884
        %2251 = vmatprep.subr.mxu0 %v1893
        %2252 = vmatpush1.msra.mxu0 %v1892
        %2253 = vmatprep.subr.mxu0 %v1901
        %2254 = vmatpush1.msra.mxu0 %v1900
        %2255 = vmatprep.subr.mxu0 %v1909
        %2256 = vmatpush1.msra.mxu0 %v1908
        %2257 = vmatprep.subr.mxu0 %v1917
        %2258 = vmatpush1.msra.mxu0 %v1916
        %2259 = vmatprep.subr.mxu0 0.0
        %2260 = vmatpush1.msra.mxu0 0.0
        %2261 = vmatprep.subr.mxu0 0.0
        %2262 = vmatpush1.msra.mxu0 0.0
        %2263 = vmatprep.subr.mxu0 0.0
        %2264 = vmatpush1.msra.mxu0 0.0
        %2265 = vmatprep.subr.mxu0 0.0
        %2266 = vmatpush1.msra.mxu0 0.0
        %2267 = vmatprep.subr.mxu0 0.0
        %2268 = vmatpush1.msra.mxu0 0.0
        %2269 = vmatprep.subr.mxu0 0.0
        %2270 = vmatpush1.msra.mxu0 0.0
        %2271 = vmatprep.subr.mxu0 0.0
        %2272 = vmatpush1.msra.mxu0 0.0
        %2273 = vmatprep.subr.mxu0 0.0
        %2274 = vmatpush1.msra.mxu0 0.0
        %2275 = vmatprep.subr.mxu0 0.0
        %2276 = vmatpush1.msra.mxu0 0.0
        %2277 = vmatprep.subr.mxu0 0.0
        %2278 = vmatpush1.msra.mxu0 0.0
        %2279 = vmatprep.subr.mxu0 0.0
        %2280 = vmatpush1.msra.mxu0 0.0
        %2281 = vmatprep.subr.mxu0 0.0
        %2282 = vmatpush1.msra.mxu0 0.0
        %2283 = vmatprep.subr.mxu0 0.0
        %2284 = vmatpush1.msra.mxu0 0.0
        %2285 = vmatprep.subr.mxu0 0.0
        %2286 = vmatpush1.msra.mxu0 0.0
        %2287 = vmatprep.subr.mxu0 0.0
        %2288 = vmatpush1.msra.mxu0 0.0
        %2289 = vmatprep.subr.mxu0 0.0
        %2290 = vmatpush1.msra.mxu0 0.0
        %2291 = vmatprep.mubr.f32.mxu0 0.0
        %2292 = vmatmul.mubr.f32.gmra.mrb[0].mxu0 %v1786
        %v2293 = vpop.f32.mrb[0].mxu0
        %v2294 = vadd.f32 %v1947, %v2293
        %v2295 = vpop.f32.mrb[0].mxu0
        %v2296 = vadd.f32 %v1951, %v2295
        %2297 = vmatprep.mubr.f32.mxu0 0.0
        %2298 = vmatmul.mubr.f32.gmra.mrb[0].mxu0 %v1787
        %v2299 = vpop.f32.mrb[0].mxu0
        %v2300 = vadd.f32 %v1947, %v2299
        %v2301 = vpop.f32.mrb[0].mxu0
        %v2302 = vadd.f32 %v1951, %v2301
        %2303 = vmatprep.mubr.f32.mxu0 0.0
        %2304 = vmatmul.mubr.f32.gmra.mrb[0].mxu0 %v1788
        %v2305 = vpop.f32.mrb[0].mxu0
        %v2306 = vadd.f32 %v1947, %v2305
        %v2307 = vpop.f32.mrb[0].mxu0
        %v2308 = vadd.f32 %v1951, %v2307
        %2309 = vmatprep.mubr.f32.mxu0 0.0
        %2310 = vmatmul.mubr.f32.gmra.mrb[0].mxu0 %v1789
        %v2311 = vpop.f32.mrb[0].mxu0
        %v2312 = vadd.f32 %v1947, %v2311
        %v2313 = vpop.f32.mrb[0].mxu0
        %v2314 = vadd.f32 %v1951, %v2313
        %2315 = vdwg.mxu0
        %v2316 = vtanh.pop %v2027
        %v2317 = vtanh.pop %v2029
        %v2318 = vtanh.pop %v2116
        %v2319 = vtanh.pop %v2118
        %v2320 = vtanh.pop %v2205
        %v2321 = vtanh.pop %v2207
        %v2322 = vtanh.pop %v2294
        %v2323 = vtanh.pop %v2296
        %v2324 = vtanh.pop %v2033
        %v2325 = vtanh.pop %v2035
        %v2326 = vtanh.pop %v2122
        %v2327 = vtanh.pop %v2124
        %v2328 = vtanh.pop %v2211
        %v2329 = vtanh.pop %v2213
        %v2330 = vtanh.pop %v2300
        %v2331 = vtanh.pop %v2302
        %v2332 = vtanh.pop %v2039
        %v2333 = vtanh.pop %v2041
        %v2334 = vtanh.pop %v2128
        %v2335 = vtanh.pop %v2130
        %v2336 = vtanh.pop %v2217
        %v2337 = vtanh.pop %v2219
        %v2338 = vtanh.pop %v2306
        %v2339 = vtanh.pop %v2308
        %v2340 = vtanh.pop %v2045
        %v2341 = vtanh.pop %v2047
        %v2342 = vtanh.pop %v2134
        %v2343 = vtanh.pop %v2136
        %v2344 = vtanh.pop %v2223
        %v2345 = vtanh.pop %v2225
        %v2346 = vtanh.pop %v2312
        %v2347 = vtanh.pop %v2314
        %v2348 = vmul.f32 %v2316, 0.999995
        %v2349 = vmul.f32 %v2317, 0.999995
        %v2350 = vmul.f32 %v2318, 0.999995
        %v2351 = vmul.f32 %v2319, 0.999995
        %v2352 = vmul.f32 %v2320, 0.999995
        %v2353 = vmul.f32 %v2321, 0.999995
        %v2354 = vmul.f32 %v2322, 0.999995
        %v2355 = vmul.f32 %v2323, 0.999995
        %v2356 = vmul.f32 %v2324, 0.999995
        %v2357 = vmul.f32 %v2325, 0.999995
        %v2358 = vmul.f32 %v2326, 0.999995
        %v2359 = vmul.f32 %v2327, 0.999995
        %v2360 = vmul.f32 %v2328, 0.999995
        %v2361 = vmul.f32 %v2329, 0.999995
        %v2362 = vmul.f32 %v2330, 0.999995
        %v2363 = vmul.f32 %v2331, 0.999995
        %v2364 = vmul.f32 %v2332, 0.999995
        %v2365 = vmul.f32 %v2333, 0.999995
        %v2366 = vmul.f32 %v2334, 0.999995
        %v2367 = vmul.f32 %v2335, 0.999995
        %v2368 = vmul.f32 %v2336, 0.999995
        %v2369 = vmul.f32 %v2337, 0.999995
        %v2370 = vmul.f32 %v2338, 0.999995
        %v2371 = vmul.f32 %v2339, 0.999995
        %v2372 = vmul.f32 %v2340, 0.999995
        %v2373 = vmul.f32 %v2341, 0.999995
        %v2374 = vmul.f32 %v2342, 0.999995
        %v2375 = vmul.f32 %v2343, 0.999995
        %v2376 = vmul.f32 %v2344, 0.999995
        %v2377 = vmul.f32 %v2345, 0.999995
        %v2378 = vmul.f32 %v2346, 0.999995
        %v2379 = vmul.f32 %v2347, 0.999995
        %v2380 = vld [vmem:[%s876] sm:$0xff]
        %v2381 = vld [vmem:[%s876 + $0x8] sm:$0xff]
        %v2382 = vld [vmem:[%s876 + $0x10] sm:$0xff]
        %v2383 = vld [vmem:[%s876 + $0x18] sm:$0xff]
        %v2384 = vld [vmem:[%s876 + $0x20] sm:$0xff]
        %v2385 = vld [vmem:[%s876 + $0x28] sm:$0xff]
        %v2386 = vld [vmem:[%s876 + $0x30] sm:$0xff]
        %v2387 = vld [vmem:[%s876 + $0x38] sm:$0xff]
        %v2388 = vld [vmem:[%s876 + $0x40] sm:$0xff]
        %v2389 = vld [vmem:[%s876 + $0x48] sm:$0xff]
        %v2390 = vld [vmem:[%s876 + $0x50] sm:$0xff]
        %v2391 = vld [vmem:[%s876 + $0x58] sm:$0xff]
        %v2392 = vld [vmem:[%s876 + $0x60] sm:$0xff]
        %v2393 = vld [vmem:[%s876 + $0x68] sm:$0xff]
        %v2394 = vld [vmem:[%s876 + $0x70] sm:$0xff]
        %v2395 = vld [vmem:[%s876 + $0x78] sm:$0xff]
        %v2396 = vld [vmem:[%s876 + $0x80] sm:$0xff]
        %v2397 = vld [vmem:[%s876 + $0x88] sm:$0xff]
        %v2398 = vld [vmem:[%s876 + $0x90] sm:$0xff]
        %v2399 = vld [vmem:[%s876 + $0x98] sm:$0xff]
        %v2400 = vld [vmem:[%s876 + $0xa0] sm:$0xff]
        %v2401 = vld [vmem:[%s876 + $0xa8] sm:$0xff]
        %v2402 = vld [vmem:[%s876 + $0xb0] sm:$0xff]
        %v2403 = vld [vmem:[%s876 + $0xb8] sm:$0xff]
        %v2404 = vld [vmem:[%s876 + $0xc0] sm:$0xff]
        %v2405 = vld [vmem:[%s876 + $0xc8] sm:$0xff]
        %v2406 = vld [vmem:[%s876 + $0xd0] sm:$0xff]
        %v2407 = vld [vmem:[%s876 + $0xd8] sm:$0xff]
        %v2408 = vld [vmem:[%s876 + $0xe0] sm:$0xff]
        %v2409 = vld [vmem:[%s876 + $0xe8] sm:$0xff]
        %v2410 = vld [vmem:[%s876 + $0xf0] sm:$0xff]
        %v2411 = vld [vmem:[%s876 + $0xf8] sm:$0xff]
        %v2412 = vld [vmem:[%s876 + $0x100] sm:$0xff]
        %v2413 = vld [vmem:[%s876 + $0x108] sm:$0xff]
        %v2414 = vld [vmem:[%s876 + $0x110] sm:$0xff]
        %v2415 = vld [vmem:[%s876 + $0x118] sm:$0xff]
        %v2416 = vld [vmem:[%s876 + $0x120] sm:$0xff]
        %v2417 = vld [vmem:[%s876 + $0x128] sm:$0xff]
        %v2418 = vld [vmem:[%s876 + $0x130] sm:$0xff]
        %v2419 = vld [vmem:[%s876 + $0x138] sm:$0xff]
        %v2420 = vld [vmem:[%s876 + $0x140] sm:$0xff]
        %v2421 = vld [vmem:[%s876 + $0x148] sm:$0xff]
        %v2422 = vld [vmem:[%s876 + $0x150] sm:$0xff]
        %v2423 = vld [vmem:[%s876 + $0x158] sm:$0xff]
        %v2424 = vld [vmem:[%s876 + $0x160] sm:$0xff]
        %v2425 = vld [vmem:[%s876 + $0x168] sm:$0xff]
        %v2426 = vld [vmem:[%s876 + $0x170] sm:$0xff]
        %v2427 = vld [vmem:[%s876 + $0x178] sm:$0xff]
        %v2428 = vld [vmem:[%s876 + $0x180] sm:$0xff]
        %v2429 = vld [vmem:[%s876 + $0x188] sm:$0xff]
        %v2430 = vld [vmem:[%s876 + $0x190] sm:$0xff]
        %v2431 = vld [vmem:[%s876 + $0x198] sm:$0xff]
        %v2432 = vld [vmem:[%s876 + $0x1a0] sm:$0xff]
        %v2433 = vld [vmem:[%s876 + $0x1a8] sm:$0xff]
        %v2434 = vld [vmem:[%s876 + $0x1b0] sm:$0xff]
        %v2435 = vld [vmem:[%s876 + $0x1b8] sm:$0xff]
        %v2436 = vld [vmem:[%s876 + $0x1c0] sm:$0xff]
        %v2437 = vld [vmem:[%s876 + $0x1c8] sm:$0xff]
        %v2438 = vld [vmem:[%s876 + $0x1d0] sm:$0xff]
        %v2439 = vld [vmem:[%s876 + $0x1d8] sm:$0xff]
        %v2440 = vld [vmem:[%s876 + $0x1e0] sm:$0xff]
        %v2441 = vld [vmem:[%s876 + $0x1e8] sm:$0xff]
        %v2442 = vld [vmem:[%s876 + $0x1f0] sm:$0xff]
        %v2443 = vld [vmem:[%s876 + $0x1f8] sm:$0xff]
        %v2444 = vld [vmem:[%s876 + $0x200] sm:$0xff]
        %v2445 = vld [vmem:[%s876 + $0x208] sm:$0xff]
        %v2446 = vld [vmem:[%s876 + $0x210] sm:$0xff]
        %v2447 = vld [vmem:[%s876 + $0x218] sm:$0xff]
        %v2448 = vld [vmem:[%s876 + $0x220] sm:$0xff]
        %v2449 = vld [vmem:[%s876 + $0x228] sm:$0xff]
        %v2450 = vld [vmem:[%s876 + $0x230] sm:$0xff]
        %v2451 = vld [vmem:[%s876 + $0x238] sm:$0xff]
        %v2452 = vld [vmem:[%s876 + $0x240] sm:$0xff]
        %v2453 = vld [vmem:[%s876 + $0x248] sm:$0xff]
        %v2454 = vld [vmem:[%s876 + $0x250] sm:$0xff]
        %v2455 = vld [vmem:[%s876 + $0x258] sm:$0xff]
        %v2456 = vld [vmem:[%s876 + $0x260] sm:$0xff]
        %v2457 = vld [vmem:[%s876 + $0x268] sm:$0xff]
        %v2458 = vld [vmem:[%s876 + $0x270] sm:$0xff]
        %v2459 = vld [vmem:[%s876 + $0x278] sm:$0xff]
        %v2460 = vld [vmem:[%s876 + $0x280] sm:$0xff]
        %v2461 = vld [vmem:[%s876 + $0x288] sm:$0xff]
        %v2462 = vld [vmem:[%s876 + $0x290] sm:$0xff]
        %v2463 = vld [vmem:[%s876 + $0x298] sm:$0xff]
        %v2464 = vld [vmem:[%s876 + $0x2a0] sm:$0xff]
        %v2465 = vld [vmem:[%s876 + $0x2a8] sm:$0xff]
        %v2466 = vld [vmem:[%s876 + $0x2b0] sm:$0xff]
        %v2467 = vld [vmem:[%s876 + $0x2b8] sm:$0xff]
        %v2468 = vld [vmem:[%s876 + $0x2c0] sm:$0xff]
        %v2469 = vld [vmem:[%s876 + $0x2c8] sm:$0xff]
        %v2470 = vld [vmem:[%s876 + $0x2d0] sm:$0xff]
        %v2471 = vld [vmem:[%s876 + $0x2d8] sm:$0xff]
        %v2472 = vld [vmem:[%s876 + $0x2e0] sm:$0xff]
        %v2473 = vld [vmem:[%s876 + $0x2e8] sm:$0xff]
        %v2474 = vld [vmem:[%s876 + $0x2f0] sm:$0xff]
        %v2475 = vld [vmem:[%s876 + $0x2f8] sm:$0xff]
        %v2476 = vld [vmem:[%s876 + $0x300] sm:$0xff]
        %v2477 = vld [vmem:[%s876 + $0x308] sm:$0xff]
        %v2478 = vld [vmem:[%s876 + $0x310] sm:$0xff]
        %v2479 = vld [vmem:[%s876 + $0x318] sm:$0xff]
        %v2480 = vld [vmem:[%s876 + $0x320] sm:$0xff]
        %v2481 = vld [vmem:[%s876 + $0x328] sm:$0xff]
        %v2482 = vld [vmem:[%s876 + $0x330] sm:$0xff]
        %v2483 = vld [vmem:[%s876 + $0x338] sm:$0xff]
        %v2484 = vld [vmem:[%s876 + $0x340] sm:$0xff]
        %v2485 = vld [vmem:[%s876 + $0x348] sm:$0xff]
        %v2486 = vld [vmem:[%s876 + $0x350] sm:$0xff]
        %v2487 = vld [vmem:[%s876 + $0x358] sm:$0xff]
        %v2488 = vld [vmem:[%s876 + $0x360] sm:$0xff]
        %v2489 = vld [vmem:[%s876 + $0x368] sm:$0xff]
        %v2490 = vld [vmem:[%s876 + $0x370] sm:$0xff]
        %v2491 = vld [vmem:[%s876 + $0x378] sm:$0xff]
        %v2492 = vld [vmem:[%s876 + $0x380] sm:$0xff]
        %v2493 = vld [vmem:[%s876 + $0x388] sm:$0xff]
        %v2494 = vld [vmem:[%s876 + $0x390] sm:$0xff]
        %v2495 = vld [vmem:[%s876 + $0x398] sm:$0xff]
        %v2496 = vld [vmem:[%s876 + $0x3a0] sm:$0xff]
        %v2497 = vld [vmem:[%s876 + $0x3a8] sm:$0xff]
        %v2498 = vld [vmem:[%s876 + $0x3b0] sm:$0xff]
        %v2499 = vld [vmem:[%s876 + $0x3b8] sm:$0xff]
        %v2500 = vld [vmem:[%s876 + $0x3c0] sm:$0xff]
        %v2501 = vld [vmem:[%s876 + $0x3c8] sm:$0xff]
        %v2502 = vld [vmem:[%s876 + $0x3d0] sm:$0xff]
        %v2503 = vld [vmem:[%s876 + $0x3d8] sm:$0xff]
        %v2504 = vld [vmem:[%s876 + $0x3e0] sm:$0xff]
        %v2505 = vld [vmem:[%s876 + $0x3e8] sm:$0xff]
        %v2506 = vld [vmem:[%s876 + $0x3f0] sm:$0xff]
        %v2507 = vld [vmem:[%s876 + $0x3f8] sm:$0xff]
        %v2508 = vld [vmem:[%s884] sm:$0x1]
        %v2510 = vlaneseq
        %v2511 = vshrl.u32 %v2510, 7
        %v2512 = vsub.s32 0, %v2511
        %v2513 = vrot.slane %v2508, %v2512
        %2515 = vmatprep.subr.mxu0 0.0
        %2516 = vmatpush1.msra.mxu0 %v2380
        %2517 = vmatprep.subr.mxu0 0.0
        %2518 = vmatpush1.msra.mxu0 %v2381
        %2519 = vmatprep.subr.mxu0 0.0
        %2520 = vmatpush1.msra.mxu0 %v2382
        %2521 = vmatprep.subr.mxu0 0.0
        %2522 = vmatpush1.msra.mxu0 %v2383
        %2523 = vmatprep.subr.mxu0 0.0
        %2524 = vmatpush1.msra.mxu0 %v2384
        %2525 = vmatprep.subr.mxu0 0.0
        %2526 = vmatpush1.msra.mxu0 %v2385
        %2527 = vmatprep.subr.mxu0 0.0
        %2528 = vmatpush1.msra.mxu0 %v2386
        %2529 = vmatprep.subr.mxu0 0.0
        %2530 = vmatpush1.msra.mxu0 %v2387
        %2531 = vmatprep.subr.mxu0 0.0
        %2532 = vmatpush1.msra.mxu0 %v2388
        %2533 = vmatprep.subr.mxu0 0.0
        %2534 = vmatpush1.msra.mxu0 %v2389
        %2535 = vmatprep.subr.mxu0 0.0
        %2536 = vmatpush1.msra.mxu0 %v2390
        %2537 = vmatprep.subr.mxu0 0.0
        %2538 = vmatpush1.msra.mxu0 %v2391
        %2539 = vmatprep.subr.mxu0 0.0
        %2540 = vmatpush1.msra.mxu0 %v2392
        %2541 = vmatprep.subr.mxu0 0.0
        %2542 = vmatpush1.msra.mxu0 %v2393
        %2543 = vmatprep.subr.mxu0 0.0
        %2544 = vmatpush1.msra.mxu0 %v2394
        %2545 = vmatprep.subr.mxu0 0.0
        %2546 = vmatpush1.msra.mxu0 %v2395
        %2547 = vmatprep.subr.mxu0 0.0
        %2548 = vmatpush1.msra.mxu0 %v2396
        %2549 = vmatprep.subr.mxu0 0.0
        %2550 = vmatpush1.msra.mxu0 %v2397
        %2551 = vmatprep.subr.mxu0 0.0
        %2552 = vmatpush1.msra.mxu0 %v2398
        %2553 = vmatprep.subr.mxu0 0.0
        %2554 = vmatpush1.msra.mxu0 %v2399
        %2555 = vmatprep.subr.mxu0 0.0
        %2556 = vmatpush1.msra.mxu0 %v2400
        %2557 = vmatprep.subr.mxu0 0.0
        %2558 = vmatpush1.msra.mxu0 %v2401
        %2559 = vmatprep.subr.mxu0 0.0
        %2560 = vmatpush1.msra.mxu0 %v2402
        %2561 = vmatprep.subr.mxu0 0.0
        %2562 = vmatpush1.msra.mxu0 %v2403
        %2563 = vmatprep.subr.mxu0 0.0
        %2564 = vmatpush1.msra.mxu0 %v2404
        %2565 = vmatprep.subr.mxu0 0.0
        %2566 = vmatpush1.msra.mxu0 %v2405
        %2567 = vmatprep.subr.mxu0 0.0
        %2568 = vmatpush1.msra.mxu0 %v2406
        %2569 = vmatprep.subr.mxu0 0.0
        %2570 = vmatpush1.msra.mxu0 %v2407
        %2571 = vmatprep.subr.mxu0 0.0
        %2572 = vmatpush1.msra.mxu0 %v2408
        %2573 = vmatprep.subr.mxu0 0.0
        %2574 = vmatpush1.msra.mxu0 %v2409
        %2575 = vmatprep.subr.mxu0 0.0
        %2576 = vmatpush1.msra.mxu0 %v2410
        %2577 = vmatprep.subr.mxu0 0.0
        %2578 = vmatpush1.msra.mxu0 %v2411
        %2579 = vmatprep.mubr.f32.mxu0 %v2349
        %2580 = vmatmul.mubr.f32.gmra.mrb[0].mxu0 %v2348
        %v2581 = vpop.f32.mrb[0].mxu0
        %v2582 = vadd.f32 %v2513, %v2581
        %v2583 = vpop.f32.mrb[0].mxu0
        %2584 = vmatprep.mubr.f32.mxu0 %v2357
        %2585 = vmatmul.mubr.f32.gmra.mrb[0].mxu0 %v2356
        %v2586 = vpop.f32.mrb[0].mxu0
        %v2587 = vadd.f32 %v2513, %v2586
        %v2588 = vpop.f32.mrb[0].mxu0
        %2589 = vmatprep.mubr.f32.mxu0 %v2365
        %2590 = vmatmul.mubr.f32.gmra.mrb[0].mxu0 %v2364
        %v2591 = vpop.f32.mrb[0].mxu0
        %v2592 = vadd.f32 %v2513, %v2591
        %v2593 = vpop.f32.mrb[0].mxu0
        %2594 = vmatprep.mubr.f32.mxu0 %v2373
        %2595 = vmatmul.mubr.f32.gmra.mrb[0].mxu0 %v2372
        %v2596 = vpop.f32.mrb[0].mxu0
        %v2597 = vadd.f32 %v2513, %v2596
        %v2598 = vpop.f32.mrb[0].mxu0
        %2599 = vdwg.mxu0
        %2600 = vmatprep.subr.mxu0 0.0
        %2601 = vmatpush1.msra.mxu0 %v2412
        %2602 = vmatprep.subr.mxu0 0.0
        %2603 = vmatpush1.msra.mxu0 %v2413
        %2604 = vmatprep.subr.mxu0 0.0
        %2605 = vmatpush1.msra.mxu0 %v2414
        %2606 = vmatprep.subr.mxu0 0.0
        %2607 = vmatpush1.msra.mxu0 %v2415
        %2608 = vmatprep.subr.mxu0 0.0
        %2609 = vmatpush1.msra.mxu0 %v2416
        %2610 = vmatprep.subr.mxu0 0.0
        %2611 = vmatpush1.msra.mxu0 %v2417
        %2612 = vmatprep.subr.mxu0 0.0
        %2613 = vmatpush1.msra.mxu0 %v2418
        %2614 = vmatprep.subr.mxu0 0.0
        %2615 = vmatpush1.msra.mxu0 %v2419
        %2616 = vmatprep.subr.mxu0 0.0
        %2617 = vmatpush1.msra.mxu0 %v2420
        %2618 = vmatprep.subr.mxu0 0.0
        %2619 = vmatpush1.msra.mxu0 %v2421
        %2620 = vmatprep.subr.mxu0 0.0
        %2621 = vmatpush1.msra.mxu0 %v2422
        %2622 = vmatprep.subr.mxu0 0.0
        %2623 = vmatpush1.msra.mxu0 %v2423
        %2624 = vmatprep.subr.mxu0 0.0
        %2625 = vmatpush1.msra.mxu0 %v2424
        %2626 = vmatprep.subr.mxu0 0.0
        %2627 = vmatpush1.msra.mxu0 %v2425
        %2628 = vmatprep.subr.mxu0 0.0
        %2629 = vmatpush1.msra.mxu0 %v2426
        %2630 = vmatprep.subr.mxu0 0.0
        %2631 = vmatpush1.msra.mxu0 %v2427
        %2632 = vmatprep.subr.mxu0 0.0
        %2633 = vmatpush1.msra.mxu0 %v2428
        %2634 = vmatprep.subr.mxu0 0.0
        %2635 = vmatpush1.msra.mxu0 %v2429
        %2636 = vmatprep.subr.mxu0 0.0
        %2637 = vmatpush1.msra.mxu0 %v2430
        %2638 = vmatprep.subr.mxu0 0.0
        %2639 = vmatpush1.msra.mxu0 %v2431
        %2640 = vmatprep.subr.mxu0 0.0
        %2641 = vmatpush1.msra.mxu0 %v2432
        %2642 = vmatprep.subr.mxu0 0.0
        %2643 = vmatpush1.msra.mxu0 %v2433
        %2644 = vmatprep.subr.mxu0 0.0
        %2645 = vmatpush1.msra.mxu0 %v2434
        %2646 = vmatprep.subr.mxu0 0.0
        %2647 = vmatpush1.msra.mxu0 %v2435
        %2648 = vmatprep.subr.mxu0 0.0
        %2649 = vmatpush1.msra.mxu0 %v2436
        %2650 = vmatprep.subr.mxu0 0.0
        %2651 = vmatpush1.msra.mxu0 %v2437
        %2652 = vmatprep.subr.mxu0 0.0
        %2653 = vmatpush1.msra.mxu0 %v2438
        %2654 = vmatprep.subr.mxu0 0.0
        %2655 = vmatpush1.msra.mxu0 %v2439
        %2656 = vmatprep.subr.mxu0 0.0
        %2657 = vmatpush1.msra.mxu0 %v2440
        %2658 = vmatprep.subr.mxu0 0.0
        %2659 = vmatpush1.msra.mxu0 %v2441
        %2660 = vmatprep.subr.mxu0 0.0
        %2661 = vmatpush1.msra.mxu0 %v2442
        %2662 = vmatprep.subr.mxu0 0.0
        %2663 = vmatpush1.msra.mxu0 %v2443
        %2664 = vmatprep.mubr.f32.mxu0 %v2351
        %2665 = vmatmul.mubr.f32.gmra.mrb[0].mxu0 %v2350
        %v2666 = vpop.f32.mrb[0].mxu0
        %v2667 = vadd.f32 %v2582, %v2666
        %v2668 = vpop.f32.mrb[0].mxu0
        %2669 = vmatprep.mubr.f32.mxu0 %v2359
        %2670 = vmatmul.mubr.f32.gmra.mrb[0].mxu0 %v2358
        %v2671 = vpop.f32.mrb[0].mxu0
        %v2672 = vadd.f32 %v2587, %v2671
        %v2673 = vpop.f32.mrb[0].mxu0
        %2674 = vmatprep.mubr.f32.mxu0 %v2367
        %2675 = vmatmul.mubr.f32.gmra.mrb[0].mxu0 %v2366
        %v2676 = vpop.f32.mrb[0].mxu0
        %v2677 = vadd.f32 %v2592, %v2676
        %v2678 = vpop.f32.mrb[0].mxu0
        %2679 = vmatprep.mubr.f32.mxu0 %v2375
        %2680 = vmatmul.mubr.f32.gmra.mrb[0].mxu0 %v2374
        %v2681 = vpop.f32.mrb[0].mxu0
        %v2682 = vadd.f32 %v2597, %v2681
        %v2683 = vpop.f32.mrb[0].mxu0
        %2684 = vdwg.mxu0
        %2685 = vmatprep.subr.mxu0 0.0
        %2686 = vmatpush1.msra.mxu0 %v2444
        %2687 = vmatprep.subr.mxu0 0.0
        %2688 = vmatpush1.msra.mxu0 %v2445
        %2689 = vmatprep.subr.mxu0 0.0
        %2690 = vmatpush1.msra.mxu0 %v2446
        %2691 = vmatprep.subr.mxu0 0.0
        %2692 = vmatpush1.msra.mxu0 %v2447
        %2693 = vmatprep.subr.mxu0 0.0
        %2694 = vmatpush1.msra.mxu0 %v2448
        %2695 = vmatprep.subr.mxu0 0.0
        %2696 = vmatpush1.msra.mxu0 %v2449
        %2697 = vmatprep.subr.mxu0 0.0
        %2698 = vmatpush1.msra.mxu0 %v2450
        %2699 = vmatprep.subr.mxu0 0.0
        %2700 = vmatpush1.msra.mxu0 %v2451
        %2701 = vmatprep.subr.mxu0 0.0
        %2702 = vmatpush1.msra.mxu0 %v2452
        %2703 = vmatprep.subr.mxu0 0.0
        %2704 = vmatpush1.msra.mxu0 %v2453
        %2705 = vmatprep.subr.mxu0 0.0
        %2706 = vmatpush1.msra.mxu0 %v2454
        %2707 = vmatprep.subr.mxu0 0.0
        %2708 = vmatpush1.msra.mxu0 %v2455
        %2709 = vmatprep.subr.mxu0 0.0
        %2710 = vmatpush1.msra.mxu0 %v2456
        %2711 = vmatprep.subr.mxu0 0.0
        %2712 = vmatpush1.msra.mxu0 %v2457
        %2713 = vmatprep.subr.mxu0 0.0
        %2714 = vmatpush1.msra.mxu0 %v2458
        %2715 = vmatprep.subr.mxu0 0.0
        %2716 = vmatpush1.msra.mxu0 %v2459
        %2717 = vmatprep.subr.mxu0 0.0
        %2718 = vmatpush1.msra.mxu0 %v2460
        %2719 = vmatprep.subr.mxu0 0.0
        %2720 = vmatpush1.msra.mxu0 %v2461
        %2721 = vmatprep.subr.mxu0 0.0
        %2722 = vmatpush1.msra.mxu0 %v2462
        %2723 = vmatprep.subr.mxu0 0.0
        %2724 = vmatpush1.msra.mxu0 %v2463
        %2725 = vmatprep.subr.mxu0 0.0
        %2726 = vmatpush1.msra.mxu0 %v2464
        %2727 = vmatprep.subr.mxu0 0.0
        %2728 = vmatpush1.msra.mxu0 %v2465
        %2729 = vmatprep.subr.mxu0 0.0
        %2730 = vmatpush1.msra.mxu0 %v2466
        %2731 = vmatprep.subr.mxu0 0.0
        %2732 = vmatpush1.msra.mxu0 %v2467
        %2733 = vmatprep.subr.mxu0 0.0
        %2734 = vmatpush1.msra.mxu0 %v2468
        %2735 = vmatprep.subr.mxu0 0.0
        %2736 = vmatpush1.msra.mxu0 %v2469
        %2737 = vmatprep.subr.mxu0 0.0
        %2738 = vmatpush1.msra.mxu0 %v2470
        %2739 = vmatprep.subr.mxu0 0.0
        %2740 = vmatpush1.msra.mxu0 %v2471
        %2741 = vmatprep.subr.mxu0 0.0
        %2742 = vmatpush1.msra.mxu0 %v2472
        %2743 = vmatprep.subr.mxu0 0.0
        %2744 = vmatpush1.msra.mxu0 %v2473
        %2745 = vmatprep.subr.mxu0 0.0
        %2746 = vmatpush1.msra.mxu0 %v2474
        %2747 = vmatprep.subr.mxu0 0.0
        %2748 = vmatpush1.msra.mxu0 %v2475
        %2749 = vmatprep.mubr.f32.mxu0 %v2353
        %2750 = vmatmul.mubr.f32.gmra.mrb[0].mxu0 %v2352
        %v2751 = vpop.f32.mrb[0].mxu0
        %v2752 = vadd.f32 %v2667, %v2751
        %v2753 = vpop.f32.mrb[0].mxu0
        %2754 = vmatprep.mubr.f32.mxu0 %v2361
        %2755 = vmatmul.mubr.f32.gmra.mrb[0].mxu0 %v2360
        %v2756 = vpop.f32.mrb[0].mxu0
        %v2757 = vadd.f32 %v2672, %v2756
        %v2758 = vpop.f32.mrb[0].mxu0
        %2759 = vmatprep.mubr.f32.mxu0 %v2369
        %2760 = vmatmul.mubr.f32.gmra.mrb[0].mxu0 %v2368
        %v2761 = vpop.f32.mrb[0].mxu0
        %v2762 = vadd.f32 %v2677, %v2761
        %v2763 = vpop.f32.mrb[0].mxu0
        %2764 = vmatprep.mubr.f32.mxu0 %v2377
        %2765 = vmatmul.mubr.f32.gmra.mrb[0].mxu0 %v2376
        %v2766 = vpop.f32.mrb[0].mxu0
        %v2767 = vadd.f32 %v2682, %v2766
        %v2768 = vpop.f32.mrb[0].mxu0
        %2769 = vdwg.mxu0
        %2770 = vmatprep.subr.mxu0 0.0
        %2771 = vmatpush1.msra.mxu0 %v2476
        %2772 = vmatprep.subr.mxu0 0.0
        %2773 = vmatpush1.msra.mxu0 %v2477
        %2774 = vmatprep.subr.mxu0 0.0
        %2775 = vmatpush1.msra.mxu0 %v2478
        %2776 = vmatprep.subr.mxu0 0.0
        %2777 = vmatpush1.msra.mxu0 %v2479
        %2778 = vmatprep.subr.mxu0 0.0
        %2779 = vmatpush1.msra.mxu0 %v2480
        %2780 = vmatprep.subr.mxu0 0.0
        %2781 = vmatpush1.msra.mxu0 %v2481
        %2782 = vmatprep.subr.mxu0 0.0
        %2783 = vmatpush1.msra.mxu0 %v2482
        %2784 = vmatprep.subr.mxu0 0.0
        %2785 = vmatpush1.msra.mxu0 %v2483
        %2786 = vmatprep.subr.mxu0 0.0
        %2787 = vmatpush1.msra.mxu0 %v2484
        %2788 = vmatprep.subr.mxu0 0.0
        %2789 = vmatpush1.msra.mxu0 %v2485
        %2790 = vmatprep.subr.mxu0 0.0
        %2791 = vmatpush1.msra.mxu0 %v2486
        %2792 = vmatprep.subr.mxu0 0.0
        %2793 = vmatpush1.msra.mxu0 %v2487
        %2794 = vmatprep.subr.mxu0 0.0
        %2795 = vmatpush1.msra.mxu0 %v2488
        %2796 = vmatprep.subr.mxu0 0.0
        %2797 = vmatpush1.msra.mxu0 %v2489
        %2798 = vmatprep.subr.mxu0 0.0
        %2799 = vmatpush1.msra.mxu0 %v2490
        %2800 = vmatprep.subr.mxu0 0.0
        %2801 = vmatpush1.msra.mxu0 %v2491
        %2802 = vmatprep.subr.mxu0 0.0
        %2803 = vmatpush1.msra.mxu0 %v2492
        %2804 = vmatprep.subr.mxu0 0.0
        %2805 = vmatpush1.msra.mxu0 %v2493
        %2806 = vmatprep.subr.mxu0 0.0
        %2807 = vmatpush1.msra.mxu0 %v2494
        %2808 = vmatprep.subr.mxu0 0.0
        %2809 = vmatpush1.msra.mxu0 %v2495
        %2810 = vmatprep.subr.mxu0 0.0
        %2811 = vmatpush1.msra.mxu0 %v2496
        %2812 = vmatprep.subr.mxu0 0.0
        %2813 = vmatpush1.msra.mxu0 %v2497
        %2814 = vmatprep.subr.mxu0 0.0
        %2815 = vmatpush1.msra.mxu0 %v2498
        %2816 = vmatprep.subr.mxu0 0.0
        %2817 = vmatpush1.msra.mxu0 %v2499
        %2818 = vmatprep.subr.mxu0 0.0
        %2819 = vmatpush1.msra.mxu0 %v2500
        %2820 = vmatprep.subr.mxu0 0.0
        %2821 = vmatpush1.msra.mxu0 %v2501
        %2822 = vmatprep.subr.mxu0 0.0
        %2823 = vmatpush1.msra.mxu0 %v2502
        %2824 = vmatprep.subr.mxu0 0.0
        %2825 = vmatpush1.msra.mxu0 %v2503
        %2826 = vmatprep.subr.mxu0 0.0
        %2827 = vmatpush1.msra.mxu0 %v2504
        %2828 = vmatprep.subr.mxu0 0.0
        %2829 = vmatpush1.msra.mxu0 %v2505
        %2830 = vmatprep.subr.mxu0 0.0
        %2831 = vmatpush1.msra.mxu0 %v2506
        %2832 = vmatprep.subr.mxu0 0.0
        %2833 = vmatpush1.msra.mxu0 %v2507
        %2834 = vmatprep.mubr.f32.mxu0 %v2355
        %2835 = vmatmul.mubr.f32.gmra.mrb[0].mxu0 %v2354
        %v2836 = vpop.f32.mrb[0].mxu0
        %v2837 = vadd.f32 %v2752, %v2836
        %v2838 = vpop.f32.mrb[0].mxu0
        %2839 = vmatprep.mubr.f32.mxu0 %v2363
        %2840 = vmatmul.mubr.f32.gmra.mrb[0].mxu0 %v2362
        %v2841 = vpop.f32.mrb[0].mxu0
        %v2842 = vadd.f32 %v2757, %v2841
        %v2843 = vpop.f32.mrb[0].mxu0
        %2844 = vmatprep.mubr.f32.mxu0 %v2371
        %2845 = vmatmul.mubr.f32.gmra.mrb[0].mxu0 %v2370
        %v2846 = vpop.f32.mrb[0].mxu0
        %v2847 = vadd.f32 %v2762, %v2846
        %v2848 = vpop.f32.mrb[0].mxu0
        %2849 = vmatprep.mubr.f32.mxu0 %v2379
        %2850 = vmatmul.mubr.f32.gmra.mrb[0].mxu0 %v2378
        %v2851 = vpop.f32.mrb[0].mxu0
        %v2852 = vadd.f32 %v2767, %v2851
        %v2853 = vpop.f32.mrb[0].mxu0
        %2854 = vdwg.mxu0
        %2855 = vst [vmem:[%s1060] sm:$0xff] %v1412
        %2856 = vst [vmem:[%s1060 + $0x8] sm:$0xff] %v1417
        %2857 = vst [vmem:[%s1060 + $0x10] sm:$0xff] %v1422
        %2858 = vst [vmem:[%s1060 + $0x18] sm:$0xff] %v1427
        %2859 = vst [vmem:[%s1065] sm:$0xff] %v1520
        %2860 = vst [vmem:[%s1065 + $0x8] sm:$0xff] %v1525
        %2861 = vst [vmem:[%s1065 + $0x10] sm:$0xff] %v1530
        %2862 = vst [vmem:[%s1065 + $0x18] sm:$0xff] %v1535
        %2863 = vst [vmem:[%s1070] sm:$0xff] %v1786
        %2864 = vst [vmem:[%s1070 + $0x8] sm:$0xff] %v1787
        %2865 = vst [vmem:[%s1070 + $0x10] sm:$0xff] %v1788
        %2866 = vst [vmem:[%s1070 + $0x18] sm:$0xff] %v1789
        %2867 = vst [vmem:[%s1075] sm:$0xff] %v2837
        %2868 = vst [vmem:[%s1075 + $0x8] sm:$0xff] %v2842
        %2869 = vst [vmem:[%s1075 + $0x10] sm:$0xff] %v2847
        %2870 = vst [vmem:[%s1075 + $0x18] sm:$0xff] %v2852
        %p2871 = scmp.lt.s32.totalorder %s46, 1
        %s2872 = scalar_select %p2871, %s46, 1
        %s2873 = smul.addr %s2872, 4
        %s2874 = smul.addr %s2873, 8
        %s2875 = scalar_lea.vmem %s16, %s2874
        %p2876 = scmp.lt.s32.totalorder %s46, 1
        %s2877 = scalar_select %p2876, %s46, 1
        %s2878 = smul.addr %s2877, 4
        %s2879 = smul.addr %s2878, 8
        %s2880 = scalar_lea.vmem %s17, %s2879
        %p2881 = scmp.lt.s32.totalorder %s46, 1
        %s2882 = scalar_select %p2881, %s46, 1
        %s2883 = smul.addr %s2882, 4
        %s2884 = smul.addr %s2883, 8
        %s2885 = scalar_lea.vmem %s18, %s2884
        %p2886 = scmp.lt.s32.totalorder %s46, 1
        %s2887 = scalar_select %p2886, %s46, 1
        %s2888 = smul.addr %s2887, 4
        %s2889 = smul.addr %s2888, 8
        %s2890 = scalar_lea.vmem %s19, %s2889
        // Predicated region
        $region121: #{forward.2} parent=83 // pred_check
          %p2891 = pneg %p480
        $region122: #{forward.2} parent=83 // pred_check_branch
          %2893 = sbr.rel (%p2891) target = $region124
        $region123: #{forward.2} parent=83 // pred_region
          _
        $region124: #{forward.2} parent=83 // pred_fallthru
          _
        // Predicated region
        $region125: #{forward.2} parent=83 // pred_check
          %p2894 = pneg %p506
        $region126: #{forward.2} parent=83 // pred_check_branch
          %2896 = sbr.rel (%p2894) target = $region128
        $region127: #{forward.2} parent=83 // pred_region
          _
        $region128: #{forward.2} parent=83 // pred_fallthru
          _
        // Predicated region
        $region129: #{forward.2} parent=83 // pred_check
          %p2897 = pneg %p532
        $region130: #{forward.2} parent=83 // pred_check_branch
          %2899 = sbr.rel (%p2897) target = $region132
        $region131: #{forward.2} parent=83 // pred_region
          _
        $region132: #{forward.2} parent=83 // pred_fallthru
          _
        // Predicated region
        $region133: #{forward.2} parent=83 // pred_check
          %p2900 = pneg %p558
        $region134: #{forward.2} parent=83 // pred_check_branch
          %2902 = sbr.rel (%p2900) target = $region136
        $region135: #{forward.2} parent=83 // pred_region
          _
        $region136: #{forward.2} parent=83 // pred_fallthru
          _
      $region84: #{forward.2} parent=5 // pred_fallthru
        _
      %p2903 = scmp.le.s32.totalorder 2, %s41
      // Predicated region
      $region137: #{forward.2} parent=5 // pred_check
        %p2904 = pneg %p2903
      $region138: #{forward.2} parent=5 // pred_check_branch
        %2906 = sbr.rel (%p2904) target = $region140
      $region139: #{forward.2} parent=5 // pred_region
        %s2907 = ssub.s32 %s41, 2
        // Predicated region
        $region141: #{forward.2} parent=139 // pred_check
          %p2908 = pneg %p486
        $region142: #{forward.2} parent=139 // pred_check_branch
          %2910 = sbr.rel (%p2908) target = $region144
        $region143: #{forward.2} parent=139 // pred_region
          %p2911 = scmp.lt.s32.totalorder %s47, 1
          %s2912 = scalar_select %p2911, %s47, 1
          %s2913 = smul.addr %s2912, 4
          %s2914 = smul.addr %s2913, 8
          %s2915 = scalar_lea.vmem %s16, %s2914
        $region144: #{forward.2} parent=139 // pred_fallthru
          _
        // Predicated region
        $region145: #{forward.2} parent=139 // pred_check
          %p2916 = pneg %p512
        $region146: #{forward.2} parent=139 // pred_check_branch
          %2918 = sbr.rel (%p2916) target = $region148
        $region147: #{forward.2} parent=139 // pred_region
          %p2919 = scmp.lt.s32.totalorder %s47, 1
          %s2920 = scalar_select %p2919, %s47, 1
          %s2921 = smul.addr %s2920, 4
          %s2922 = smul.addr %s2921, 8
          %s2923 = scalar_lea.vmem %s17, %s2922
        $region148: #{forward.2} parent=139 // pred_fallthru
          _
        // Predicated region
        $region149: #{forward.2} parent=139 // pred_check
          %p2924 = pneg %p538
        $region150: #{forward.2} parent=139 // pred_check_branch
          %2926 = sbr.rel (%p2924) target = $region152
        $region151: #{forward.2} parent=139 // pred_region
          %p2927 = scmp.lt.s32.totalorder %s47, 1
          %s2928 = scalar_select %p2927, %s47, 1
          %s2929 = smul.addr %s2928, 4
          %s2930 = smul.addr %s2929, 8
          %s2931 = scalar_lea.vmem %s18, %s2930
        $region152: #{forward.2} parent=139 // pred_fallthru
          _
        // Predicated region
        $region153: #{forward.2} parent=139 // pred_check
          %p2932 = pneg %p564
        $region154: #{forward.2} parent=139 // pred_check_branch
          %2934 = sbr.rel (%p2932) target = $region156
        $region155: #{forward.2} parent=139 // pred_region
          %p2935 = scmp.lt.s32.totalorder %s47, 1
          %s2936 = scalar_select %p2935, %s47, 1
          %s2937 = smul.addr %s2936, 4
          %s2938 = smul.addr %s2937, 8
          %s2939 = scalar_lea.vmem %s19, %s2938
        $region156: #{forward.2} parent=139 // pred_fallthru
          _
      $region140: #{forward.2} parent=5 // pred_fallthru
        _
    $region6: #{forward.2} parent=1 // loop_footer
      %s45 = sadd.s32 1, %s41
    $region7: #{forward.2} parent=1 // loop_footer_branch
      %40 = sbr.rel target = $region3
    $region8: #{forward.2} parent=1 // loop_exit
      _
    %2940 = vsyncpa [#allocation3], 1
    %s2941 = scalar_lea.sflag [#allocation3], 1
    %2942 = vsyncpa %s2941, 1
    %2943 = vsyncpa [#allocation5], 1
    %s2944 = scalar_lea.sflag [#allocation5], 1
    %2945 = vsyncpa %s2944, 1
    %2946 = vsyncpa [#allocation8], 1
    %s2947 = scalar_lea.sflag [#allocation8], 1
    %2948 = vsyncpa %s2947, 1
    %2949 = vsyncpa [#allocation11], 1
    %s2950 = scalar_lea.sflag [#allocation11], 1
    %2951 = vsyncpa %s2950, 1
    %2952 = vsyncpa [#allocation14], 1
    %s2953 = scalar_lea.sflag [#allocation14], 1
    %2954 = vsyncpa %s2953, 1

</llo_original>
